<compile_context>
chip_gen: v7x
topology: tpu7x:2x2x1
jax: 0.10.0
libtpu: 0.0.40
codegen_flags: <defaults>
</compile_context>

<pallas_src>
import jax
import jax.numpy as jnp
from jax import lax
from jax.experimental import pallas as pl
from jax.experimental.pallas import tpu as pltpu

COMPUTE_DTYPE = jnp.bfloat16   # MXU input dtype (f32 accumulation everywhere)


# ----------------------------------------------------------------------------
# Fused kernel: one (image, row-tile) grid step
# ----------------------------------------------------------------------------
def basic_block_kernel(x_ref, w1_ref, b1_ref, w2_ref, b2_ref, o_ref,
                       xpad_ref, y1pad_ref):
    # x_ref   : (1, H, W, C)  full image, resident across the row-tile axis
    # w*_ref  : (3, 3, Cin, Cout) BN-scale-folded weights (bf16, HWIO)
    # b*_ref  : (1, Cout) folded BN bias (f32)
    # o_ref   : (1, TH, W, P) output row tile
    # xpad_ref: (H+4, W+2, C) zero-padded input, built once per image (bf16)
    # y1pad_ref: (TH+2, W+2, P) zero-padded conv1 activations for this tile
    H, W, C = x_ref.shape[1], x_ref.shape[2], x_ref.shape[3]
    TH = o_ref.shape[1]
    P = w2_ref.shape[3]
    cdt = xpad_ref.dtype

    j = pl.program_id(1)

    # -- Stage 0: build the padded input in VMEM once per image (pad handled
    #    in-kernel instead of a separate jnp.pad pass over HBM).
    @pl.when(j == 0)
    def _init_padded_input():
        xpad_ref[...] = jnp.zeros_like(xpad_ref)
        xpad_ref[2:H + 2, 1:W + 1, :] = x_ref[0].astype(cdt)

    r0 = pl.multiple_of(j * TH, TH)            # first output row of this tile

    # -- Stage 1: conv1 (3x3, pad 1) + folded BN1 + ReLU on the extended row
    #    range [r0-1, r0+TH+1) so conv2 has its one-row halo in VMEM.
    M1 = (TH + 2) * W
    acc1 = None
    for dx in range(3):
        # One column-slab + one reshape per dx (3 per conv instead of 9
        # unaligned slice+reshape copies); the dy taps are contiguous,
        # sublane-aligned row slices of the flattened slab.
        slab = xpad_ref[pl.ds(r0, TH + 4), dx:dx + W, :]        # (TH+4, W, C)
        flat = slab.reshape((TH + 4) * W, C)
        for dy in range(3):
            part = jnp.dot(flat[dy * W:dy * W + M1, :], w1_ref[dy, dx],
                           preferred_element_type=jnp.float32)
            acc1 = part if acc1 is None else acc1 + part        # first tap inits
    y1 = jnp.maximum(acc1 + b1_ref[...], 0.0)                   # f32 epilogue
    y1 = y1.reshape(TH + 2, W, P)
    # Rows outside the image must act as conv2's zero padding (bias+ReLU made
    # them non-zero), so mask them out.
    row = r0 - 1 + lax.broadcasted_iota(jnp.int32, (TH + 2, 1, 1), 0)
    y1 = jnp.where((row >= 0) & (row < H), y1, 0.0)

    # Stage-1 activations stay in VMEM, stored with a zero W-halo for conv2.
    zcol = jnp.zeros((TH + 2, 1, P), cdt)
    y1pad_ref[:, 0:1, :] = zcol
    y1pad_ref[:, W + 1:W + 2, :] = zcol
    y1pad_ref[:, 1:W + 1, :] = y1.astype(cdt)

    # -- Stage 2: conv2 (3x3, pad 1) + folded BN2 + identity add + ReLU.
    M2 = TH * W
    acc2 = None
    for dx in range(3):
        slab = y1pad_ref[:, dx:dx + W, :]                       # (TH+2, W, P)
        flat = slab.reshape((TH + 2) * W, P)
        for dy in range(3):
            part = jnp.dot(flat[dy * W:dy * W + M2, :], w2_ref[dy, dx],
                           preferred_element_type=jnp.float32)
            acc2 = part if acc2 is None else acc2 + part
    res = x_ref[:, pl.ds(r0, TH), :, :].astype(jnp.float32)     # identity (f32)
    out = acc2.reshape(1, TH, W, P) + b2_ref[...] + res
    o_ref[...] = jnp.maximum(out, 0.0).astype(o_ref.dtype)


# ----------------------------------------------------------------------------
# Wrapper
# ----------------------------------------------------------------------------
def basic_block_forward(x_nchw, prep, *, tile_h=8):
    """BasicBlock forward (stride=1, downsample=None). NCHW in/out like PyTorch."""
    N, C, H, W = x_nchw.shape
    P = prep["w2"].shape[3]
    if C != P:
        raise ValueError("identity residual requires inplanes == planes")
    if H % tile_h != 0:
        tile_h = H                      # fall back to a single row tile
    n_row_tiles = H // tile_h

    # TODO(synk): keep activations NHWC end-to-end to drop these transposes.
    x = jnp.transpose(x_nchw, (0, 2, 3, 1))          # NHWC, channels on lanes

    out = pl.pallas_call(
        basic_block_kernel,
        out_shape=jax.ShapeDtypeStruct((N, H, W, P), jnp.float32),
        grid=(N, n_row_tiles),
        in_specs=[
            # Full image per batch element; block index constant along the
            # row-tile axis -> DMA'd once per image, reused by every tile.
            pl.BlockSpec((1, H, W, C), lambda n, j: (n, 0, 0, 0)),
            pl.BlockSpec((3, 3, C, P), lambda n, j: (0, 0, 0, 0)),
            pl.BlockSpec((1, P), lambda n, j: (0, 0)),
            pl.BlockSpec((3, 3, P, P), lambda n, j: (0, 0, 0, 0)),
            pl.BlockSpec((1, P), lambda n, j: (0, 0)),
        ],
        out_specs=pl.BlockSpec((1, tile_h, W, P), lambda n, j: (n, j, 0, 0)),
        scratch_shapes=[
            pltpu.VMEM((H + 4, W + 2, C), COMPUTE_DTYPE),        # padded input
            pltpu.VMEM((tile_h + 2, W + 2, P), COMPUTE_DTYPE),   # padded conv1 act
        ],
        compiler_params=pltpu.CompilerParams(
            # Batch axis feeds v7x's two TensorCores; the row-tile axis is
            # sequential because the padded-input scratch is built at j == 0.
            dimension_semantics=("parallel", "arbitrary"),
            # Explicit budget (fits well inside v7x's 64 MiB physical VMEM).
            vmem_limit_bytes=32 * 1024 * 1024,
        ),
    )(x, prep["w1"], prep["b1"], prep["w2"], prep["b2"])

    return jnp.transpose(out, (0, 3, 1, 2))          # back to NCHW


# ----------------------------------------------------------------------------
# Parameters (PyTorch layout) + inference-time preparation (BN folding, bf16)
# ----------------------------------------------------------------------------
def init_basicblock_params(key, inplanes, planes):
    ks = jax.random.split(key, 4)

    def bn(k, c):
        kg, kb, km, kv = jax.random.split(k, 4)
        return dict(gamma=1.0 + 0.1 * jax.random.normal(kg, (c,), jnp.float32),
                    beta=0.1 * jax.random.normal(kb, (c,), jnp.float32),
                    mean=0.1 * jax.random.normal(km, (c,), jnp.float32),
                    var=jnp.abs(jax.random.normal(kv, (c,), jnp.float32)) + 1.0)

    return dict(
        conv1_w=0.2 * jax.random.normal(ks[0], (planes, inplanes, 3, 3), jnp.float32),  # OIHW
        conv2_w=0.2 * jax.random.normal(ks[1], (planes, planes, 3, 3), jnp.float32),    # OIHW
        bn1=bn(ks[2], planes),
        bn2=bn(ks[3], planes),
    )


def prepare_inference_params(params, eps=1e-5):
    """Fold eval-mode BN into the conv weights (one-time prep, not per call)."""
    def fold(w_oihw, bn):
        scale = bn["gamma"] / jnp.sqrt(bn["var"] + eps)
        bias = bn["beta"] - bn["mean"] * scale
        w_hwio = jnp.transpose(w_oihw, (2, 3, 1, 0))             # OIHW -> HWIO
        w_folded = (w_hwio * scale[None, None, None, :]).astype(COMPUTE_DTYPE)
        return w_folded, bias.astype(jnp.float32)[None, :]       # (1, C)

    w1, b1 = fold(params["conv1_w"], params["bn1"])
    w2, b2 = fold(params["conv2_w"], params["bn2"])
    return dict(w1=w1, b1=b1, w2=w2, b2=b2)


# ----------------------------------------------------------------------------
# Pure-JAX reference (mirrors the kernel's bf16 quantization points)
# ----------------------------------------------------------------------------
def reference_forward(x_nchw, prep):
    x = jnp.transpose(x_nchw, (0, 2, 3, 1)).astype(jnp.float32)
    dn = ("NHWC", "HWIO", "NHWC")
    y1 = lax.conv_general_dilated(x.astype(COMPUTE_DTYPE), prep["w1"], (1, 1),
                                  "SAME", dimension_numbers=dn,
                                  preferred_element_type=jnp.float32)
    y1 = jnp.maximum(y1 + prep["b1"], 0.0)
    y1 = y1.astype(COMPUTE_DTYPE)           # kernel stores this stage in bf16 VMEM
    y2 = lax.conv_general_dilated(y1, prep["w2"], (1, 1), "SAME",
                                  dimension_numbers=dn,
                                  preferred_element_type=jnp.float32)
    y2 = jnp.maximum(y2 + prep["b2"] + x, 0.0)
    return jnp.transpose(y2, (0, 3, 1, 2))


if __name__ == "__main__":
    key = jax.random.PRNGKey(0)
    kx, kp = jax.random.split(key)

    # BasicBlock with stride=1 and no downsample => inplanes == planes.
    N, C, H, W = 2, 4, 16, 16
    x = jax.random.normal(kx, (N, C, H, W), jnp.float32)   # NCHW like PyTorch

    raw = init_basicblock_params(kp, inplanes=C, planes=C)
    prep = prepare_inference_params(raw)

    out = jax.block_until_ready(jax.jit(basic_block_forward)(x, prep))
    ref = reference_forward(x, prep)

    assert out.shape == (N, C, H, W), out.shape
    max_err = float(jnp.max(jnp.abs(out - ref)))
    assert jnp.allclose(out, ref, atol=1e-3, rtol=1e-3), f"max abs err {max_err}"

    print("KERNEL_OK")
</pallas_src>

<mosaic_0001>
module attributes {stable_mosaic.version = 11 : i64} {
  func.func @basic_block_kernel(%arg0: i32, %arg1: i32, %arg2: memref<1x16x16x4xf32, #tpu.memory_space<vmem>>, %arg3: memref<3x3x4x4xbf16, #tpu.memory_space<vmem>>, %arg4: memref<1x4xf32, #tpu.memory_space<vmem>>, %arg5: memref<3x3x4x4xbf16, #tpu.memory_space<vmem>>, %arg6: memref<1x4xf32, #tpu.memory_space<vmem>>, %arg7: memref<1x8x16x4xf32, #tpu.memory_space<vmem>>, %arg8: memref<20x18x4xbf16, #tpu.memory_space<vmem>>, %arg9: memref<10x18x4xbf16, #tpu.memory_space<vmem>>) attributes {dimension_semantics = [#tpu.dimension_semantics<parallel>, #tpu.dimension_semantics<arbitrary>], iteration_bounds = array<i64: 2, 2>, scalar_prefetch = 0 : i64, scratch_operands = 2 : i64, tpu.core_type = #tpu.core_type<tc>, window_params = [{transform_indices = @transform_0, window_bounds = array<i64: 1, 16, 16, 4>}, {pipeline_mode = #tpu.pipeline_mode<synchronous>, transform_indices = @transform_1, window_bounds = array<i64: 3, 3, 4, 4>}, {pipeline_mode = #tpu.pipeline_mode<synchronous>, transform_indices = @transform_2, window_bounds = array<i64: 1, 4>}, {pipeline_mode = #tpu.pipeline_mode<synchronous>, transform_indices = @transform_3, window_bounds = array<i64: 3, 3, 4, 4>}, {pipeline_mode = #tpu.pipeline_mode<synchronous>, transform_indices = @transform_4, window_bounds = array<i64: 1, 4>}, {transform_indices = @transform_5, window_bounds = array<i64: 1, 8, 16, 4>}]} {
    %c0_i32 = arith.constant 0 : i32
    %0 = arith.cmpi eq, %arg1, %c0_i32 : i32
    %1 = arith.extui %0 : i1 to i32
    %c0_i32_0 = arith.constant 0 : i32
    %2 = arith.cmpi ne, %1, %c0_i32_0 : i32
    scf.if %2 {
      %cst_126 = arith.constant 0.000000e+00 : bf16
      %143 = vector.broadcast %cst_126 : bf16 to vector<20x18x4xbf16>
      %c0_127 = arith.constant 0 : index
      %c0_128 = arith.constant 0 : index
      %c0_129 = arith.constant 0 : index
      %144 = vector.load %arg8[%c0_127, %c0_128, %c0_129] : memref<20x18x4xbf16, #tpu.memory_space<vmem>>, vector<20x18x4xbf16>
      tpu.vector_store %arg8[%c0_127, %c0_128, %c0_129], %143 {strides = array<i32>} : memref<20x18x4xbf16, #tpu.memory_space<vmem>>, vector<20x18x4xbf16>,
      %c0_130 = arith.constant 0 : index
      %c0_131 = arith.constant 0 : index
      %c0_132 = arith.constant 0 : index
      %c0_133 = arith.constant 0 : index
      %145 = vector.load %arg2[%c0_130, %c0_131, %c0_132, %c0_133] : memref<1x16x16x4xf32, #tpu.memory_space<vmem>>, vector<1x16x16x4xf32>
      %146 = vector.shape_cast %145 : vector<1x16x16x4xf32> to vector<16x16x4xf32>
      %147 = arith.truncf %146 : vector<16x16x4xf32> to vector<16x16x4xbf16>
      %c2_134 = arith.constant 2 : index
      %c1_135 = arith.constant 1 : index
      %c0_136 = arith.constant 0 : index
      %148 = vector.load %arg8[%c2_134, %c1_135, %c0_136] : memref<20x18x4xbf16, #tpu.memory_space<vmem>>, vector<16x16x4xbf16>
      tpu.vector_store %arg8[%c2_134, %c1_135, %c0_136], %147 {strides = array<i32>} : memref<20x18x4xbf16, #tpu.memory_space<vmem>>, vector<16x16x4xbf16>,
    } else {
    }
    %c8_i32 = arith.constant 8 : i32
    %3 = arith.muli %arg1, %c8_i32 : i32
    %4 = tpu.assume_multiple %3, 8 : i32
    %5 = arith.index_cast %4 : i32 to index
    %c0 = arith.constant 0 : index
    %c0_1 = arith.constant 0 : index
    %6 = vector.load %arg8[%5, %c0, %c0_1] : memref<20x18x4xbf16, #tpu.memory_space<vmem>>, vector<12x16x4xbf16>
    %7 = vector.shape_cast %6 : vector<12x16x4xbf16> to vector<192x4xbf16>
    %8 = vector.extract_strided_slice %7 {offsets = [0, 0], sizes = [160, 4], strides = [1, 1]} : vector<192x4xbf16> to vector<160x4xbf16>
    %c0_2 = arith.constant 0 : index
    %c0_3 = arith.constant 0 : index
    %c0_4 = arith.constant 0 : index
    %c0_5 = arith.constant 0 : index
    %9 = vector.load %arg3[%c0_2, %c0_3, %c0_4, %c0_5] : memref<3x3x4x4xbf16, #tpu.memory_space<vmem>>, vector<1x1x4x4xbf16>
    %10 = vector.shape_cast %9 : vector<1x1x4x4xbf16> to vector<4x4xbf16>
    %cst = arith.constant dense<0.000000e+00> : vector<160x4xf32>
    %11 = tpu.matmul %8, %10, %cst {dimension_numbers = #tpu.dot_dimension_numbers<[1], [0], [0], [1], [0, 0, 1, 1], [], []>} : vector<160x4xbf16>, vector<4x4xbf16>, vector<160x4xf32> -> vector<160x4xf32>
    %12 = vector.extract_strided_slice %7 {offsets = [16, 0], sizes = [160, 4], strides = [1, 1]} : vector<192x4xbf16> to vector<160x4xbf16>
    %c1 = arith.constant 1 : index
    %c0_6 = arith.constant 0 : index
    %c0_7 = arith.constant 0 : index
    %c0_8 = arith.constant 0 : index
    %13 = vector.load %arg3[%c1, %c0_6, %c0_7, %c0_8] : memref<3x3x4x4xbf16, #tpu.memory_space<vmem>>, vector<1x1x4x4xbf16>
    %14 = vector.shape_cast %13 : vector<1x1x4x4xbf16> to vector<4x4xbf16>
    %cst_9 = arith.constant dense<0.000000e+00> : vector<160x4xf32>
    %15 = tpu.matmul %12, %14, %cst_9 {dimension_numbers = #tpu.dot_dimension_numbers<[1], [0], [0], [1], [0, 0, 1, 1], [], []>} : vector<160x4xbf16>, vector<4x4xbf16>, vector<160x4xf32> -> vector<160x4xf32>
    %16 = arith.addf %11, %15 : vector<160x4xf32>
    %17 = vector.extract_strided_slice %7 {offsets = [32, 0], sizes = [160, 4], strides = [1, 1]} : vector<192x4xbf16> to vector<160x4xbf16>
    %c2 = arith.constant 2 : index
    %c0_10 = arith.constant 0 : index
    %c0_11 = arith.constant 0 : index
    %c0_12 = arith.constant 0 : index
    %18 = vector.load %arg3[%c2, %c0_10, %c0_11, %c0_12] : memref<3x3x4x4xbf16, #tpu.memory_space<vmem>>, vector<1x1x4x4xbf16>
    %19 = vector.shape_cast %18 : vector<1x1x4x4xbf16> to vector<4x4xbf16>
    %cst_13 = arith.constant dense<0.000000e+00> : vector<160x4xf32>
    %20 = tpu.matmul %17, %19, %cst_13 {dimension_numbers = #tpu.dot_dimension_numbers<[1], [0], [0], [1], [0, 0, 1, 1], [], []>} : vector<160x4xbf16>, vector<4x4xbf16>, vector<160x4xf32> -> vector<160x4xf32>
    %21 = arith.addf %16, %20 : vector<160x4xf32>
    %22 = arith.index_cast %4 : i32 to index
    %c1_14 = arith.constant 1 : index
    %c0_15 = arith.constant 0 : index
    %23 = vector.load %arg8[%22, %c1_14, %c0_15] : memref<20x18x4xbf16, #tpu.memory_space<vmem>>, vector<12x16x4xbf16>
    %24 = vector.shape_cast %23 : vector<12x16x4xbf16> to vector<192x4xbf16>
    %25 = vector.extract_strided_slice %24 {offsets = [0, 0], sizes = [160, 4], strides = [1, 1]} : vector<192x4xbf16> to vector<160x4xbf16>
    %c0_16 = arith.constant 0 : index
    %c1_17 = arith.constant 1 : index
    %c0_18 = arith.constant 0 : index
    %c0_19 = arith.constant 0 : index
    %26 = vector.load %arg3[%c0_16, %c1_17, %c0_18, %c0_19] : memref<3x3x4x4xbf16, #tpu.memory_space<vmem>>, vector<1x1x4x4xbf16>
    %27 = vector.shape_cast %26 : vector<1x1x4x4xbf16> to vector<4x4xbf16>
    %cst_20 = arith.constant dense<0.000000e+00> : vector<160x4xf32>
    %28 = tpu.matmul %25, %27, %cst_20 {dimension_numbers = #tpu.dot_dimension_numbers<[1], [0], [0], [1], [0, 0, 1, 1], [], []>} : vector<160x4xbf16>, vector<4x4xbf16>, vector<160x4xf32> -> vector<160x4xf32>
    %29 = arith.addf %21, %28 : vector<160x4xf32>
    %30 = vector.extract_strided_slice %24 {offsets = [16, 0], sizes = [160, 4], strides = [1, 1]} : vector<192x4xbf16> to vector<160x4xbf16>
    %c1_21 = arith.constant 1 : index
    %c1_22 = arith.constant 1 : index
    %c0_23 = arith.constant 0 : index
    %c0_24 = arith.constant 0 : index
    %31 = vector.load %arg3[%c1_21, %c1_22, %c0_23, %c0_24] : memref<3x3x4x4xbf16, #tpu.memory_space<vmem>>, vector<1x1x4x4xbf16>
    %32 = vector.shape_cast %31 : vector<1x1x4x4xbf16> to vector<4x4xbf16>
    %cst_25 = arith.constant dense<0.000000e+00> : vector<160x4xf32>
    %33 = tpu.matmul %30, %32, %cst_25 {dimension_numbers = #tpu.dot_dimension_numbers<[1], [0], [0], [1], [0, 0, 1, 1], [], []>} : vector<160x4xbf16>, vector<4x4xbf16>, vector<160x4xf32> -> vector<160x4xf32>
    %34 = arith.addf %29, %33 : vector<160x4xf32>
    %35 = vector.extract_strided_slice %24 {offsets = [32, 0], sizes = [160, 4], strides = [1, 1]} : vector<192x4xbf16> to vector<160x4xbf16>
    %c2_26 = arith.constant 2 : index
    %c1_27 = arith.constant 1 : index
    %c0_28 = arith.constant 0 : index
    %c0_29 = arith.constant 0 : index
    %36 = vector.load %arg3[%c2_26, %c1_27, %c0_28, %c0_29] : memref<3x3x4x4xbf16, #tpu.memory_space<vmem>>, vector<1x1x4x4xbf16>
    %37 = vector.shape_cast %36 : vector<1x1x4x4xbf16> to vector<4x4xbf16>
    %cst_30 = arith.constant dense<0.000000e+00> : vector<160x4xf32>
    %38 = tpu.matmul %35, %37, %cst_30 {dimension_numbers = #tpu.dot_dimension_numbers<[1], [0], [0], [1], [0, 0, 1, 1], [], []>} : vector<160x4xbf16>, vector<4x4xbf16>, vector<160x4xf32> -> vector<160x4xf32>
    %39 = arith.addf %34, %38 : vector<160x4xf32>
    %40 = arith.index_cast %4 : i32 to index
    %c2_31 = arith.constant 2 : index
    %c0_32 = arith.constant 0 : index
    %41 = vector.load %arg8[%40, %c2_31, %c0_32] : memref<20x18x4xbf16, #tpu.memory_space<vmem>>, vector<12x16x4xbf16>
    %42 = vector.shape_cast %41 : vector<12x16x4xbf16> to vector<192x4xbf16>
    %43 = vector.extract_strided_slice %42 {offsets = [0, 0], sizes = [160, 4], strides = [1, 1]} : vector<192x4xbf16> to vector<160x4xbf16>
    %c0_33 = arith.constant 0 : index
    %c2_34 = arith.constant 2 : index
    %c0_35 = arith.constant 0 : index
    %c0_36 = arith.constant 0 : index
    %44 = vector.load %arg3[%c0_33, %c2_34, %c0_35, %c0_36] : memref<3x3x4x4xbf16, #tpu.memory_space<vmem>>, vector<1x1x4x4xbf16>
    %45 = vector.shape_cast %44 : vector<1x1x4x4xbf16> to vector<4x4xbf16>
    %cst_37 = arith.constant dense<0.000000e+00> : vector<160x4xf32>
    %46 = tpu.matmul %43, %45, %cst_37 {dimension_numbers = #tpu.dot_dimension_numbers<[1], [0], [0], [1], [0, 0, 1, 1], [], []>} : vector<160x4xbf16>, vector<4x4xbf16>, vector<160x4xf32> -> vector<160x4xf32>
    %47 = arith.addf %39, %46 : vector<160x4xf32>
    %48 = vector.extract_strided_slice %42 {offsets = [16, 0], sizes = [160, 4], strides = [1, 1]} : vector<192x4xbf16> to vector<160x4xbf16>
    %c1_38 = arith.constant 1 : index
    %c2_39 = arith.constant 2 : index
    %c0_40 = arith.constant 0 : index
    %c0_41 = arith.constant 0 : index
    %49 = vector.load %arg3[%c1_38, %c2_39, %c0_40, %c0_41] : memref<3x3x4x4xbf16, #tpu.memory_space<vmem>>, vector<1x1x4x4xbf16>
    %50 = vector.shape_cast %49 : vector<1x1x4x4xbf16> to vector<4x4xbf16>
    %cst_42 = arith.constant dense<0.000000e+00> : vector<160x4xf32>
    %51 = tpu.matmul %48, %50, %cst_42 {dimension_numbers = #tpu.dot_dimension_numbers<[1], [0], [0], [1], [0, 0, 1, 1], [], []>} : vector<160x4xbf16>, vector<4x4xbf16>, vector<160x4xf32> -> vector<160x4xf32>
    %52 = arith.addf %47, %51 : vector<160x4xf32>
    %53 = vector.extract_strided_slice %42 {offsets = [32, 0], sizes = [160, 4], strides = [1, 1]} : vector<192x4xbf16> to vector<160x4xbf16>
    %c2_43 = arith.constant 2 : index
    %c2_44 = arith.constant 2 : index
    %c0_45 = arith.constant 0 : index
    %c0_46 = arith.constant 0 : index
    %54 = vector.load %arg3[%c2_43, %c2_44, %c0_45, %c0_46] : memref<3x3x4x4xbf16, #tpu.memory_space<vmem>>, vector<1x1x4x4xbf16>
    %55 = vector.shape_cast %54 : vector<1x1x4x4xbf16> to vector<4x4xbf16>
    %cst_47 = arith.constant dense<0.000000e+00> : vector<160x4xf32>
    %56 = tpu.matmul %53, %55, %cst_47 {dimension_numbers = #tpu.dot_dimension_numbers<[1], [0], [0], [1], [0, 0, 1, 1], [], []>} : vector<160x4xbf16>, vector<4x4xbf16>, vector<160x4xf32> -> vector<160x4xf32>
    %57 = arith.addf %52, %56 : vector<160x4xf32>
    %c0_48 = arith.constant 0 : index
    %c0_49 = arith.constant 0 : index
    %58 = vector.load %arg4[%c0_48, %c0_49] : memref<1x4xf32, #tpu.memory_space<vmem>>, vector<1x4xf32>
    %59 = vector.broadcast %58 : vector<1x4xf32> to vector<160x4xf32>
    %60 = arith.addf %57, %59 : vector<160x4xf32>
    %cst_50 = arith.constant 0.000000e+00 : f32
    %61 = vector.broadcast %cst_50 : f32 to vector<160x4xf32>
    %62 = arith.maximumf %60, %61 : vector<160x4xf32>
    %63 = vector.shape_cast %62 : vector<160x4xf32> to vector<10x16x4xf32>
    %c1_i32 = arith.constant 1 : i32
    %64 = arith.subi %4, %c1_i32 : i32
    %65 = tpu.iota {dimensions = array<i32: 0>} : vector<10x1x1xi32>
    %66 = vector.broadcast %64 : i32 to vector<10x1x1xi32>
    %67 = arith.addi %66, %65 : vector<10x1x1xi32>
    %c0_i32_51 = arith.constant 0 : i32
    %68 = vector.broadcast %c0_i32_51 : i32 to vector<10x1x1xi32>
    %69 = arith.cmpi sge, %67, %68 : vector<10x1x1xi32>
    %c16_i32 = arith.constant 16 : i32
    %70 = vector.broadcast %c16_i32 : i32 to vector<10x1x1xi32>
    %71 = arith.cmpi slt, %67, %70 : vector<10x1x1xi32>
    %72 = arith.andi %69, %71 : vector<10x1x1xi1>
    %cst_52 = arith.constant 0.000000e+00 : f32
    %73 = vector.shape_cast %72 : vector<10x1x1xi1> to vector<10x1x1xi1>
    %74 = vector.broadcast %73 : vector<10x1x1xi1> to vector<10x16x4xi1>
    %75 = vector.broadcast %cst_52 : f32 to vector<10x16x4xf32>
    %76 = arith.select %74, %63, %75 : vector<10x16x4xi1>, vector<10x16x4xf32>
    %cst_53 = arith.constant 0.000000e+00 : bf16
    %77 = vector.broadcast %cst_53 : bf16 to vector<10x1x4xbf16>
    %c0_54 = arith.constant 0 : index
    %c0_55 = arith.constant 0 : index
    %c0_56 = arith.constant 0 : index
    %78 = vector.load %arg9[%c0_54, %c0_55, %c0_56] : memref<10x18x4xbf16, #tpu.memory_space<vmem>>, vector<10x1x4xbf16>
    tpu.vector_store %arg9[%c0_54, %c0_55, %c0_56], %77 {strides = array<i32>} : memref<10x18x4xbf16, #tpu.memory_space<vmem>>, vector<10x1x4xbf16>,
    %c0_57 = arith.constant 0 : index
    %c17 = arith.constant 17 : index
    %c0_58 = arith.constant 0 : index
    %79 = vector.load %arg9[%c0_57, %c17, %c0_58] : memref<10x18x4xbf16, #tpu.memory_space<vmem>>, vector<10x1x4xbf16>
    tpu.vector_store %arg9[%c0_57, %c17, %c0_58], %77 {strides = array<i32>} : memref<10x18x4xbf16, #tpu.memory_space<vmem>>, vector<10x1x4xbf16>,
    %80 = arith.truncf %76 : vector<10x16x4xf32> to vector<10x16x4xbf16>
    %c0_59 = arith.constant 0 : index
    %c1_60 = arith.constant 1 : index
    %c0_61 = arith.constant 0 : index
    %81 = vector.load %arg9[%c0_59, %c1_60, %c0_61] : memref<10x18x4xbf16, #tpu.memory_space<vmem>>, vector<10x16x4xbf16>
    tpu.vector_store %arg9[%c0_59, %c1_60, %c0_61], %80 {strides = array<i32>} : memref<10x18x4xbf16, #tpu.memory_space<vmem>>, vector<10x16x4xbf16>,
    %c0_62 = arith.constant 0 : index
    %c0_63 = arith.constant 0 : index
    %c0_64 = arith.constant 0 : index
    %82 = vector.load %arg9[%c0_62, %c0_63, %c0_64] : memref<10x18x4xbf16, #tpu.memory_space<vmem>>, vector<10x16x4xbf16>
    %83 = vector.shape_cast %82 : vector<10x16x4xbf16> to vector<160x4xbf16>
    %84 = vector.extract_strided_slice %83 {offsets = [0, 0], sizes = [128, 4], strides = [1, 1]} : vector<160x4xbf16> to vector<128x4xbf16>
    %c0_65 = arith.constant 0 : index
    %c0_66 = arith.constant 0 : index
    %c0_67 = arith.constant 0 : index
    %c0_68 = arith.constant 0 : index
    %85 = vector.load %arg5[%c0_65, %c0_66, %c0_67, %c0_68] : memref<3x3x4x4xbf16, #tpu.memory_space<vmem>>, vector<1x1x4x4xbf16>
    %86 = vector.shape_cast %85 : vector<1x1x4x4xbf16> to vector<4x4xbf16>
    %cst_69 = arith.constant dense<0.000000e+00> : vector<128x4xf32>
    %87 = tpu.matmul %84, %86, %cst_69 {dimension_numbers = #tpu.dot_dimension_numbers<[1], [0], [0], [1], [0, 0, 1, 1], [], []>} : vector<128x4xbf16>, vector<4x4xbf16>, vector<128x4xf32> -> vector<128x4xf32>
    %88 = vector.extract_strided_slice %83 {offsets = [16, 0], sizes = [128, 4], strides = [1, 1]} : vector<160x4xbf16> to vector<128x4xbf16>
    %c1_70 = arith.constant 1 : index
    %c0_71 = arith.constant 0 : index
    %c0_72 = arith.constant 0 : index
    %c0_73 = arith.constant 0 : index
    %89 = vector.load %arg5[%c1_70, %c0_71, %c0_72, %c0_73] : memref<3x3x4x4xbf16, #tpu.memory_space<vmem>>, vector<1x1x4x4xbf16>
    %90 = vector.shape_cast %89 : vector<1x1x4x4xbf16> to vector<4x4xbf16>
    %cst_74 = arith.constant dense<0.000000e+00> : vector<128x4xf32>
    %91 = tpu.matmul %88, %90, %cst_74 {dimension_numbers = #tpu.dot_dimension_numbers<[1], [0], [0], [1], [0, 0, 1, 1], [], []>} : vector<128x4xbf16>, vector<4x4xbf16>, vector<128x4xf32> -> vector<128x4xf32>
    %92 = arith.addf %87, %91 : vector<128x4xf32>
    %93 = vector.extract_strided_slice %83 {offsets = [32, 0], sizes = [128, 4], strides = [1, 1]} : vector<160x4xbf16> to vector<128x4xbf16>
    %c2_75 = arith.constant 2 : index
    %c0_76 = arith.constant 0 : index
    %c0_77 = arith.constant 0 : index
    %c0_78 = arith.constant 0 : index
    %94 = vector.load %arg5[%c2_75, %c0_76, %c0_77, %c0_78] : memref<3x3x4x4xbf16, #tpu.memory_space<vmem>>, vector<1x1x4x4xbf16>
    %95 = vector.shape_cast %94 : vector<1x1x4x4xbf16> to vector<4x4xbf16>
    %cst_79 = arith.constant dense<0.000000e+00> : vector<128x4xf32>
    %96 = tpu.matmul %93, %95, %cst_79 {dimension_numbers = #tpu.dot_dimension_numbers<[1], [0], [0], [1], [0, 0, 1, 1], [], []>} : vector<128x4xbf16>, vector<4x4xbf16>, vector<128x4xf32> -> vector<128x4xf32>
    %97 = arith.addf %92, %96 : vector<128x4xf32>
    %c0_80 = arith.constant 0 : index
    %c1_81 = arith.constant 1 : index
    %c0_82 = arith.constant 0 : index
    %98 = vector.load %arg9[%c0_80, %c1_81, %c0_82] : memref<10x18x4xbf16, #tpu.memory_space<vmem>>, vector<10x16x4xbf16>
    %99 = vector.shape_cast %98 : vector<10x16x4xbf16> to vector<160x4xbf16>
    %100 = vector.extract_strided_slice %99 {offsets = [0, 0], sizes = [128, 4], strides = [1, 1]} : vector<160x4xbf16> to vector<128x4xbf16>
    %c0_83 = arith.constant 0 : index
    %c1_84 = arith.constant 1 : index
    %c0_85 = arith.constant 0 : index
    %c0_86 = arith.constant 0 : index
    %101 = vector.load %arg5[%c0_83, %c1_84, %c0_85, %c0_86] : memref<3x3x4x4xbf16, #tpu.memory_space<vmem>>, vector<1x1x4x4xbf16>
    %102 = vector.shape_cast %101 : vector<1x1x4x4xbf16> to vector<4x4xbf16>
    %cst_87 = arith.constant dense<0.000000e+00> : vector<128x4xf32>
    %103 = tpu.matmul %100, %102, %cst_87 {dimension_numbers = #tpu.dot_dimension_numbers<[1], [0], [0], [1], [0, 0, 1, 1], [], []>} : vector<128x4xbf16>, vector<4x4xbf16>, vector<128x4xf32> -> vector<128x4xf32>
    %104 = arith.addf %97, %103 : vector<128x4xf32>
    %105 = vector.extract_strided_slice %99 {offsets = [16, 0], sizes = [128, 4], strides = [1, 1]} : vector<160x4xbf16> to vector<128x4xbf16>
    %c1_88 = arith.constant 1 : index
    %c1_89 = arith.constant 1 : index
    %c0_90 = arith.constant 0 : index
    %c0_91 = arith.constant 0 : index
    %106 = vector.load %arg5[%c1_88, %c1_89, %c0_90, %c0_91] : memref<3x3x4x4xbf16, #tpu.memory_space<vmem>>, vector<1x1x4x4xbf16>
    %107 = vector.shape_cast %106 : vector<1x1x4x4xbf16> to vector<4x4xbf16>
    %cst_92 = arith.constant dense<0.000000e+00> : vector<128x4xf32>
    %108 = tpu.matmul %105, %107, %cst_92 {dimension_numbers = #tpu.dot_dimension_numbers<[1], [0], [0], [1], [0, 0, 1, 1], [], []>} : vector<128x4xbf16>, vector<4x4xbf16>, vector<128x4xf32> -> vector<128x4xf32>
    %109 = arith.addf %104, %108 : vector<128x4xf32>
    %110 = vector.extract_strided_slice %99 {offsets = [32, 0], sizes = [128, 4], strides = [1, 1]} : vector<160x4xbf16> to vector<128x4xbf16>
    %c2_93 = arith.constant 2 : index
    %c1_94 = arith.constant 1 : index
    %c0_95 = arith.constant 0 : index
    %c0_96 = arith.constant 0 : index
    %111 = vector.load %arg5[%c2_93, %c1_94, %c0_95, %c0_96] : memref<3x3x4x4xbf16, #tpu.memory_space<vmem>>, vector<1x1x4x4xbf16>
    %112 = vector.shape_cast %111 : vector<1x1x4x4xbf16> to vector<4x4xbf16>
    %cst_97 = arith.constant dense<0.000000e+00> : vector<128x4xf32>
    %113 = tpu.matmul %110, %112, %cst_97 {dimension_numbers = #tpu.dot_dimension_numbers<[1], [0], [0], [1], [0, 0, 1, 1], [], []>} : vector<128x4xbf16>, vector<4x4xbf16>, vector<128x4xf32> -> vector<128x4xf32>
    %114 = arith.addf %109, %113 : vector<128x4xf32>
    %c0_98 = arith.constant 0 : index
    %c2_99 = arith.constant 2 : index
    %c0_100 = arith.constant 0 : index
    %115 = vector.load %arg9[%c0_98, %c2_99, %c0_100] : memref<10x18x4xbf16, #tpu.memory_space<vmem>>, vector<10x16x4xbf16>
    %116 = vector.shape_cast %115 : vector<10x16x4xbf16> to vector<160x4xbf16>
    %117 = vector.extract_strided_slice %116 {offsets = [0, 0], sizes = [128, 4], strides = [1, 1]} : vector<160x4xbf16> to vector<128x4xbf16>
    %c0_101 = arith.constant 0 : index
    %c2_102 = arith.constant 2 : index
    %c0_103 = arith.constant 0 : index
    %c0_104 = arith.constant 0 : index
    %118 = vector.load %arg5[%c0_101, %c2_102, %c0_103, %c0_104] : memref<3x3x4x4xbf16, #tpu.memory_space<vmem>>, vector<1x1x4x4xbf16>
    %119 = vector.shape_cast %118 : vector<1x1x4x4xbf16> to vector<4x4xbf16>
    %cst_105 = arith.constant dense<0.000000e+00> : vector<128x4xf32>
    %120 = tpu.matmul %117, %119, %cst_105 {dimension_numbers = #tpu.dot_dimension_numbers<[1], [0], [0], [1], [0, 0, 1, 1], [], []>} : vector<128x4xbf16>, vector<4x4xbf16>, vector<128x4xf32> -> vector<128x4xf32>
    %121 = arith.addf %114, %120 : vector<128x4xf32>
    %122 = vector.extract_strided_slice %116 {offsets = [16, 0], sizes = [128, 4], strides = [1, 1]} : vector<160x4xbf16> to vector<128x4xbf16>
    %c1_106 = arith.constant 1 : index
    %c2_107 = arith.constant 2 : index
    %c0_108 = arith.constant 0 : index
    %c0_109 = arith.constant 0 : index
    %123 = vector.load %arg5[%c1_106, %c2_107, %c0_108, %c0_109] : memref<3x3x4x4xbf16, #tpu.memory_space<vmem>>, vector<1x1x4x4xbf16>
    %124 = vector.shape_cast %123 : vector<1x1x4x4xbf16> to vector<4x4xbf16>
    %cst_110 = arith.constant dense<0.000000e+00> : vector<128x4xf32>
    %125 = tpu.matmul %122, %124, %cst_110 {dimension_numbers = #tpu.dot_dimension_numbers<[1], [0], [0], [1], [0, 0, 1, 1], [], []>} : vector<128x4xbf16>, vector<4x4xbf16>, vector<128x4xf32> -> vector<128x4xf32>
    %126 = arith.addf %121, %125 : vector<128x4xf32>
    %127 = vector.extract_strided_slice %116 {offsets = [32, 0], sizes = [128, 4], strides = [1, 1]} : vector<160x4xbf16> to vector<128x4xbf16>
    %c2_111 = arith.constant 2 : index
    %c2_112 = arith.constant 2 : index
    %c0_113 = arith.constant 0 : index
    %c0_114 = arith.constant 0 : index
    %128 = vector.load %arg5[%c2_111, %c2_112, %c0_113, %c0_114] : memref<3x3x4x4xbf16, #tpu.memory_space<vmem>>, vector<1x1x4x4xbf16>
    %129 = vector.shape_cast %128 : vector<1x1x4x4xbf16> to vector<4x4xbf16>
    %cst_115 = arith.constant dense<0.000000e+00> : vector<128x4xf32>
    %130 = tpu.matmul %127, %129, %cst_115 {dimension_numbers = #tpu.dot_dimension_numbers<[1], [0], [0], [1], [0, 0, 1, 1], [], []>} : vector<128x4xbf16>, vector<4x4xbf16>, vector<128x4xf32> -> vector<128x4xf32>
    %131 = arith.addf %126, %130 : vector<128x4xf32>
    %c0_116 = arith.constant 0 : index
    %132 = arith.index_cast %4 : i32 to index
    %c0_117 = arith.constant 0 : index
    %c0_118 = arith.constant 0 : index
    %133 = vector.load %arg2[%c0_116, %132, %c0_117, %c0_118] : memref<1x16x16x4xf32, #tpu.memory_space<vmem>>, vector<1x8x16x4xf32>
    %134 = vector.shape_cast %131 : vector<128x4xf32> to vector<1x8x16x4xf32>
    %c0_119 = arith.constant 0 : index
    %c0_120 = arith.constant 0 : index
    %135 = vector.load %arg6[%c0_119, %c0_120] : memref<1x4xf32, #tpu.memory_space<vmem>>, vector<1x4xf32>
    %136 = vector.shape_cast %135 : vector<1x4xf32> to vector<1x1x1x4xf32>
    %137 = vector.broadcast %136 : vector<1x1x1x4xf32> to vector<1x8x16x4xf32>
    %138 = arith.addf %134, %137 : vector<1x8x16x4xf32>
    %139 = arith.addf %138, %133 : vector<1x8x16x4xf32>
    %cst_121 = arith.constant 0.000000e+00 : f32
    %140 = vector.broadcast %cst_121 : f32 to vector<1x8x16x4xf32>
    %141 = arith.maximumf %139, %140 : vector<1x8x16x4xf32>
    %c0_122 = arith.constant 0 : index
    %c0_123 = arith.constant 0 : index
    %c0_124 = arith.constant 0 : index
    %c0_125 = arith.constant 0 : index
    %142 = vector.load %arg7[%c0_122, %c0_123, %c0_124, %c0_125] : memref<1x8x16x4xf32, #tpu.memory_space<vmem>>, vector<1x8x16x4xf32>
    tpu.vector_store %arg7[%c0_122, %c0_123, %c0_124, %c0_125], %141 {strides = array<i32>} : memref<1x8x16x4xf32, #tpu.memory_space<vmem>>, vector<1x8x16x4xf32>,
    return
  }
  func.func @transform_0(%arg0: i32, %arg1: i32) -> (i32, i32, i32, i32) {
    %c0_i32 = arith.constant 0 : i32
    %c0_i32_0 = arith.constant 0 : i32
    %c0_i32_1 = arith.constant 0 : i32
    %c0_i32_2 = arith.constant 0 : i32
    return %arg0, %c0_i32, %c0_i32_0, %c0_i32_1 : i32, i32, i32, i32
  }
  func.func @transform_1(%arg0: i32, %arg1: i32) -> (i32, i32, i32, i32) {
    %c0_i32 = arith.constant 0 : i32
    %c0_i32_0 = arith.constant 0 : i32
    %c0_i32_1 = arith.constant 0 : i32
    %c0_i32_2 = arith.constant 0 : i32
    %c0_i32_3 = arith.constant 0 : i32
    return %c0_i32, %c0_i32_0, %c0_i32_1, %c0_i32_2 : i32, i32, i32, i32
  }
  func.func @transform_2(%arg0: i32, %arg1: i32) -> (i32, i32) {
    %c0_i32 = arith.constant 0 : i32
    %c0_i32_0 = arith.constant 0 : i32
    %c0_i32_1 = arith.constant 0 : i32
    return %c0_i32, %c0_i32_0 : i32, i32
  }
  func.func @transform_3(%arg0: i32, %arg1: i32) -> (i32, i32, i32, i32) {
    %c0_i32 = arith.constant 0 : i32
    %c0_i32_0 = arith.constant 0 : i32
    %c0_i32_1 = arith.constant 0 : i32
    %c0_i32_2 = arith.constant 0 : i32
    %c0_i32_3 = arith.constant 0 : i32
    return %c0_i32, %c0_i32_0, %c0_i32_1, %c0_i32_2 : i32, i32, i32, i32
  }
  func.func @transform_4(%arg0: i32, %arg1: i32) -> (i32, i32) {
    %c0_i32 = arith.constant 0 : i32
    %c0_i32_0 = arith.constant 0 : i32
    %c0_i32_1 = arith.constant 0 : i32
    return %c0_i32, %c0_i32_0 : i32, i32
  }
  func.func @transform_5(%arg0: i32, %arg1: i32) -> (i32, i32, i32, i32) {
    %c0_i32 = arith.constant 0 : i32
    %c0_i32_0 = arith.constant 0 : i32
    %c0_i32_1 = arith.constant 0 : i32
    return %arg0, %arg1, %c0_i32, %c0_i32_0 : i32, i32, i32, i32
  }
}

</mosaic_0001>

<llo_original>
// kernel: basic_block_forward.1
$region0: #{basic_block_forward.1}
  #allocation0 [shape = 'u32[]', space=smem, size = 0x4, offset = 0x4, fixed_abs, tag = 'smem constant byte address 0x4 - core index']
  #allocation1 [shape = 'u32[144,128]{1,0:T(1,128)}', space=vmem, size = 0x12000, scoped, tag = 'internal scratch']
  #allocation2 [shape = 'bf16[20,18,4]{2,1,0:T(8,128)(2,1)}', space=vmem, size = 0x1e000, scoped, tag = 'scratch operand']
  #allocation3 [shape = 'bf16[10,18,4]{2,1,0:T(8,128)(2,1)}', space=vmem, size = 0xf000, scoped, tag = 'scratch operand']
  %s0 = inlined_call_operand.vmem [shape: f32[2,16,16,4], index: 0, kind: input, shape index: {}]
  %s1 = inlined_call_operand.vmem [shape: bf16[3,3,4,4], index: 1, kind: input, shape index: {}]
  %s2 = inlined_call_operand.vmem [shape: f32[1,4], index: 2, kind: input, shape index: {}]
  %s3 = inlined_call_operand.vmem [shape: bf16[3,3,4,4], index: 3, kind: input, shape index: {}]
  %s4 = inlined_call_operand.vmem [shape: f32[1,4], index: 4, kind: input, shape index: {}]
  %s5 = inlined_call_operand.vmem [shape: f32[2,16,16,4], index: 5, kind: output, shape index: {}]
  %s6 = sld [smem:[#allocation0]]
  $region57: #{basic_block_forward.1} parent=0
    _
  %s8 = ssub.s32 1, %s6
  %s9 = scalar_select 0, %s8, %s6
  loop: start=0, step=1, limit=6
  $region2: #{basic_block_forward.1} parent=0 // loop_pre_header
    _
  $region3: #{basic_block_forward.1} parent=0 // loop_header
    %s11 = sphi 0, %s15
    %p12 = scmp.ge.s32.totalorder %s11, 6
    %s18 = sphi 0, %s30
    %s19 = sphi 0, %s26
    %s20 = sphi 0, %s18
    %s21 = sphi 0, %s19
    %s22 = sphi 0, %s20
    %s23 = sphi 0, %s21
    %s33 = sphi 0, %s35
    %s36 = sphi 0, %s33
    %s37 = sphi 0, %s36
    %s53 = sphi 0, %s37
    %s57 = sphi 0, %s57
    %s59 = sphi 0, %s57
    %s60 = sphi 0, %s59
    %s74 = sphi 0, %s60
    %s78 = sphi 0, %s78
    %s80 = sphi 0, %s78
    %s81 = sphi 0, %s80
    %s95 = sphi 0, %s81
    %s99 = sphi 0, %s99
    %s101 = sphi 0, %s99
    %s102 = sphi 0, %s101
    %s116 = sphi 0, %s102
    %s120 = sphi 0, %s120
    %s122 = sphi 0, %s120
    %s123 = sphi 0, %s122
    %s137 = sphi 0, %s123
    %s145 = sphi 0, %s147
    %s148 = sphi 0, %s145
    %s149 = sphi 0, %s148
    %s165 = sphi 0, %s149
  $region4: #{basic_block_forward.1} parent=0 // loop_header_branch
    %14 = sbr.rel (%p12) target = $region8
  $region5: #{basic_block_forward.1} parent=0 // loop_body
    %s16 = ssub.s32 %s11, 1
    %s17 = ssub.s32 %s11, 2
    %s24 = sadd.s32 1, %s19
    %p25 = scmp.ge.s32.totalorder %s24, 2
    %s26 = scalar_select %p25, 0, %s24
    %s27 = sadd.s32 1, %s18
    %s28 = scalar_select %p25, %s27, %s18
    %p29 = scmp.ge.s32.totalorder %s28, 2
    %s30 = scalar_select %p29, 0, %s28
    %s31 = ssub.s32 %s18, %s30
    %p32 = scmp.eq.s32.totalorder %s31, 0
    %s34 = sadd.s32 %s33, 1
    %s35 = scalar_select %p32, %s33, %s34
    %p38 = pneg %p32
    %p39 = scmp.eq.s32.totalorder %s11, 3
    %p40 = por %p38, %p39
    %p41 = scmp.ne.s32.totalorder %s33, %s36
    %p42 = scmp.eq.s32.totalorder %s11, 0
    %p43 = por %p41, %p42
    %p44 = scmp.ne.s32.totalorder %s33, %s36
    %p45 = scmp.eq.s32.totalorder %s16, 3
    %p46 = por %p44, %p45
    %p47 = scmp.ne.s32.totalorder %s36, %s37
    %p48 = scmp.eq.s32.totalorder %s16, 0
    %p49 = por %p47, %p48
    %p50 = scmp.ne.s32.totalorder %s36, %s37
    %p51 = scmp.eq.s32.totalorder %s17, 3
    %p52 = por %p50, %p51
    %p54 = scmp.ne.s32.totalorder %s37, %s53
    %p55 = scmp.eq.s32.totalorder %s17, 0
    %p56 = por %p54, %p55
    %s58 = sadd.s32 %s57, 1
    %p61 = scmp.eq.s32.totalorder %s11, 3
    %p62 = scmp.ne.s32.totalorder %s57, %s59
    %p63 = scmp.eq.s32.totalorder %s11, 0
    %p64 = por %p62, %p63
    %p65 = scmp.ne.s32.totalorder %s57, %s59
    %p66 = scmp.eq.s32.totalorder %s16, 3
    %p67 = por %p65, %p66
    %p68 = scmp.ne.s32.totalorder %s59, %s60
    %p69 = scmp.eq.s32.totalorder %s16, 0
    %p70 = por %p68, %p69
    %p71 = scmp.ne.s32.totalorder %s59, %s60
    %p72 = scmp.eq.s32.totalorder %s17, 3
    %p73 = por %p71, %p72
    %p75 = scmp.ne.s32.totalorder %s60, %s74
    %p76 = scmp.eq.s32.totalorder %s17, 0
    %p77 = por %p75, %p76
    %s79 = sadd.s32 %s78, 1
    %p82 = scmp.eq.s32.totalorder %s11, 3
    %p83 = scmp.ne.s32.totalorder %s78, %s80
    %p84 = scmp.eq.s32.totalorder %s11, 0
    %p85 = por %p83, %p84
    %p86 = scmp.ne.s32.totalorder %s78, %s80
    %p87 = scmp.eq.s32.totalorder %s16, 3
    %p88 = por %p86, %p87
    %p89 = scmp.ne.s32.totalorder %s80, %s81
    %p90 = scmp.eq.s32.totalorder %s16, 0
    %p91 = por %p89, %p90
    %p92 = scmp.ne.s32.totalorder %s80, %s81
    %p93 = scmp.eq.s32.totalorder %s17, 3
    %p94 = por %p92, %p93
    %p96 = scmp.ne.s32.totalorder %s81, %s95
    %p97 = scmp.eq.s32.totalorder %s17, 0
    %p98 = por %p96, %p97
    %s100 = sadd.s32 %s99, 1
    %p103 = scmp.eq.s32.totalorder %s11, 3
    %p104 = scmp.ne.s32.totalorder %s99, %s101
    %p105 = scmp.eq.s32.totalorder %s11, 0
    %p106 = por %p104, %p105
    %p107 = scmp.ne.s32.totalorder %s99, %s101
    %p108 = scmp.eq.s32.totalorder %s16, 3
    %p109 = por %p107, %p108
    %p110 = scmp.ne.s32.totalorder %s101, %s102
    %p111 = scmp.eq.s32.totalorder %s16, 0
    %p112 = por %p110, %p111
    %p113 = scmp.ne.s32.totalorder %s101, %s102
    %p114 = scmp.eq.s32.totalorder %s17, 3
    %p115 = por %p113, %p114
    %p117 = scmp.ne.s32.totalorder %s102, %s116
    %p118 = scmp.eq.s32.totalorder %s17, 0
    %p119 = por %p117, %p118
    %s121 = sadd.s32 %s120, 1
    %p124 = scmp.eq.s32.totalorder %s11, 3
    %p125 = scmp.ne.s32.totalorder %s120, %s122
    %p126 = scmp.eq.s32.totalorder %s11, 0
    %p127 = por %p125, %p126
    %p128 = scmp.ne.s32.totalorder %s120, %s122
    %p129 = scmp.eq.s32.totalorder %s16, 3
    %p130 = por %p128, %p129
    %p131 = scmp.ne.s32.totalorder %s122, %s123
    %p132 = scmp.eq.s32.totalorder %s16, 0
    %p133 = por %p131, %p132
    %p134 = scmp.ne.s32.totalorder %s122, %s123
    %p135 = scmp.eq.s32.totalorder %s17, 3
    %p136 = por %p134, %p135
    %p138 = scmp.ne.s32.totalorder %s123, %s137
    %p139 = scmp.eq.s32.totalorder %s17, 0
    %p140 = por %p138, %p139
    %s141 = ssub.s32 %s18, %s30
    %s142 = ssub.s32 %s19, %s26
    %s143 = sor.u32 %s141, %s142
    %p144 = scmp.eq.s32.totalorder %s143, 0
    %s146 = sadd.s32 %s145, 1
    %s147 = scalar_select %p144, %s145, %s146
    %p150 = pneg %p144
    %p151 = scmp.eq.s32.totalorder %s11, 3
    %p152 = por %p150, %p151
    %p153 = scmp.ne.s32.totalorder %s145, %s148
    %p154 = scmp.eq.s32.totalorder %s11, 0
    %p155 = por %p153, %p154
    %p156 = scmp.ne.s32.totalorder %s145, %s148
    %p157 = scmp.eq.s32.totalorder %s16, 3
    %p158 = por %p156, %p157
    %p159 = scmp.ne.s32.totalorder %s148, %s149
    %p160 = scmp.eq.s32.totalorder %s16, 0
    %p161 = por %p159, %p160
    %p162 = scmp.ne.s32.totalorder %s148, %s149
    %p163 = scmp.eq.s32.totalorder %s17, 3
    %p164 = por %p162, %p163
    %p166 = scmp.ne.s32.totalorder %s149, %s165
    %p167 = scmp.eq.s32.totalorder %s17, 0
    %p168 = por %p166, %p167
    %p169 = scmp.le.s32.totalorder 1, %s11
    %p170 = scmp.lt.s32.totalorder %s11, 5
    %p171 = pnand %p169, %p170
    %p172 = pneg %p171
    // Predicated region
    $region9: #{basic_block_forward.1} parent=5 // pred_check
      _
    $region10: #{basic_block_forward.1} parent=5 // pred_check_branch
      %174 = sbr.rel (%p171) target = $region12
    $region11: #{basic_block_forward.1} parent=5 // pred_region
      %s175 = ssub.s32 %s11, 1
      // Predicated region
      $region13: #{basic_block_forward.1} parent=11 // pred_check
        %p176 = pneg %p70
      $region14: #{basic_block_forward.1} parent=11 // pred_check_branch
        %178 = sbr.rel (%p176) target = $region16
      $region15: #{basic_block_forward.1} parent=11 // pred_region
        _
      $region16: #{basic_block_forward.1} parent=11 // pred_fallthru
        _
      // Predicated region
      $region17: #{basic_block_forward.1} parent=11 // pred_check
        %p179 = pneg %p91
      $region18: #{basic_block_forward.1} parent=11 // pred_check_branch
        %181 = sbr.rel (%p179) target = $region20
      $region19: #{basic_block_forward.1} parent=11 // pred_region
        _
      $region20: #{basic_block_forward.1} parent=11 // pred_fallthru
        _
      // Predicated region
      $region21: #{basic_block_forward.1} parent=11 // pred_check
        %p182 = pneg %p112
      $region22: #{basic_block_forward.1} parent=11 // pred_check_branch
        %184 = sbr.rel (%p182) target = $region24
      $region23: #{basic_block_forward.1} parent=11 // pred_region
        _
      $region24: #{basic_block_forward.1} parent=11 // pred_fallthru
        _
      // Predicated region
      $region25: #{basic_block_forward.1} parent=11 // pred_check
        %p185 = pneg %p133
      $region26: #{basic_block_forward.1} parent=11 // pred_check_branch
        %187 = sbr.rel (%p185) target = $region28
      $region27: #{basic_block_forward.1} parent=11 // pred_region
        _
      $region28: #{basic_block_forward.1} parent=11 // pred_fallthru
        _
    $region12: #{basic_block_forward.1} parent=5 // pred_fallthru
      _
    %p188 = scmp.lt.s32.totalorder %s11, 4
    // Predicated region
    $region29: #{basic_block_forward.1} parent=5 // pred_check
      %p189 = pneg %p188
    $region30: #{basic_block_forward.1} parent=5 // pred_check_branch
      %191 = sbr.rel (%p189) target = $region32
    $region31: #{basic_block_forward.1} parent=5 // pred_region
      // Predicated region
      $region33: #{basic_block_forward.1} parent=31 // pred_check
        %p192 = pneg %p43
      $region34: #{basic_block_forward.1} parent=31 // pred_check_branch
        %194 = sbr.rel (%p192) target = $region36
      $region35: #{basic_block_forward.1} parent=31 // pred_region
        %p195 = scmp.lt.s32.totalorder %s18, 1
        %s196 = scalar_select %p195, %s18, 1
        %s197 = smul.addr %s196, 32
        %s198 = smul.addr %s197, 8
        %s199 = scalar_lea.vmem %s0, %s198
      $region36: #{basic_block_forward.1} parent=31 // pred_fallthru
        _
    $region32: #{basic_block_forward.1} parent=5 // pred_fallthru
      _
    %p200 = scmp.le.s32.totalorder 1, %s11
    %p201 = scmp.lt.s32.totalorder %s11, 5
    %p202 = pnand %p200, %p201
    %p203 = pneg %p202
    // Predicated region
    $region37: #{basic_block_forward.1} parent=5 // pred_check
      _
    $region38: #{basic_block_forward.1} parent=5 // pred_check_branch
      %205 = sbr.rel (%p202) target = $region40
    $region39: #{basic_block_forward.1} parent=5 // pred_region
      %s206 = ssub.s32 %s11, 1
      %p207 = scmp.lt.s32.totalorder %s20, 1
      %s208 = scalar_select %p207, %s20, 1
      %s209 = smul.addr %s208, 32
      %s210 = smul.addr %s209, 8
      %s211 = scalar_lea.vmem %s0, %s210
      %p212 = pneg %p49
      %p213 = pneg %p46
      %p214 = pneg %p70
      %p215 = pneg %p67
      %p216 = pneg %p91
      %p217 = pneg %p88
      %p218 = pneg %p112
      %p219 = pneg %p109
      %p220 = pneg %p133
      %p221 = pneg %p130
      %p222 = pneg %p161
      %p223 = pneg %p158
      %s224 = smul.u32 8, %s21
      %p225 = scmp.lt.s32.totalorder %s20, 1
      %s226 = scalar_select %p225, %s20, 1
      %p227 = scmp.lt.s32.totalorder %s224, 15
      %s228 = scalar_select %p227, %s224, 15
      %s229 = smul.addr %s228, 2
      %s230 = smul.addr %s226, 32
      %s231 = sadd.s32 %s229, %s230
      %s232 = smul.addr %s231, 8
      %s233 = scalar_lea.vmem %s5, %s232
      %p234 = scmp.lt.s32.totalorder %s20, 1
      %s235 = scalar_select %p234, %s20, 1
      %s236 = smul.addr %s235, 32
      %s237 = smul.addr %s236, 8
      %s238 = scalar_lea.vmem %s0, %s237
      %s239 = smul.u32 8, %s21
      %p240 = scmp.lt.s32.totalorder %s20, 1
      %s241 = scalar_select %p240, %s20, 1
      %p242 = scmp.lt.s32.totalorder %s239, 15
      %s243 = scalar_select %p242, %s239, 15
      %s244 = smul.addr %s243, 2
      %s245 = smul.addr %s241, 32
      %s246 = sadd.s32 %s244, %s245
      %s247 = smul.addr %s246, 8
      %s248 = scalar_lea.vmem %s5, %s247
      %s249 = smul.u32 8, %s21
      %p251 = scmp.eq.s32.totalorder %s21, 0
      // Predicated region
      $region41: #{basic_block_forward.1} parent=39 // pred_check
        %p252 = pneg %p251
      $region42: #{basic_block_forward.1} parent=39 // pred_check_branch
        %254 = sbr.rel (%p252) target = $region44
      $region43: #{basic_block_forward.1} parent=39 // pred_region
        %vm255 = vcmask 27648
        %256 = vst.msk [vmem:[#allocation2] sm:$0xf] %vm255, 0
        %257 = vst.msk [vmem:[#allocation2 + $0x4] sm:$0xf] %vm255, 0
        %vm258 = vcmask 24576
        %259 = vst.msk [vmem:[#allocation2 + $0x8] sm:$0x1] %vm258, 0
        %260 = vst.msk [vmem:[#allocation2 + $0xc] sm:$0xf] %vm255, 0
        %261 = vst.msk [vmem:[#allocation2 + $0x10] sm:$0xf] %vm255, 0
        %262 = vst.msk [vmem:[#allocation2 + $0x14] sm:$0x1] %vm258, 0
        %263 = vst.msk [vmem:[#allocation2 + $0x18] sm:$0xf] %vm255, 0
        %264 = vst.msk [vmem:[#allocation2 + $0x1c] sm:$0xf] %vm255, 0
        %265 = vst.msk [vmem:[#allocation2 + $0x20] sm:$0x1] %vm258, 0
        %266 = vst.msk [vmem:[#allocation2 + $0x24] sm:$0xf] %vm255, 0
        %267 = vst.msk [vmem:[#allocation2 + $0x28] sm:$0xf] %vm255, 0
        %268 = vst.msk [vmem:[#allocation2 + $0x2c] sm:$0x1] %vm258, 0
        %269 = vst.msk [vmem:[#allocation2 + $0x30] sm:$0xf] %vm255, 0
        %270 = vst.msk [vmem:[#allocation2 + $0x34] sm:$0xf] %vm255, 0
        %271 = vst.msk [vmem:[#allocation2 + $0x38] sm:$0x1] %vm258, 0
        %272 = vst.msk [vmem:[#allocation2 + $0x3c] sm:$0xf] %vm255, 0
        %273 = vst.msk [vmem:[#allocation2 + $0x40] sm:$0xf] %vm255, 0
        %274 = vst.msk [vmem:[#allocation2 + $0x44] sm:$0x1] %vm258, 0
        %275 = vst.msk [vmem:[#allocation2 + $0x48] sm:$0xf] %vm255, 0
        %276 = vst.msk [vmem:[#allocation2 + $0x4c] sm:$0xf] %vm255, 0
        %277 = vst.msk [vmem:[#allocation2 + $0x50] sm:$0x1] %vm258, 0
        %278 = vst.msk [vmem:[#allocation2 + $0x54] sm:$0xf] %vm255, 0
        %279 = vst.msk [vmem:[#allocation2 + $0x58] sm:$0xf] %vm255, 0
        %280 = vst.msk [vmem:[#allocation2 + $0x5c] sm:$0x1] %vm258, 0
        %281 = vst.msk [vmem:[#allocation2 + $0x60] sm:$0xf] %vm255, 0
        %282 = vst.msk [vmem:[#allocation2 + $0x64] sm:$0xf] %vm255, 0
        %283 = vst.msk [vmem:[#allocation2 + $0x68] sm:$0x1] %vm258, 0
        %284 = vst.msk [vmem:[#allocation2 + $0x6c] sm:$0xf] %vm255, 0
        %285 = vst.msk [vmem:[#allocation2 + $0x70] sm:$0xf] %vm255, 0
        %286 = vst.msk [vmem:[#allocation2 + $0x74] sm:$0x1] %vm258, 0
        %287 = vst.msk [vmem:[#allocation2 + $0x78] sm:$0xf] %vm255, 0
        %288 = vst.msk [vmem:[#allocation2 + $0x7c] sm:$0xf] %vm255, 0
        %289 = vst.msk [vmem:[#allocation2 + $0x80] sm:$0x1] %vm258, 0
        %290 = vst.msk [vmem:[#allocation2 + $0x84] sm:$0xf] %vm255, 0
        %291 = vst.msk [vmem:[#allocation2 + $0x88] sm:$0xf] %vm255, 0
        %292 = vst.msk [vmem:[#allocation2 + $0x8c] sm:$0x1] %vm258, 0
        %293 = vst.msk [vmem:[#allocation2 + $0x90] sm:$0xf] %vm255, 0
        %294 = vst.msk [vmem:[#allocation2 + $0x94] sm:$0xf] %vm255, 0
        %295 = vst.msk [vmem:[#allocation2 + $0x98] sm:$0x1] %vm258, 0
        %296 = vst.msk [vmem:[#allocation2 + $0x9c] sm:$0xf] %vm255, 0
        %297 = vst.msk [vmem:[#allocation2 + $0xa0] sm:$0xf] %vm255, 0
        %298 = vst.msk [vmem:[#allocation2 + $0xa4] sm:$0x1] %vm258, 0
        %299 = vst.msk [vmem:[#allocation2 + $0xa8] sm:$0xf] %vm255, 0
        %300 = vst.msk [vmem:[#allocation2 + $0xac] sm:$0xf] %vm255, 0
        %301 = vst.msk [vmem:[#allocation2 + $0xb0] sm:$0x1] %vm258, 0
        %302 = vst.msk [vmem:[#allocation2 + $0xb4] sm:$0xf] %vm255, 0
        %303 = vst.msk [vmem:[#allocation2 + $0xb8] sm:$0xf] %vm255, 0
        %304 = vst.msk [vmem:[#allocation2 + $0xbc] sm:$0x1] %vm258, 0
        %305 = vst.msk [vmem:[#allocation2 + $0xc0] sm:$0xf] %vm255, 0
        %306 = vst.msk [vmem:[#allocation2 + $0xc4] sm:$0xf] %vm255, 0
        %307 = vst.msk [vmem:[#allocation2 + $0xc8] sm:$0x1] %vm258, 0
        %308 = vst.msk [vmem:[#allocation2 + $0xcc] sm:$0xf] %vm255, 0
        %309 = vst.msk [vmem:[#allocation2 + $0xd0] sm:$0xf] %vm255, 0
        %310 = vst.msk [vmem:[#allocation2 + $0xd4] sm:$0x1] %vm258, 0
        %311 = vst.msk [vmem:[#allocation2 + $0xd8] sm:$0xf] %vm255, 0
        %312 = vst.msk [vmem:[#allocation2 + $0xdc] sm:$0xf] %vm255, 0
        %313 = vst.msk [vmem:[#allocation2 + $0xe0] sm:$0x1] %vm258, 0
        %314 = vst.msk [vmem:[#allocation2 + $0xe4] sm:$0xf] %vm255, 0
        %315 = vst.msk [vmem:[#allocation2 + $0xe8] sm:$0xf] %vm255, 0
        %316 = vst.msk [vmem:[#allocation2 + $0xec] sm:$0x1] %vm258, 0
        %v317 = vld [vmem:[%s238] sm:$0xff]
        %v318 = vld [vmem:[%s238 + $0x8] sm:$0xff]
        %v319 = vld [vmem:[%s238 + $0x10] sm:$0xff]
        %v320 = vld [vmem:[%s238 + $0x18] sm:$0xff]
        %v321 = vld [vmem:[%s238 + $0x20] sm:$0xff]
        %v322 = vld [vmem:[%s238 + $0x28] sm:$0xff]
        %v323 = vld [vmem:[%s238 + $0x30] sm:$0xff]
        %v324 = vld [vmem:[%s238 + $0x38] sm:$0xff]
        %v325 = vld [vmem:[%s238 + $0x40] sm:$0xff]
        %v326 = vld [vmem:[%s238 + $0x48] sm:$0xff]
        %v327 = vld [vmem:[%s238 + $0x50] sm:$0xff]
        %v328 = vld [vmem:[%s238 + $0x58] sm:$0xff]
        %v329 = vld [vmem:[%s238 + $0x60] sm:$0xff]
        %v330 = vld [vmem:[%s238 + $0x68] sm:$0xff]
        %v331 = vld [vmem:[%s238 + $0x70] sm:$0xff]
        %v332 = vld [vmem:[%s238 + $0x78] sm:$0xff]
        %v333 = vld [vmem:[%s238 + $0x80] sm:$0xff]
        %v334 = vld [vmem:[%s238 + $0x88] sm:$0xff]
        %v335 = vld [vmem:[%s238 + $0x90] sm:$0xff]
        %v336 = vld [vmem:[%s238 + $0x98] sm:$0xff]
        %v337 = vld [vmem:[%s238 + $0xa0] sm:$0xff]
        %v338 = vld [vmem:[%s238 + $0xa8] sm:$0xff]
        %v339 = vld [vmem:[%s238 + $0xb0] sm:$0xff]
        %v340 = vld [vmem:[%s238 + $0xb8] sm:$0xff]
        %v341 = vld [vmem:[%s238 + $0xc0] sm:$0xff]
        %v342 = vld [vmem:[%s238 + $0xc8] sm:$0xff]
        %v343 = vld [vmem:[%s238 + $0xd0] sm:$0xff]
        %v344 = vld [vmem:[%s238 + $0xd8] sm:$0xff]
        %v345 = vld [vmem:[%s238 + $0xe0] sm:$0xff]
        %v346 = vld [vmem:[%s238 + $0xe8] sm:$0xff]
        %v347 = vld [vmem:[%s238 + $0xf0] sm:$0xff]
        %v348 = vld [vmem:[%s238 + $0xf8] sm:$0xff]
        %v349 = vpack.c.bf16 %v318, %v317
        %v350 = vpack.c.bf16 %v320, %v319
        %v351 = vpack.c.bf16 %v322, %v321
        %v352 = vpack.c.bf16 %v324, %v323
        %v353 = vpack.c.bf16 %v326, %v325
        %v354 = vpack.c.bf16 %v328, %v327
        %v355 = vpack.c.bf16 %v330, %v329
        %v356 = vpack.c.bf16 %v332, %v331
        %v357 = vpack.c.bf16 %v334, %v333
        %v358 = vpack.c.bf16 %v336, %v335
        %v359 = vpack.c.bf16 %v338, %v337
        %v360 = vpack.c.bf16 %v340, %v339
        %v361 = vpack.c.bf16 %v342, %v341
        %v362 = vpack.c.bf16 %v344, %v343
        %v363 = vpack.c.bf16 %v346, %v345
        %v364 = vpack.c.bf16 %v348, %v347
        %v381 = vunpack.c.l.b16 %v349
        %v382 = vunpack.c.h.b16 %v349
        %v383 = vunpack.c.l.b16 %v350
        %v384 = vunpack.c.h.b16 %v350
        %v385 = vunpack.c.l.b16 %v351
        %v386 = vunpack.c.h.b16 %v351
        %v387 = vunpack.c.l.b16 %v352
        %v388 = vunpack.c.h.b16 %v352
        %v389 = vunpack.c.l.b16 %v353
        %v390 = vunpack.c.h.b16 %v353
        %v391 = vunpack.c.l.b16 %v354
        %v392 = vunpack.c.h.b16 %v354
        %v393 = vunpack.c.l.b16 %v355
        %v394 = vunpack.c.h.b16 %v355
        %v395 = vunpack.c.l.b16 %v356
        %v396 = vunpack.c.h.b16 %v356
        %v397 = vunpack.c.l.b16 %v357
        %v398 = vunpack.c.h.b16 %v357
        %v399 = vunpack.c.l.b16 %v358
        %v400 = vunpack.c.h.b16 %v358
        %v401 = vunpack.c.l.b16 %v359
        %v402 = vunpack.c.h.b16 %v359
        %v403 = vunpack.c.l.b16 %v360
        %v404 = vunpack.c.h.b16 %v360
        %v405 = vunpack.c.l.b16 %v361
        %v406 = vunpack.c.h.b16 %v361
        %v407 = vunpack.c.l.b16 %v362
        %v408 = vunpack.c.h.b16 %v362
        %v409 = vunpack.c.l.b16 %v363
        %v410 = vunpack.c.h.b16 %v363
        %v411 = vunpack.c.l.b16 %v364
        %v412 = vunpack.c.h.b16 %v364
        %v413 = vpack.c.b16 %v381, %v381
        %v414 = vpack.c.b16 %v382, %v382
        %v415 = vpack.c.b16 %v383, %v383
        %v416 = vpack.c.b16 %v384, %v384
        %v417 = vpack.c.b16 %v385, %v385
        %v418 = vpack.c.b16 %v386, %v386
        %v419 = vpack.c.b16 %v387, %v387
        %v420 = vpack.c.b16 %v388, %v388
        %v421 = vpack.c.b16 %v389, %v389
        %v422 = vpack.c.b16 %v390, %v390
        %v423 = vpack.c.b16 %v391, %v391
        %v424 = vpack.c.b16 %v392, %v392
        %v425 = vpack.c.b16 %v393, %v393
        %v426 = vpack.c.b16 %v394, %v394
        %v427 = vpack.c.b16 %v395, %v395
        %v428 = vpack.c.b16 %v396, %v396
        %v429 = vpack.c.b16 %v397, %v397
        %v430 = vpack.c.b16 %v398, %v398
        %v431 = vpack.c.b16 %v399, %v399
        %v432 = vpack.c.b16 %v400, %v400
        %v433 = vpack.c.b16 %v401, %v401
        %v434 = vpack.c.b16 %v402, %v402
        %v435 = vpack.c.b16 %v403, %v403
        %v436 = vpack.c.b16 %v404, %v404
        %v437 = vpack.c.b16 %v405, %v405
        %v438 = vpack.c.b16 %v406, %v406
        %v439 = vpack.c.b16 %v407, %v407
        %v440 = vpack.c.b16 %v408, %v408
        %v441 = vpack.c.b16 %v409, %v409
        %v442 = vpack.c.b16 %v410, %v410
        %v443 = vpack.c.b16 %v411, %v411
        %v444 = vpack.c.b16 %v412, %v412
        %vm445 = vsmask.f32 256
        %vm446 = vsmask.f32 4368
        %vm447 = vmor %vm445, %vm446
        %v449 = vshrl.u32 %v413, 16
        %v451 = vrot.slane %v449, 7
        %v452 = vshll.u32 %v413, 16
        %v454 = vor.u32 %v451, %v452
        %v455 = vrot.slane %v451, 4
        %v457 = vshrl.u32 %v414, 16
        %v459 = vrot.slane %v457, 7
        %v460 = vshll.u32 %v414, 16
        %v462 = vor.u32 %v459, %v460
        %v463 = vsel %vm447, %v455, %v462
        %v464 = vrot.slane %v459, 4
        %v466 = vshrl.u32 %v415, 16
        %v468 = vrot.slane %v466, 7
        %v469 = vshll.u32 %v415, 16
        %v471 = vor.u32 %v468, %v469
        %v472 = vrot.slane %v468, 4
        %v474 = vshrl.u32 %v416, 16
        %v476 = vrot.slane %v474, 7
        %v477 = vshll.u32 %v416, 16
        %v479 = vor.u32 %v476, %v477
        %v480 = vsel %vm447, %v472, %v479
        %v481 = vrot.slane %v476, 4
        %v483 = vshrl.u32 %v417, 16
        %v485 = vrot.slane %v483, 7
        %v486 = vshll.u32 %v417, 16
        %v488 = vor.u32 %v485, %v486
        %v489 = vrot.slane %v485, 4
        %v491 = vshrl.u32 %v418, 16
        %v493 = vrot.slane %v491, 7
        %v494 = vshll.u32 %v418, 16
        %v496 = vor.u32 %v493, %v494
        %v497 = vsel %vm447, %v489, %v496
        %v498 = vrot.slane %v493, 4
        %v500 = vshrl.u32 %v419, 16
        %v502 = vrot.slane %v500, 7
        %v503 = vshll.u32 %v419, 16
        %v505 = vor.u32 %v502, %v503
        %v506 = vrot.slane %v502, 4
        %v508 = vshrl.u32 %v420, 16
        %v510 = vrot.slane %v508, 7
        %v511 = vshll.u32 %v420, 16
        %v513 = vor.u32 %v510, %v511
        %v514 = vsel %vm447, %v506, %v513
        %v515 = vrot.slane %v510, 4
        %v517 = vshrl.u32 %v421, 16
        %v519 = vrot.slane %v517, 7
        %v520 = vshll.u32 %v421, 16
        %v522 = vor.u32 %v519, %v520
        %v523 = vrot.slane %v519, 4
        %v525 = vshrl.u32 %v422, 16
        %v527 = vrot.slane %v525, 7
        %v528 = vshll.u32 %v422, 16
        %v530 = vor.u32 %v527, %v528
        %v531 = vsel %vm447, %v523, %v530
        %v532 = vrot.slane %v527, 4
        %v534 = vshrl.u32 %v423, 16
        %v536 = vrot.slane %v534, 7
        %v537 = vshll.u32 %v423, 16
        %v539 = vor.u32 %v536, %v537
        %v540 = vrot.slane %v536, 4
        %v542 = vshrl.u32 %v424, 16
        %v544 = vrot.slane %v542, 7
        %v545 = vshll.u32 %v424, 16
        %v547 = vor.u32 %v544, %v545
        %v548 = vsel %vm447, %v540, %v547
        %v549 = vrot.slane %v544, 4
        %v551 = vshrl.u32 %v425, 16
        %v553 = vrot.slane %v551, 7
        %v554 = vshll.u32 %v425, 16
        %v556 = vor.u32 %v553, %v554
        %v557 = vrot.slane %v553, 4
        %v559 = vshrl.u32 %v426, 16
        %v561 = vrot.slane %v559, 7
        %v562 = vshll.u32 %v426, 16
        %v564 = vor.u32 %v561, %v562
        %v565 = vsel %vm447, %v557, %v564
        %v566 = vrot.slane %v561, 4
        %v568 = vshrl.u32 %v427, 16
        %v570 = vrot.slane %v568, 7
        %v571 = vshll.u32 %v427, 16
        %v573 = vor.u32 %v570, %v571
        %v574 = vrot.slane %v570, 4
        %v576 = vshrl.u32 %v428, 16
        %v578 = vrot.slane %v576, 7
        %v579 = vshll.u32 %v428, 16
        %v581 = vor.u32 %v578, %v579
        %v582 = vsel %vm447, %v574, %v581
        %v583 = vrot.slane %v578, 4
        %v585 = vshrl.u32 %v429, 16
        %v587 = vrot.slane %v585, 7
        %v588 = vshll.u32 %v429, 16
        %v590 = vor.u32 %v587, %v588
        %v591 = vrot.slane %v587, 4
        %v593 = vshrl.u32 %v430, 16
        %v595 = vrot.slane %v593, 7
        %v596 = vshll.u32 %v430, 16
        %v598 = vor.u32 %v595, %v596
        %v599 = vsel %vm447, %v591, %v598
        %v600 = vrot.slane %v595, 4
        %v602 = vshrl.u32 %v431, 16
        %v604 = vrot.slane %v602, 7
        %v605 = vshll.u32 %v431, 16
        %v607 = vor.u32 %v604, %v605
        %v608 = vrot.slane %v604, 4
        %v610 = vshrl.u32 %v432, 16
        %v612 = vrot.slane %v610, 7
        %v613 = vshll.u32 %v432, 16
        %v615 = vor.u32 %v612, %v613
        %v616 = vsel %vm447, %v608, %v615
        %v617 = vrot.slane %v612, 4
        %v619 = vshrl.u32 %v433, 16
        %v621 = vrot.slane %v619, 7
        %v622 = vshll.u32 %v433, 16
        %v624 = vor.u32 %v621, %v622
        %v625 = vrot.slane %v621, 4
        %v627 = vshrl.u32 %v434, 16
        %v629 = vrot.slane %v627, 7
        %v630 = vshll.u32 %v434, 16
        %v632 = vor.u32 %v629, %v630
        %v633 = vsel %vm447, %v625, %v632
        %v634 = vrot.slane %v629, 4
        %v636 = vshrl.u32 %v435, 16
        %v638 = vrot.slane %v636, 7
        %v639 = vshll.u32 %v435, 16
        %v641 = vor.u32 %v638, %v639
        %v642 = vrot.slane %v638, 4
        %v644 = vshrl.u32 %v436, 16
        %v646 = vrot.slane %v644, 7
        %v647 = vshll.u32 %v436, 16
        %v649 = vor.u32 %v646, %v647
        %v650 = vsel %vm447, %v642, %v649
        %v651 = vrot.slane %v646, 4
        %v653 = vshrl.u32 %v437, 16
        %v655 = vrot.slane %v653, 7
        %v656 = vshll.u32 %v437, 16
        %v658 = vor.u32 %v655, %v656
        %v659 = vrot.slane %v655, 4
        %v661 = vshrl.u32 %v438, 16
        %v663 = vrot.slane %v661, 7
        %v664 = vshll.u32 %v438, 16
        %v666 = vor.u32 %v663, %v664
        %v667 = vsel %vm447, %v659, %v666
        %v668 = vrot.slane %v663, 4
        %v670 = vshrl.u32 %v439, 16
        %v672 = vrot.slane %v670, 7
        %v673 = vshll.u32 %v439, 16
        %v675 = vor.u32 %v672, %v673
        %v676 = vrot.slane %v672, 4
        %v678 = vshrl.u32 %v440, 16
        %v680 = vrot.slane %v678, 7
        %v681 = vshll.u32 %v440, 16
        %v683 = vor.u32 %v680, %v681
        %v684 = vsel %vm447, %v676, %v683
        %v685 = vrot.slane %v680, 4
        %v687 = vshrl.u32 %v441, 16
        %v689 = vrot.slane %v687, 7
        %v690 = vshll.u32 %v441, 16
        %v692 = vor.u32 %v689, %v690
        %v693 = vrot.slane %v689, 4
        %v695 = vshrl.u32 %v442, 16
        %v697 = vrot.slane %v695, 7
        %v698 = vshll.u32 %v442, 16
        %v700 = vor.u32 %v697, %v698
        %v701 = vsel %vm447, %v693, %v700
        %v702 = vrot.slane %v697, 4
        %v704 = vshrl.u32 %v443, 16
        %v706 = vrot.slane %v704, 7
        %v707 = vshll.u32 %v443, 16
        %v709 = vor.u32 %v706, %v707
        %v710 = vrot.slane %v706, 4
        %v712 = vshrl.u32 %v444, 16
        %v714 = vrot.slane %v712, 7
        %v715 = vshll.u32 %v444, 16
        %v717 = vor.u32 %v714, %v715
        %v718 = vsel %vm447, %v710, %v717
        %v719 = vrot.slane %v714, 4
        %s768 = scalar_lea.vmem [#allocation2], 24
        %vm769 = vcmask 27648
        %vm770 = vsmask.f32 7938
        %vm771 = vmand %vm769, %vm770
        %v772 = vld [vmem:[%s768] sm:$0xf]
        %v773 = vsel %vm771, %v454, %v772
        %774 = vst [vmem:[%s768] sm:$0xf] %v773
        %775 = vst.msk [vmem:[%s768 + $0x4] sm:$0xf] %vm255, %v463
        %vm776 = vcmask 24576
        %vm777 = vmand %vm776, %vm445
        %v778 = vld [vmem:[%s768 + $0x8] sm:$0x1]
        %v779 = vsel %vm777, %v464, %v778
        %780 = vst [vmem:[%s768 + $0x8] sm:$0x1] %v779
        %v781 = vld [vmem:[%s768 + $0xc] sm:$0xf]
        %v782 = vsel %vm771, %v471, %v781
        %783 = vst [vmem:[%s768 + $0xc] sm:$0xf] %v782
        %784 = vst.msk [vmem:[%s768 + $0x10] sm:$0xf] %vm255, %v480
        %v785 = vld [vmem:[%s768 + $0x14] sm:$0x1]
        %v786 = vsel %vm777, %v481, %v785
        %787 = vst [vmem:[%s768 + $0x14] sm:$0x1] %v786
        %v788 = vld [vmem:[%s768 + $0x18] sm:$0xf]
        %v789 = vsel %vm771, %v488, %v788
        %790 = vst [vmem:[%s768 + $0x18] sm:$0xf] %v789
        %791 = vst.msk [vmem:[%s768 + $0x1c] sm:$0xf] %vm255, %v497
        %v792 = vld [vmem:[%s768 + $0x20] sm:$0x1]
        %v793 = vsel %vm777, %v498, %v792
        %794 = vst [vmem:[%s768 + $0x20] sm:$0x1] %v793
        %v795 = vld [vmem:[%s768 + $0x24] sm:$0xf]
        %v796 = vsel %vm771, %v505, %v795
        %797 = vst [vmem:[%s768 + $0x24] sm:$0xf] %v796
        %798 = vst.msk [vmem:[%s768 + $0x28] sm:$0xf] %vm255, %v514
        %v799 = vld [vmem:[%s768 + $0x2c] sm:$0x1]
        %v800 = vsel %vm777, %v515, %v799
        %801 = vst [vmem:[%s768 + $0x2c] sm:$0x1] %v800
        %v802 = vld [vmem:[%s768 + $0x30] sm:$0xf]
        %v803 = vsel %vm771, %v522, %v802
        %804 = vst [vmem:[%s768 + $0x30] sm:$0xf] %v803
        %805 = vst.msk [vmem:[%s768 + $0x34] sm:$0xf] %vm255, %v531
        %v806 = vld [vmem:[%s768 + $0x38] sm:$0x1]
        %v807 = vsel %vm777, %v532, %v806
        %808 = vst [vmem:[%s768 + $0x38] sm:$0x1] %v807
        %v809 = vld [vmem:[%s768 + $0x3c] sm:$0xf]
        %v810 = vsel %vm771, %v539, %v809
        %811 = vst [vmem:[%s768 + $0x3c] sm:$0xf] %v810
        %812 = vst.msk [vmem:[%s768 + $0x40] sm:$0xf] %vm255, %v548
        %v813 = vld [vmem:[%s768 + $0x44] sm:$0x1]
        %v814 = vsel %vm777, %v549, %v813
        %815 = vst [vmem:[%s768 + $0x44] sm:$0x1] %v814
        %v816 = vld [vmem:[%s768 + $0x48] sm:$0xf]
        %v817 = vsel %vm771, %v556, %v816
        %818 = vst [vmem:[%s768 + $0x48] sm:$0xf] %v817
        %819 = vst.msk [vmem:[%s768 + $0x4c] sm:$0xf] %vm255, %v565
        %v820 = vld [vmem:[%s768 + $0x50] sm:$0x1]
        %v821 = vsel %vm777, %v566, %v820
        %822 = vst [vmem:[%s768 + $0x50] sm:$0x1] %v821
        %v823 = vld [vmem:[%s768 + $0x54] sm:$0xf]
        %v824 = vsel %vm771, %v573, %v823
        %825 = vst [vmem:[%s768 + $0x54] sm:$0xf] %v824
        %826 = vst.msk [vmem:[%s768 + $0x58] sm:$0xf] %vm255, %v582
        %v827 = vld [vmem:[%s768 + $0x5c] sm:$0x1]
        %v828 = vsel %vm777, %v583, %v827
        %829 = vst [vmem:[%s768 + $0x5c] sm:$0x1] %v828
        %v830 = vld [vmem:[%s768 + $0x60] sm:$0xf]
        %v831 = vsel %vm771, %v590, %v830
        %832 = vst [vmem:[%s768 + $0x60] sm:$0xf] %v831
        %833 = vst.msk [vmem:[%s768 + $0x64] sm:$0xf] %vm255, %v599
        %v834 = vld [vmem:[%s768 + $0x68] sm:$0x1]
        %v835 = vsel %vm777, %v600, %v834
        %836 = vst [vmem:[%s768 + $0x68] sm:$0x1] %v835
        %v837 = vld [vmem:[%s768 + $0x6c] sm:$0xf]
        %v838 = vsel %vm771, %v607, %v837
        %839 = vst [vmem:[%s768 + $0x6c] sm:$0xf] %v838
        %840 = vst.msk [vmem:[%s768 + $0x70] sm:$0xf] %vm255, %v616
        %v841 = vld [vmem:[%s768 + $0x74] sm:$0x1]
        %v842 = vsel %vm777, %v617, %v841
        %843 = vst [vmem:[%s768 + $0x74] sm:$0x1] %v842
        %v844 = vld [vmem:[%s768 + $0x78] sm:$0xf]
        %v845 = vsel %vm771, %v624, %v844
        %846 = vst [vmem:[%s768 + $0x78] sm:$0xf] %v845
        %847 = vst.msk [vmem:[%s768 + $0x7c] sm:$0xf] %vm255, %v633
        %v848 = vld [vmem:[%s768 + $0x80] sm:$0x1]
        %v849 = vsel %vm777, %v634, %v848
        %850 = vst [vmem:[%s768 + $0x80] sm:$0x1] %v849
        %v851 = vld [vmem:[%s768 + $0x84] sm:$0xf]
        %v852 = vsel %vm771, %v641, %v851
        %853 = vst [vmem:[%s768 + $0x84] sm:$0xf] %v852
        %854 = vst.msk [vmem:[%s768 + $0x88] sm:$0xf] %vm255, %v650
        %v855 = vld [vmem:[%s768 + $0x8c] sm:$0x1]
        %v856 = vsel %vm777, %v651, %v855
        %857 = vst [vmem:[%s768 + $0x8c] sm:$0x1] %v856
        %v858 = vld [vmem:[%s768 + $0x90] sm:$0xf]
        %v859 = vsel %vm771, %v658, %v858
        %860 = vst [vmem:[%s768 + $0x90] sm:$0xf] %v859
        %861 = vst.msk [vmem:[%s768 + $0x94] sm:$0xf] %vm255, %v667
        %v862 = vld [vmem:[%s768 + $0x98] sm:$0x1]
        %v863 = vsel %vm777, %v668, %v862
        %864 = vst [vmem:[%s768 + $0x98] sm:$0x1] %v863
        %v865 = vld [vmem:[%s768 + $0x9c] sm:$0xf]
        %v866 = vsel %vm771, %v675, %v865
        %867 = vst [vmem:[%s768 + $0x9c] sm:$0xf] %v866
        %868 = vst.msk [vmem:[%s768 + $0xa0] sm:$0xf] %vm255, %v684
        %v869 = vld [vmem:[%s768 + $0xa4] sm:$0x1]
        %v870 = vsel %vm777, %v685, %v869
        %871 = vst [vmem:[%s768 + $0xa4] sm:$0x1] %v870
        %v872 = vld [vmem:[%s768 + $0xa8] sm:$0xf]
        %v873 = vsel %vm771, %v692, %v872
        %874 = vst [vmem:[%s768 + $0xa8] sm:$0xf] %v873
        %875 = vst.msk [vmem:[%s768 + $0xac] sm:$0xf] %vm255, %v701
        %v876 = vld [vmem:[%s768 + $0xb0] sm:$0x1]
        %v877 = vsel %vm777, %v702, %v876
        %878 = vst [vmem:[%s768 + $0xb0] sm:$0x1] %v877
        %v879 = vld [vmem:[%s768 + $0xb4] sm:$0xf]
        %v880 = vsel %vm771, %v709, %v879
        %881 = vst [vmem:[%s768 + $0xb4] sm:$0xf] %v880
        %882 = vst.msk [vmem:[%s768 + $0xb8] sm:$0xf] %vm255, %v718
        %v883 = vld [vmem:[%s768 + $0xbc] sm:$0x1]
        %v884 = vsel %vm777, %v719, %v883
        %885 = vst [vmem:[%s768 + $0xbc] sm:$0x1] %v884
      $region44: #{basic_block_forward.1} parent=39 // pred_fallthru
        _
      %s886 = smul.u32 %s21, 8
      %s887 = smul.u32 %s886, 3
      %s888 = smul.addr %s887, 4
      %s889 = scalar_lea.vmem [#allocation2], %s888
      %v890 = vld [vmem:[%s889] sm:$0xf]
      %v891 = vld [vmem:[%s889 + $0x4] sm:$0xf]
      %v892 = vld [vmem:[%s889 + $0xc] sm:$0xf]
      %v893 = vld [vmem:[%s889 + $0x10] sm:$0xf]
      %v894 = vld [vmem:[%s889 + $0x18] sm:$0xf]
      %v895 = vld [vmem:[%s889 + $0x1c] sm:$0xf]
      %v896 = vld [vmem:[%s889 + $0x24] sm:$0xf]
      %v897 = vld [vmem:[%s889 + $0x28] sm:$0xf]
      %v898 = vld [vmem:[%s889 + $0x30] sm:$0xf]
      %v899 = vld [vmem:[%s889 + $0x34] sm:$0xf]
      %v900 = vld [vmem:[%s889 + $0x3c] sm:$0xf]
      %v901 = vld [vmem:[%s889 + $0x40] sm:$0xf]
      %v902 = vld [vmem:[%s889 + $0x48] sm:$0xf]
      %v903 = vld [vmem:[%s889 + $0x4c] sm:$0xf]
      %v904 = vld [vmem:[%s889 + $0x54] sm:$0xf]
      %v905 = vld [vmem:[%s889 + $0x58] sm:$0xf]
      %v906 = vld [vmem:[%s889 + $0x60] sm:$0xf]
      %v907 = vld [vmem:[%s889 + $0x64] sm:$0xf]
      %v908 = vld [vmem:[%s889 + $0x6c] sm:$0xf]
      %v909 = vld [vmem:[%s889 + $0x70] sm:$0xf]
      %v910 = vld [vmem:[%s889 + $0x78] sm:$0xf]
      %v911 = vld [vmem:[%s889 + $0x7c] sm:$0xf]
      %v912 = vld [vmem:[%s889 + $0x84] sm:$0xf]
      %v913 = vld [vmem:[%s889 + $0x88] sm:$0xf]
      %v914 = vld [vmem:[%s1] sm:$0x3]
      %s915 = scalar_lea.vmem %s1, 6
      %v916 = vld [vmem:[%s915] sm:$0x3]
      %v937 = vunpack.c.l.b16 %v892
      %v938 = vunpack.c.l.b16 %v893
      %v939 = vunpack.c.l.b16 %v894
      %v940 = vunpack.c.l.b16 %v895
      %v941 = vunpack.c.l.b16 %v896
      %v942 = vunpack.c.l.b16 %v897
      %v943 = vunpack.c.l.b16 %v898
      %v944 = vunpack.c.l.b16 %v899
      %v945 = vunpack.c.l.b16 %v900
      %v946 = vunpack.c.l.b16 %v901
      %v947 = vunpack.c.l.b16 %v902
      %v948 = vunpack.c.l.b16 %v903
      %v949 = vunpack.c.l.b16 %v904
      %v950 = vunpack.c.l.b16 %v905
      %v951 = vunpack.c.l.b16 %v906
      %v952 = vunpack.c.l.b16 %v907
      %v953 = vunpack.c.l.b16 %v908
      %v954 = vunpack.c.l.b16 %v909
      %v955 = vunpack.c.l.b16 %v910
      %v956 = vunpack.c.l.b16 %v911
      %v957 = vpack.c.b16 %v938, %v937
      %v958 = vpack.c.b16 %v940, %v939
      %v959 = vpack.c.b16 %v942, %v941
      %v960 = vpack.c.b16 %v944, %v943
      %v961 = vpack.c.b16 %v946, %v945
      %v962 = vpack.c.b16 %v948, %v947
      %v963 = vpack.c.b16 %v950, %v949
      %v964 = vpack.c.b16 %v952, %v951
      %v965 = vpack.c.b16 %v954, %v953
      %v966 = vpack.c.b16 %v956, %v955
      %vm967 = vcmask 31744
      %v969 = vsel %vm967, %v957, 0
      %v972 = vsel %vm967, %v958, 0
      %v975 = vsel %vm967, %v959, 0
      %v978 = vsel %vm967, %v960, 0
      %v981 = vsel %vm967, %v961, 0
      %v984 = vsel %vm967, %v962, 0
      %v987 = vsel %vm967, %v963, 0
      %v990 = vsel %vm967, %v964, 0
      %v993 = vsel %vm967, %v965, 0
      %v996 = vsel %vm967, %v966, 0
      %vm998 = vcmask 1041408
      %v1000 = vsel %vm998, %v916, 0
      %1002 = vmatprep.subr.bf16.mxu0 0
      %1003 = vmatpush1.bf16.msra.mxu0 %v1000
      %1004 = vmatprep.subr.bf16.mxu0 0
      %1005 = vmatpush1.bf16.msra.mxu0 0
      %1006 = vmatprep.subr.bf16.mxu0 0
      %1007 = vmatpush1.bf16.msra.mxu0 0
      %1008 = vmatprep.subr.bf16.mxu0 0
      %1009 = vmatpush1.bf16.msra.mxu0 0
      %1010 = vmatprep.subr.bf16.mxu0 0
      %1011 = vmatpush1.bf16.msra.mxu0 0
      %1012 = vmatprep.subr.bf16.mxu0 0
      %1013 = vmatpush1.bf16.msra.mxu0 0
      %1014 = vmatprep.subr.bf16.mxu0 0
      %1015 = vmatpush1.bf16.msra.mxu0 0
      %1016 = vmatprep.subr.bf16.mxu0 0
      %1017 = vmatpush1.bf16.msra.mxu0 0
      %1018 = vmatprep.subr.bf16.mxu0 0
      %1019 = vmatpush1.bf16.msra.mxu0 0
      %1020 = vmatprep.subr.bf16.mxu0 0
      %1021 = vmatpush1.bf16.msra.mxu0 0
      %1022 = vmatprep.subr.bf16.mxu0 0
      %1023 = vmatpush1.bf16.msra.mxu0 0
      %1024 = vmatprep.subr.bf16.mxu0 0
      %1025 = vmatpush1.bf16.msra.mxu0 0
      %1026 = vmatprep.subr.bf16.mxu0 0
      %1027 = vmatpush1.bf16.msra.mxu0 0
      %1028 = vmatprep.subr.bf16.mxu0 0
      %1029 = vmatpush1.bf16.msra.mxu0 0
      %1030 = vmatprep.subr.bf16.mxu0 0
      %1031 = vmatpush1.bf16.msra.mxu0 0
      %1032 = vmatprep.subr.bf16.mxu0 0
      %1033 = vmatpush1.bf16.msra.mxu0 0
      %1034 = vmatprep.mubr.bf16.mxu0 0
      %1035 = vmatmul.mubr.bf16.gmra.mrb[0].mxu0 %v969
      %v1036 = vpop.f32.mrb[0].mxu0
      %v1037 = vadd.f32 0.0, %v1036
      %v1038 = vpop.f32.mrb[0].mxu0
      %v1039 = vpop.f32.mrb[0].mxu0
      %v1040 = vadd.f32 0.0, %v1039
      %v1041 = vpop.f32.mrb[0].mxu0
      %1042 = vmatprep.mubr.bf16.mxu0 0
      %1043 = vmatmul.mubr.bf16.gmra.mrb[0].mxu0 %v972
      %v1044 = vpop.f32.mrb[0].mxu0
      %v1045 = vadd.f32 0.0, %v1044
      %v1046 = vpop.f32.mrb[0].mxu0
      %v1047 = vpop.f32.mrb[0].mxu0
      %v1048 = vadd.f32 0.0, %v1047
      %v1049 = vpop.f32.mrb[0].mxu0
      %1050 = vmatprep.mubr.bf16.mxu0 0
      %1051 = vmatmul.mubr.bf16.gmra.mrb[0].mxu0 %v975
      %v1052 = vpop.f32.mrb[0].mxu0
      %v1053 = vadd.f32 0.0, %v1052
      %v1054 = vpop.f32.mrb[0].mxu0
      %v1055 = vpop.f32.mrb[0].mxu0
      %v1056 = vadd.f32 0.0, %v1055
      %v1057 = vpop.f32.mrb[0].mxu0
      %1058 = vmatprep.mubr.bf16.mxu0 0
      %1059 = vmatmul.mubr.bf16.gmra.mrb[0].mxu0 %v978
      %v1060 = vpop.f32.mrb[0].mxu0
      %v1061 = vadd.f32 0.0, %v1060
      %v1062 = vpop.f32.mrb[0].mxu0
      %v1063 = vpop.f32.mrb[0].mxu0
      %v1064 = vadd.f32 0.0, %v1063
      %v1065 = vpop.f32.mrb[0].mxu0
      %1066 = vmatprep.mubr.bf16.mxu0 0
      %1067 = vmatmul.mubr.bf16.gmra.mrb[0].mxu0 %v981
      %v1068 = vpop.f32.mrb[0].mxu0
      %v1069 = vadd.f32 0.0, %v1068
      %v1070 = vpop.f32.mrb[0].mxu0
      %v1071 = vpop.f32.mrb[0].mxu0
      %v1072 = vadd.f32 0.0, %v1071
      %v1073 = vpop.f32.mrb[0].mxu0
      %1074 = vmatprep.mubr.bf16.mxu0 0
      %1075 = vmatmul.mubr.bf16.gmra.mrb[0].mxu0 %v984
      %v1076 = vpop.f32.mrb[0].mxu0
      %v1077 = vadd.f32 0.0, %v1076
      %v1078 = vpop.f32.mrb[0].mxu0
      %v1079 = vpop.f32.mrb[0].mxu0
      %v1080 = vadd.f32 0.0, %v1079
      %v1081 = vpop.f32.mrb[0].mxu0
      %1082 = vmatprep.mubr.bf16.mxu0 0
      %1083 = vmatmul.mubr.bf16.gmra.mrb[0].mxu0 %v987
      %v1084 = vpop.f32.mrb[0].mxu0
      %v1085 = vadd.f32 0.0, %v1084
      %v1086 = vpop.f32.mrb[0].mxu0
      %v1087 = vpop.f32.mrb[0].mxu0
      %v1088 = vadd.f32 0.0, %v1087
      %v1089 = vpop.f32.mrb[0].mxu0
      %1090 = vmatprep.mubr.bf16.mxu0 0
      %1091 = vmatmul.mubr.bf16.gmra.mrb[0].mxu0 %v990
      %v1092 = vpop.f32.mrb[0].mxu0
      %v1093 = vadd.f32 0.0, %v1092
      %v1094 = vpop.f32.mrb[0].mxu0
      %v1095 = vpop.f32.mrb[0].mxu0
      %v1096 = vadd.f32 0.0, %v1095
      %v1097 = vpop.f32.mrb[0].mxu0
      %1098 = vmatprep.mubr.bf16.mxu0 0
      %1099 = vmatmul.mubr.bf16.gmra.mrb[0].mxu0 %v993
      %v1100 = vpop.f32.mrb[0].mxu0
      %v1101 = vadd.f32 0.0, %v1100
      %v1102 = vpop.f32.mrb[0].mxu0
      %v1103 = vpop.f32.mrb[0].mxu0
      %v1104 = vadd.f32 0.0, %v1103
      %v1105 = vpop.f32.mrb[0].mxu0
      %1106 = vmatprep.mubr.bf16.mxu0 0
      %1107 = vmatmul.mubr.bf16.gmra.mrb[0].mxu0 %v996
      %v1108 = vpop.f32.mrb[0].mxu0
      %v1109 = vadd.f32 0.0, %v1108
      %v1110 = vpop.f32.mrb[0].mxu0
      %v1111 = vpop.f32.mrb[0].mxu0
      %v1112 = vadd.f32 0.0, %v1111
      %v1113 = vpop.f32.mrb[0].mxu0
      %1114 = vdwg.mxu0
      %v1117 = vunpack.c.l.b16 %v890
      %v1118 = vunpack.c.l.b16 %v891
      %v1119 = vpack.c.b16 %v1118, %v1117
      %v1121 = vsel %vm967, %v1119, 0
      %v1124 = vsel %vm998, %v914, 0
      %1126 = vmatprep.subr.bf16.mxu0 0
      %1127 = vmatpush1.bf16.msra.mxu0 %v1124
      %1128 = vmatprep.subr.bf16.mxu0 0
      %1129 = vmatpush1.bf16.msra.mxu0 0
      %1130 = vmatprep.subr.bf16.mxu0 0
      %1131 = vmatpush1.bf16.msra.mxu0 0
      %1132 = vmatprep.subr.bf16.mxu0 0
      %1133 = vmatpush1.bf16.msra.mxu0 0
      %1134 = vmatprep.subr.bf16.mxu0 0
      %1135 = vmatpush1.bf16.msra.mxu0 0
      %1136 = vmatprep.subr.bf16.mxu0 0
      %1137 = vmatpush1.bf16.msra.mxu0 0
      %1138 = vmatprep.subr.bf16.mxu0 0
      %1139 = vmatpush1.bf16.msra.mxu0 0
      %1140 = vmatprep.subr.bf16.mxu0 0
      %1141 = vmatpush1.bf16.msra.mxu0 0
      %1142 = vmatprep.subr.bf16.mxu0 0
      %1143 = vmatpush1.bf16.msra.mxu0 0
      %1144 = vmatprep.subr.bf16.mxu0 0
      %1145 = vmatpush1.bf16.msra.mxu0 0
      %1146 = vmatprep.subr.bf16.mxu0 0
      %1147 = vmatpush1.bf16.msra.mxu0 0
      %1148 = vmatprep.subr.bf16.mxu0 0
      %1149 = vmatpush1.bf16.msra.mxu0 0
      %1150 = vmatprep.subr.bf16.mxu0 0
      %1151 = vmatpush1.bf16.msra.mxu0 0
      %1152 = vmatprep.subr.bf16.mxu0 0
      %1153 = vmatpush1.bf16.msra.mxu0 0
      %1154 = vmatprep.subr.bf16.mxu0 0
      %1155 = vmatpush1.bf16.msra.mxu0 0
      %1156 = vmatprep.subr.bf16.mxu0 0
      %1157 = vmatpush1.bf16.msra.mxu0 0
      %1158 = vmatprep.mubr.bf16.mxu0 0
      %1159 = vmatmul.mubr.bf16.gmra.mrb[0].mxu0 %v1121
      %v1160 = vpop.f32.mrb[0].mxu0
      %v1161 = vadd.f32 %v1037, %v1160
      %v1162 = vpop.f32.mrb[0].mxu0
      %v1163 = vpop.f32.mrb[0].mxu0
      %v1164 = vadd.f32 %v1040, %v1163
      %v1165 = vpop.f32.mrb[0].mxu0
      %1166 = vmatprep.mubr.bf16.mxu0 0
      %1167 = vmatmul.mubr.bf16.gmra.mrb[0].mxu0 %v969
      %v1168 = vpop.f32.mrb[0].mxu0
      %v1169 = vadd.f32 %v1045, %v1168
      %v1170 = vpop.f32.mrb[0].mxu0
      %v1171 = vpop.f32.mrb[0].mxu0
      %v1172 = vadd.f32 %v1048, %v1171
      %v1173 = vpop.f32.mrb[0].mxu0
      %1174 = vmatprep.mubr.bf16.mxu0 0
      %1175 = vmatmul.mubr.bf16.gmra.mrb[0].mxu0 %v972
      %v1176 = vpop.f32.mrb[0].mxu0
      %v1177 = vadd.f32 %v1053, %v1176
      %v1178 = vpop.f32.mrb[0].mxu0
      %v1179 = vpop.f32.mrb[0].mxu0
      %v1180 = vadd.f32 %v1056, %v1179
      %v1181 = vpop.f32.mrb[0].mxu0
      %1182 = vmatprep.mubr.bf16.mxu0 0
      %1183 = vmatmul.mubr.bf16.gmra.mrb[0].mxu0 %v975
      %v1184 = vpop.f32.mrb[0].mxu0
      %v1185 = vadd.f32 %v1061, %v1184
      %v1186 = vpop.f32.mrb[0].mxu0
      %v1187 = vpop.f32.mrb[0].mxu0
      %v1188 = vadd.f32 %v1064, %v1187
      %v1189 = vpop.f32.mrb[0].mxu0
      %1190 = vmatprep.mubr.bf16.mxu0 0
      %1191 = vmatmul.mubr.bf16.gmra.mrb[0].mxu0 %v978
      %v1192 = vpop.f32.mrb[0].mxu0
      %v1193 = vadd.f32 %v1069, %v1192
      %v1194 = vpop.f32.mrb[0].mxu0
      %v1195 = vpop.f32.mrb[0].mxu0
      %v1196 = vadd.f32 %v1072, %v1195
      %v1197 = vpop.f32.mrb[0].mxu0
      %1198 = vmatprep.mubr.bf16.mxu0 0
      %1199 = vmatmul.mubr.bf16.gmra.mrb[0].mxu0 %v981
      %v1200 = vpop.f32.mrb[0].mxu0
      %v1201 = vadd.f32 %v1077, %v1200
      %v1202 = vpop.f32.mrb[0].mxu0
      %v1203 = vpop.f32.mrb[0].mxu0
      %v1204 = vadd.f32 %v1080, %v1203
      %v1205 = vpop.f32.mrb[0].mxu0
      %1206 = vmatprep.mubr.bf16.mxu0 0
      %1207 = vmatmul.mubr.bf16.gmra.mrb[0].mxu0 %v984
      %v1208 = vpop.f32.mrb[0].mxu0
      %v1209 = vadd.f32 %v1085, %v1208
      %v1210 = vpop.f32.mrb[0].mxu0
      %v1211 = vpop.f32.mrb[0].mxu0
      %v1212 = vadd.f32 %v1088, %v1211
      %v1213 = vpop.f32.mrb[0].mxu0
      %1214 = vmatprep.mubr.bf16.mxu0 0
      %1215 = vmatmul.mubr.bf16.gmra.mrb[0].mxu0 %v987
      %v1216 = vpop.f32.mrb[0].mxu0
      %v1217 = vadd.f32 %v1093, %v1216
      %v1218 = vpop.f32.mrb[0].mxu0
      %v1219 = vpop.f32.mrb[0].mxu0
      %v1220 = vadd.f32 %v1096, %v1219
      %v1221 = vpop.f32.mrb[0].mxu0
      %1222 = vmatprep.mubr.bf16.mxu0 0
      %1223 = vmatmul.mubr.bf16.gmra.mrb[0].mxu0 %v990
      %v1224 = vpop.f32.mrb[0].mxu0
      %v1225 = vadd.f32 %v1101, %v1224
      %v1226 = vpop.f32.mrb[0].mxu0
      %v1227 = vpop.f32.mrb[0].mxu0
      %v1228 = vadd.f32 %v1104, %v1227
      %v1229 = vpop.f32.mrb[0].mxu0
      %1230 = vmatprep.mubr.bf16.mxu0 0
      %1231 = vmatmul.mubr.bf16.gmra.mrb[0].mxu0 %v993
      %v1232 = vpop.f32.mrb[0].mxu0
      %v1233 = vadd.f32 %v1109, %v1232
      %v1234 = vpop.f32.mrb[0].mxu0
      %v1235 = vpop.f32.mrb[0].mxu0
      %v1236 = vadd.f32 %v1112, %v1235
      %v1237 = vpop.f32.mrb[0].mxu0
      %1238 = vdwg.mxu0
      %s1239 = scalar_lea.vmem %s1, 12
      %v1240 = vld [vmem:[%s1239] sm:$0x3]
      %v1243 = vunpack.c.l.b16 %v912
      %v1244 = vunpack.c.l.b16 %v913
      %v1245 = vpack.c.b16 %v1244, %v1243
      %v1247 = vsel %vm967, %v1245, 0
      %v1250 = vsel %vm998, %v1240, 0
      %1252 = vmatprep.subr.bf16.mxu0 0
      %1253 = vmatpush1.bf16.msra.mxu0 %v1250
      %1254 = vmatprep.subr.bf16.mxu0 0
      %1255 = vmatpush1.bf16.msra.mxu0 0
      %1256 = vmatprep.subr.bf16.mxu0 0
      %1257 = vmatpush1.bf16.msra.mxu0 0
      %1258 = vmatprep.subr.bf16.mxu0 0
      %1259 = vmatpush1.bf16.msra.mxu0 0
      %1260 = vmatprep.subr.bf16.mxu0 0
      %1261 = vmatpush1.bf16.msra.mxu0 0
      %1262 = vmatprep.subr.bf16.mxu0 0
      %1263 = vmatpush1.bf16.msra.mxu0 0
      %1264 = vmatprep.subr.bf16.mxu0 0
      %1265 = vmatpush1.bf16.msra.mxu0 0
      %1266 = vmatprep.subr.bf16.mxu0 0
      %1267 = vmatpush1.bf16.msra.mxu0 0
      %1268 = vmatprep.subr.bf16.mxu0 0
      %1269 = vmatpush1.bf16.msra.mxu0 0
      %1270 = vmatprep.subr.bf16.mxu0 0
      %1271 = vmatpush1.bf16.msra.mxu0 0
      %1272 = vmatprep.subr.bf16.mxu0 0
      %1273 = vmatpush1.bf16.msra.mxu0 0
      %1274 = vmatprep.subr.bf16.mxu0 0
      %1275 = vmatpush1.bf16.msra.mxu0 0
      %1276 = vmatprep.subr.bf16.mxu0 0
      %1277 = vmatpush1.bf16.msra.mxu0 0
      %1278 = vmatprep.subr.bf16.mxu0 0
      %1279 = vmatpush1.bf16.msra.mxu0 0
      %1280 = vmatprep.subr.bf16.mxu0 0
      %1281 = vmatpush1.bf16.msra.mxu0 0
      %1282 = vmatprep.subr.bf16.mxu0 0
      %1283 = vmatpush1.bf16.msra.mxu0 0
      %1284 = vmatprep.mubr.bf16.mxu0 0
      %1285 = vmatmul.mubr.bf16.gmra.mrb[0].mxu0 %v972
      %v1286 = vpop.f32.mrb[0].mxu0
      %v1287 = vadd.f32 0.0, %v1286
      %v1288 = vpop.f32.mrb[0].mxu0
      %v1289 = vpop.f32.mrb[0].mxu0
      %v1290 = vadd.f32 0.0, %v1289
      %v1291 = vpop.f32.mrb[0].mxu0
      %1292 = vmatprep.mubr.bf16.mxu0 0
      %1293 = vmatmul.mubr.bf16.gmra.mrb[0].mxu0 %v975
      %v1294 = vpop.f32.mrb[0].mxu0
      %v1295 = vadd.f32 0.0, %v1294
      %v1296 = vpop.f32.mrb[0].mxu0
      %v1297 = vpop.f32.mrb[0].mxu0
      %v1298 = vadd.f32 0.0, %v1297
      %v1299 = vpop.f32.mrb[0].mxu0
      %1300 = vmatprep.mubr.bf16.mxu0 0
      %1301 = vmatmul.mubr.bf16.gmra.mrb[0].mxu0 %v978
      %v1302 = vpop.f32.mrb[0].mxu0
      %v1303 = vadd.f32 0.0, %v1302
      %v1304 = vpop.f32.mrb[0].mxu0
      %v1305 = vpop.f32.mrb[0].mxu0
      %v1306 = vadd.f32 0.0, %v1305
      %v1307 = vpop.f32.mrb[0].mxu0
      %1308 = vmatprep.mubr.bf16.mxu0 0
      %1309 = vmatmul.mubr.bf16.gmra.mrb[0].mxu0 %v981
      %v1310 = vpop.f32.mrb[0].mxu0
      %v1311 = vadd.f32 0.0, %v1310
      %v1312 = vpop.f32.mrb[0].mxu0
      %v1313 = vpop.f32.mrb[0].mxu0
      %v1314 = vadd.f32 0.0, %v1313
      %v1315 = vpop.f32.mrb[0].mxu0
      %1316 = vmatprep.mubr.bf16.mxu0 0
      %1317 = vmatmul.mubr.bf16.gmra.mrb[0].mxu0 %v984
      %v1318 = vpop.f32.mrb[0].mxu0
      %v1319 = vadd.f32 0.0, %v1318
      %v1320 = vpop.f32.mrb[0].mxu0
      %v1321 = vpop.f32.mrb[0].mxu0
      %v1322 = vadd.f32 0.0, %v1321
      %v1323 = vpop.f32.mrb[0].mxu0
      %1324 = vmatprep.mubr.bf16.mxu0 0
      %1325 = vmatmul.mubr.bf16.gmra.mrb[0].mxu0 %v987
      %v1326 = vpop.f32.mrb[0].mxu0
      %v1327 = vadd.f32 0.0, %v1326
      %v1328 = vpop.f32.mrb[0].mxu0
      %v1329 = vpop.f32.mrb[0].mxu0
      %v1330 = vadd.f32 0.0, %v1329
      %v1331 = vpop.f32.mrb[0].mxu0
      %1332 = vmatprep.mubr.bf16.mxu0 0
      %1333 = vmatmul.mubr.bf16.gmra.mrb[0].mxu0 %v990
      %v1334 = vpop.f32.mrb[0].mxu0
      %v1335 = vadd.f32 0.0, %v1334
      %v1336 = vpop.f32.mrb[0].mxu0
      %v1337 = vpop.f32.mrb[0].mxu0
      %v1338 = vadd.f32 0.0, %v1337
      %v1339 = vpop.f32.mrb[0].mxu0
      %1340 = vmatprep.mubr.bf16.mxu0 0
      %1341 = vmatmul.mubr.bf16.gmra.mrb[0].mxu0 %v993
      %v1342 = vpop.f32.mrb[0].mxu0
      %v1343 = vadd.f32 0.0, %v1342
      %v1344 = vpop.f32.mrb[0].mxu0
      %v1345 = vpop.f32.mrb[0].mxu0
      %v1346 = vadd.f32 0.0, %v1345
      %v1347 = vpop.f32.mrb[0].mxu0
      %1348 = vmatprep.mubr.bf16.mxu0 0
      %1349 = vmatmul.mubr.bf16.gmra.mrb[0].mxu0 %v996
      %v1350 = vpop.f32.mrb[0].mxu0
      %v1351 = vadd.f32 0.0, %v1350
      %v1352 = vpop.f32.mrb[0].mxu0
      %v1353 = vpop.f32.mrb[0].mxu0
      %v1354 = vadd.f32 0.0, %v1353
      %v1355 = vpop.f32.mrb[0].mxu0
      %1356 = vmatprep.mubr.bf16.mxu0 0
      %1357 = vmatmul.mubr.bf16.gmra.mrb[0].mxu0 %v1247
      %v1358 = vpop.f32.mrb[0].mxu0
      %v1359 = vadd.f32 0.0, %v1358
      %v1360 = vpop.f32.mrb[0].mxu0
      %v1361 = vpop.f32.mrb[0].mxu0
      %v1362 = vadd.f32 0.0, %v1361
      %v1363 = vpop.f32.mrb[0].mxu0
      %1364 = vdwg.mxu0
      %v1365 = vadd.f32 %v1161, %v1287
      %v1366 = vadd.f32 %v1164, %v1290
      %v1367 = vadd.f32 %v1169, %v1295
      %v1368 = vadd.f32 %v1172, %v1298
      %v1369 = vadd.f32 %v1177, %v1303
      %v1370 = vadd.f32 %v1180, %v1306
      %v1371 = vadd.f32 %v1185, %v1311
      %v1372 = vadd.f32 %v1188, %v1314
      %v1373 = vadd.f32 %v1193, %v1319
      %v1374 = vadd.f32 %v1196, %v1322
      %v1375 = vadd.f32 %v1201, %v1327
      %v1376 = vadd.f32 %v1204, %v1330
      %v1377 = vadd.f32 %v1209, %v1335
      %v1378 = vadd.f32 %v1212, %v1338
      %v1379 = vadd.f32 %v1217, %v1343
      %v1380 = vadd.f32 %v1220, %v1346
      %v1381 = vadd.f32 %v1225, %v1351
      %v1382 = vadd.f32 %v1228, %v1354
      %v1383 = vadd.f32 %v1233, %v1359
      %v1384 = vadd.f32 %v1236, %v1362
      %v1385 = vld [vmem:[%s889] sm:$0xf]
      %v1386 = vld [vmem:[%s889 + $0x4] sm:$0xf]
      %v1387 = vld [vmem:[%s889 + $0x8] sm:$0x1]
      %v1388 = vld [vmem:[%s889 + $0xc] sm:$0xf]
      %v1389 = vld [vmem:[%s889 + $0x10] sm:$0xf]
      %v1390 = vld [vmem:[%s889 + $0x14] sm:$0x1]
      %v1391 = vld [vmem:[%s889 + $0x18] sm:$0xf]
      %v1392 = vld [vmem:[%s889 + $0x1c] sm:$0xf]
      %v1393 = vld [vmem:[%s889 + $0x20] sm:$0x1]
      %v1394 = vld [vmem:[%s889 + $0x24] sm:$0xf]
      %v1395 = vld [vmem:[%s889 + $0x28] sm:$0xf]
      %v1396 = vld [vmem:[%s889 + $0x2c] sm:$0x1]
      %v1397 = vld [vmem:[%s889 + $0x30] sm:$0xf]
      %v1398 = vld [vmem:[%s889 + $0x34] sm:$0xf]
      %v1399 = vld [vmem:[%s889 + $0x38] sm:$0x1]
      %v1400 = vld [vmem:[%s889 + $0x3c] sm:$0xf]
      %v1401 = vld [vmem:[%s889 + $0x40] sm:$0xf]
      %v1402 = vld [vmem:[%s889 + $0x44] sm:$0x1]
      %v1403 = vld [vmem:[%s889 + $0x48] sm:$0xf]
      %v1404 = vld [vmem:[%s889 + $0x4c] sm:$0xf]
      %v1405 = vld [vmem:[%s889 + $0x50] sm:$0x1]
      %v1406 = vld [vmem:[%s889 + $0x54] sm:$0xf]
      %v1407 = vld [vmem:[%s889 + $0x58] sm:$0xf]
      %v1408 = vld [vmem:[%s889 + $0x5c] sm:$0x1]
      %v1409 = vld [vmem:[%s889 + $0x60] sm:$0xf]
      %v1410 = vld [vmem:[%s889 + $0x64] sm:$0xf]
      %v1411 = vld [vmem:[%s889 + $0x68] sm:$0x1]
      %v1412 = vld [vmem:[%s889 + $0x6c] sm:$0xf]
      %v1413 = vld [vmem:[%s889 + $0x70] sm:$0xf]
      %v1414 = vld [vmem:[%s889 + $0x74] sm:$0x1]
      %v1415 = vld [vmem:[%s889 + $0x78] sm:$0xf]
      %v1416 = vld [vmem:[%s889 + $0x7c] sm:$0xf]
      %v1417 = vld [vmem:[%s889 + $0x80] sm:$0x1]
      %v1418 = vld [vmem:[%s889 + $0x84] sm:$0xf]
      %v1419 = vld [vmem:[%s889 + $0x88] sm:$0xf]
      %v1420 = vld [vmem:[%s889 + $0x8c] sm:$0x1]
      %vm1421 = vsmask.f32 3328
      %vm1422 = vsmask.f32 7440
      %vm1423 = vmor %vm1421, %vm1422
      %v1425 = vshrl.u32 %v1385, 16
      %v1427 = vrot.slane %v1425, 4
      %v1428 = vshll.u32 %v1385, 16
      %v1430 = vrot.slane %v1428, 5
      %v1431 = vor.u32 %v1427, %v1430
      %v1432 = vrot.slane %v1431, 4
      %v1434 = vshll.u32 %v1386, 16
      %v1436 = vrot.slane %v1434, 5
      %v1437 = vsel %vm1423, %v1432, %v1436
      %v1438 = vshrl.u32 %v1386, 16
      %v1440 = vrot.slane %v1438, 4
      %v1441 = vor.u32 %v1440, %v1436
      %v1442 = vrot.slane %v1441, 4
      %v1444 = vshll.u32 %v1387, 16
      %v1446 = vrot.slane %v1444, 5
      %v1447 = vsel %vm1423, %v1442, %v1446
      %v1449 = vshrl.u32 %v1388, 16
      %v1451 = vrot.slane %v1449, 4
      %v1452 = vshll.u32 %v1388, 16
      %v1454 = vrot.slane %v1452, 5
      %v1455 = vor.u32 %v1451, %v1454
      %v1456 = vrot.slane %v1455, 4
      %v1458 = vshll.u32 %v1389, 16
      %v1460 = vrot.slane %v1458, 5
      %v1461 = vsel %vm1423, %v1456, %v1460
      %v1462 = vshrl.u32 %v1389, 16
      %v1464 = vrot.slane %v1462, 4
      %v1465 = vor.u32 %v1464, %v1460
      %v1466 = vrot.slane %v1465, 4
      %v1468 = vshll.u32 %v1390, 16
      %v1470 = vrot.slane %v1468, 5
      %v1471 = vsel %vm1423, %v1466, %v1470
      %v1473 = vshrl.u32 %v1391, 16
      %v1475 = vrot.slane %v1473, 4
      %v1476 = vshll.u32 %v1391, 16
      %v1478 = vrot.slane %v1476, 5
      %v1479 = vor.u32 %v1475, %v1478
      %v1480 = vrot.slane %v1479, 4
      %v1482 = vshll.u32 %v1392, 16
      %v1484 = vrot.slane %v1482, 5
      %v1485 = vsel %vm1423, %v1480, %v1484
      %v1486 = vshrl.u32 %v1392, 16
      %v1488 = vrot.slane %v1486, 4
      %v1489 = vor.u32 %v1488, %v1484
      %v1490 = vrot.slane %v1489, 4
      %v1492 = vshll.u32 %v1393, 16
      %v1494 = vrot.slane %v1492, 5
      %v1495 = vsel %vm1423, %v1490, %v1494
      %v1497 = vshrl.u32 %v1394, 16
      %v1499 = vrot.slane %v1497, 4
      %v1500 = vshll.u32 %v1394, 16
      %v1502 = vrot.slane %v1500, 5
      %v1503 = vor.u32 %v1499, %v1502
      %v1504 = vrot.slane %v1503, 4
      %v1506 = vshll.u32 %v1395, 16
      %v1508 = vrot.slane %v1506, 5
      %v1509 = vsel %vm1423, %v1504, %v1508
      %v1510 = vshrl.u32 %v1395, 16
      %v1512 = vrot.slane %v1510, 4
      %v1513 = vor.u32 %v1512, %v1508
      %v1514 = vrot.slane %v1513, 4
      %v1516 = vshll.u32 %v1396, 16
      %v1518 = vrot.slane %v1516, 5
      %v1519 = vsel %vm1423, %v1514, %v1518
      %v1521 = vshrl.u32 %v1397, 16
      %v1523 = vrot.slane %v1521, 4
      %v1524 = vshll.u32 %v1397, 16
      %v1526 = vrot.slane %v1524, 5
      %v1527 = vor.u32 %v1523, %v1526
      %v1528 = vrot.slane %v1527, 4
      %v1530 = vshll.u32 %v1398, 16
      %v1532 = vrot.slane %v1530, 5
      %v1533 = vsel %vm1423, %v1528, %v1532
      %v1534 = vshrl.u32 %v1398, 16
      %v1536 = vrot.slane %v1534, 4
      %v1537 = vor.u32 %v1536, %v1532
      %v1538 = vrot.slane %v1537, 4
      %v1540 = vshll.u32 %v1399, 16
      %v1542 = vrot.slane %v1540, 5
      %v1543 = vsel %vm1423, %v1538, %v1542
      %v1545 = vshrl.u32 %v1400, 16
      %v1547 = vrot.slane %v1545, 4
      %v1548 = vshll.u32 %v1400, 16
      %v1550 = vrot.slane %v1548, 5
      %v1551 = vor.u32 %v1547, %v1550
      %v1552 = vrot.slane %v1551, 4
      %v1554 = vshll.u32 %v1401, 16
      %v1556 = vrot.slane %v1554, 5
      %v1557 = vsel %vm1423, %v1552, %v1556
      %v1558 = vshrl.u32 %v1401, 16
      %v1560 = vrot.slane %v1558, 4
      %v1561 = vor.u32 %v1560, %v1556
      %v1562 = vrot.slane %v1561, 4
      %v1564 = vshll.u32 %v1402, 16
      %v1566 = vrot.slane %v1564, 5
      %v1567 = vsel %vm1423, %v1562, %v1566
      %v1569 = vshrl.u32 %v1403, 16
      %v1571 = vrot.slane %v1569, 4
      %v1572 = vshll.u32 %v1403, 16
      %v1574 = vrot.slane %v1572, 5
      %v1575 = vor.u32 %v1571, %v1574
      %v1576 = vrot.slane %v1575, 4
      %v1578 = vshll.u32 %v1404, 16
      %v1580 = vrot.slane %v1578, 5
      %v1581 = vsel %vm1423, %v1576, %v1580
      %v1582 = vshrl.u32 %v1404, 16
      %v1584 = vrot.slane %v1582, 4
      %v1585 = vor.u32 %v1584, %v1580
      %v1586 = vrot.slane %v1585, 4
      %v1588 = vshll.u32 %v1405, 16
      %v1590 = vrot.slane %v1588, 5
      %v1591 = vsel %vm1423, %v1586, %v1590
      %v1593 = vshrl.u32 %v1406, 16
      %v1595 = vrot.slane %v1593, 4
      %v1596 = vshll.u32 %v1406, 16
      %v1598 = vrot.slane %v1596, 5
      %v1599 = vor.u32 %v1595, %v1598
      %v1600 = vrot.slane %v1599, 4
      %v1602 = vshll.u32 %v1407, 16
      %v1604 = vrot.slane %v1602, 5
      %v1605 = vsel %vm1423, %v1600, %v1604
      %v1606 = vshrl.u32 %v1407, 16
      %v1608 = vrot.slane %v1606, 4
      %v1609 = vor.u32 %v1608, %v1604
      %v1610 = vrot.slane %v1609, 4
      %v1612 = vshll.u32 %v1408, 16
      %v1614 = vrot.slane %v1612, 5
      %v1615 = vsel %vm1423, %v1610, %v1614
      %v1617 = vshrl.u32 %v1409, 16
      %v1619 = vrot.slane %v1617, 4
      %v1620 = vshll.u32 %v1409, 16
      %v1622 = vrot.slane %v1620, 5
      %v1623 = vor.u32 %v1619, %v1622
      %v1624 = vrot.slane %v1623, 4
      %v1626 = vshll.u32 %v1410, 16
      %v1628 = vrot.slane %v1626, 5
      %v1629 = vsel %vm1423, %v1624, %v1628
      %v1630 = vshrl.u32 %v1410, 16
      %v1632 = vrot.slane %v1630, 4
      %v1633 = vor.u32 %v1632, %v1628
      %v1634 = vrot.slane %v1633, 4
      %v1636 = vshll.u32 %v1411, 16
      %v1638 = vrot.slane %v1636, 5
      %v1639 = vsel %vm1423, %v1634, %v1638
      %v1641 = vshrl.u32 %v1412, 16
      %v1643 = vrot.slane %v1641, 4
      %v1644 = vshll.u32 %v1412, 16
      %v1646 = vrot.slane %v1644, 5
      %v1647 = vor.u32 %v1643, %v1646
      %v1648 = vrot.slane %v1647, 4
      %v1650 = vshll.u32 %v1413, 16
      %v1652 = vrot.slane %v1650, 5
      %v1653 = vsel %vm1423, %v1648, %v1652
      %v1654 = vshrl.u32 %v1413, 16
      %v1656 = vrot.slane %v1654, 4
      %v1657 = vor.u32 %v1656, %v1652
      %v1658 = vrot.slane %v1657, 4
      %v1660 = vshll.u32 %v1414, 16
      %v1662 = vrot.slane %v1660, 5
      %v1663 = vsel %vm1423, %v1658, %v1662
      %v1665 = vshrl.u32 %v1415, 16
      %v1667 = vrot.slane %v1665, 4
      %v1668 = vshll.u32 %v1415, 16
      %v1670 = vrot.slane %v1668, 5
      %v1671 = vor.u32 %v1667, %v1670
      %v1672 = vrot.slane %v1671, 4
      %v1674 = vshll.u32 %v1416, 16
      %v1676 = vrot.slane %v1674, 5
      %v1677 = vsel %vm1423, %v1672, %v1676
      %v1678 = vshrl.u32 %v1416, 16
      %v1680 = vrot.slane %v1678, 4
      %v1681 = vor.u32 %v1680, %v1676
      %v1682 = vrot.slane %v1681, 4
      %v1684 = vshll.u32 %v1417, 16
      %v1686 = vrot.slane %v1684, 5
      %v1687 = vsel %vm1423, %v1682, %v1686
      %v1689 = vshrl.u32 %v1418, 16
      %v1691 = vrot.slane %v1689, 4
      %v1692 = vshll.u32 %v1418, 16
      %v1694 = vrot.slane %v1692, 5
      %v1695 = vor.u32 %v1691, %v1694
      %v1696 = vrot.slane %v1695, 4
      %v1698 = vshll.u32 %v1419, 16
      %v1700 = vrot.slane %v1698, 5
      %v1701 = vsel %vm1423, %v1696, %v1700
      %v1702 = vshrl.u32 %v1419, 16
      %v1704 = vrot.slane %v1702, 4
      %v1705 = vor.u32 %v1704, %v1700
      %v1706 = vrot.slane %v1705, 4
      %v1708 = vshll.u32 %v1420, 16
      %v1710 = vrot.slane %v1708, 5
      %v1711 = vsel %vm1423, %v1706, %v1710
      %s1712 = scalar_lea.vmem %s1, 2
      %v1713 = vld [vmem:[%s1712] sm:$0x3]
      %v1714 = vunpack.c.l.b16 %v1437
      %v1715 = vunpack.c.l.b16 %v1447
      %v1716 = vunpack.c.l.b16 %v1461
      %v1717 = vunpack.c.l.b16 %v1471
      %v1718 = vunpack.c.l.b16 %v1485
      %v1719 = vunpack.c.l.b16 %v1495
      %v1720 = vunpack.c.l.b16 %v1509
      %v1721 = vunpack.c.l.b16 %v1519
      %v1722 = vunpack.c.l.b16 %v1533
      %v1723 = vunpack.c.l.b16 %v1543
      %v1724 = vunpack.c.l.b16 %v1557
      %v1725 = vunpack.c.l.b16 %v1567
      %v1726 = vunpack.c.l.b16 %v1581
      %v1727 = vunpack.c.l.b16 %v1591
      %v1728 = vunpack.c.l.b16 %v1605
      %v1729 = vunpack.c.l.b16 %v1615
      %v1730 = vunpack.c.l.b16 %v1629
      %v1731 = vunpack.c.l.b16 %v1639
      %v1732 = vunpack.c.l.b16 %v1653
      %v1733 = vunpack.c.l.b16 %v1663
      %v1734 = vpack.c.b16 %v1715, %v1714
      %v1735 = vpack.c.b16 %v1717, %v1716
      %v1736 = vpack.c.b16 %v1719, %v1718
      %v1737 = vpack.c.b16 %v1721, %v1720
      %v1738 = vpack.c.b16 %v1723, %v1722
      %v1739 = vpack.c.b16 %v1725, %v1724
      %v1740 = vpack.c.b16 %v1727, %v1726
      %v1741 = vpack.c.b16 %v1729, %v1728
      %v1742 = vpack.c.b16 %v1731, %v1730
      %v1743 = vpack.c.b16 %v1733, %v1732
      %v1745 = vsel %vm967, %v1734, 0
      %v1748 = vsel %vm967, %v1735, 0
      %v1751 = vsel %vm967, %v1736, 0
      %v1754 = vsel %vm967, %v1737, 0
      %v1757 = vsel %vm967, %v1738, 0
      %v1760 = vsel %vm967, %v1739, 0
      %v1763 = vsel %vm967, %v1740, 0
      %v1766 = vsel %vm967, %v1741, 0
      %v1769 = vsel %vm967, %v1742, 0
      %v1772 = vsel %vm967, %v1743, 0
      %v1775 = vsel %vm998, %v1713, 0
      %1777 = vmatprep.subr.bf16.mxu0 0
      %1778 = vmatpush1.bf16.msra.mxu0 %v1775
      %1779 = vmatprep.subr.bf16.mxu0 0
      %1780 = vmatpush1.bf16.msra.mxu0 0
      %1781 = vmatprep.subr.bf16.mxu0 0
      %1782 = vmatpush1.bf16.msra.mxu0 0
      %1783 = vmatprep.subr.bf16.mxu0 0
      %1784 = vmatpush1.bf16.msra.mxu0 0
      %1785 = vmatprep.subr.bf16.mxu0 0
      %1786 = vmatpush1.bf16.msra.mxu0 0
      %1787 = vmatprep.subr.bf16.mxu0 0
      %1788 = vmatpush1.bf16.msra.mxu0 0
      %1789 = vmatprep.subr.bf16.mxu0 0
      %1790 = vmatpush1.bf16.msra.mxu0 0
      %1791 = vmatprep.subr.bf16.mxu0 0
      %1792 = vmatpush1.bf16.msra.mxu0 0
      %1793 = vmatprep.subr.bf16.mxu0 0
      %1794 = vmatpush1.bf16.msra.mxu0 0
      %1795 = vmatprep.subr.bf16.mxu0 0
      %1796 = vmatpush1.bf16.msra.mxu0 0
      %1797 = vmatprep.subr.bf16.mxu0 0
      %1798 = vmatpush1.bf16.msra.mxu0 0
      %1799 = vmatprep.subr.bf16.mxu0 0
      %1800 = vmatpush1.bf16.msra.mxu0 0
      %1801 = vmatprep.subr.bf16.mxu0 0
      %1802 = vmatpush1.bf16.msra.mxu0 0
      %1803 = vmatprep.subr.bf16.mxu0 0
      %1804 = vmatpush1.bf16.msra.mxu0 0
      %1805 = vmatprep.subr.bf16.mxu0 0
      %1806 = vmatpush1.bf16.msra.mxu0 0
      %1807 = vmatprep.subr.bf16.mxu0 0
      %1808 = vmatpush1.bf16.msra.mxu0 0
      %1809 = vmatprep.mubr.bf16.mxu0 0
      %1810 = vmatmul.mubr.bf16.gmra.mrb[0].mxu0 %v1745
      %v1811 = vpop.f32.mrb[0].mxu0
      %v1812 = vadd.f32 0.0, %v1811
      %v1813 = vpop.f32.mrb[0].mxu0
      %v1814 = vpop.f32.mrb[0].mxu0
      %v1815 = vadd.f32 0.0, %v1814
      %v1816 = vpop.f32.mrb[0].mxu0
      %1817 = vmatprep.mubr.bf16.mxu0 0
      %1818 = vmatmul.mubr.bf16.gmra.mrb[0].mxu0 %v1748
      %v1819 = vpop.f32.mrb[0].mxu0
      %v1820 = vadd.f32 0.0, %v1819
      %v1821 = vpop.f32.mrb[0].mxu0
      %v1822 = vpop.f32.mrb[0].mxu0
      %v1823 = vadd.f32 0.0, %v1822
      %v1824 = vpop.f32.mrb[0].mxu0
      %1825 = vmatprep.mubr.bf16.mxu0 0
      %1826 = vmatmul.mubr.bf16.gmra.mrb[0].mxu0 %v1751
      %v1827 = vpop.f32.mrb[0].mxu0
      %v1828 = vadd.f32 0.0, %v1827
      %v1829 = vpop.f32.mrb[0].mxu0
      %v1830 = vpop.f32.mrb[0].mxu0
      %v1831 = vadd.f32 0.0, %v1830
      %v1832 = vpop.f32.mrb[0].mxu0
      %1833 = vmatprep.mubr.bf16.mxu0 0
      %1834 = vmatmul.mubr.bf16.gmra.mrb[0].mxu0 %v1754
      %v1835 = vpop.f32.mrb[0].mxu0
      %v1836 = vadd.f32 0.0, %v1835
      %v1837 = vpop.f32.mrb[0].mxu0
      %v1838 = vpop.f32.mrb[0].mxu0
      %v1839 = vadd.f32 0.0, %v1838
      %v1840 = vpop.f32.mrb[0].mxu0
      %1841 = vmatprep.mubr.bf16.mxu0 0
      %1842 = vmatmul.mubr.bf16.gmra.mrb[0].mxu0 %v1757
      %v1843 = vpop.f32.mrb[0].mxu0
      %v1844 = vadd.f32 0.0, %v1843
      %v1845 = vpop.f32.mrb[0].mxu0
      %v1846 = vpop.f32.mrb[0].mxu0
      %v1847 = vadd.f32 0.0, %v1846
      %v1848 = vpop.f32.mrb[0].mxu0
      %1849 = vmatprep.mubr.bf16.mxu0 0
      %1850 = vmatmul.mubr.bf16.gmra.mrb[0].mxu0 %v1760
      %v1851 = vpop.f32.mrb[0].mxu0
      %v1852 = vadd.f32 0.0, %v1851
      %v1853 = vpop.f32.mrb[0].mxu0
      %v1854 = vpop.f32.mrb[0].mxu0
      %v1855 = vadd.f32 0.0, %v1854
      %v1856 = vpop.f32.mrb[0].mxu0
      %1857 = vmatprep.mubr.bf16.mxu0 0
      %1858 = vmatmul.mubr.bf16.gmra.mrb[0].mxu0 %v1763
      %v1859 = vpop.f32.mrb[0].mxu0
      %v1860 = vadd.f32 0.0, %v1859
      %v1861 = vpop.f32.mrb[0].mxu0
      %v1862 = vpop.f32.mrb[0].mxu0
      %v1863 = vadd.f32 0.0, %v1862
      %v1864 = vpop.f32.mrb[0].mxu0
      %1865 = vmatprep.mubr.bf16.mxu0 0
      %1866 = vmatmul.mubr.bf16.gmra.mrb[0].mxu0 %v1766
      %v1867 = vpop.f32.mrb[0].mxu0
      %v1868 = vadd.f32 0.0, %v1867
      %v1869 = vpop.f32.mrb[0].mxu0
      %v1870 = vpop.f32.mrb[0].mxu0
      %v1871 = vadd.f32 0.0, %v1870
      %v1872 = vpop.f32.mrb[0].mxu0
      %1873 = vmatprep.mubr.bf16.mxu0 0
      %1874 = vmatmul.mubr.bf16.gmra.mrb[0].mxu0 %v1769
      %v1875 = vpop.f32.mrb[0].mxu0
      %v1876 = vadd.f32 0.0, %v1875
      %v1877 = vpop.f32.mrb[0].mxu0
      %v1878 = vpop.f32.mrb[0].mxu0
      %v1879 = vadd.f32 0.0, %v1878
      %v1880 = vpop.f32.mrb[0].mxu0
      %1881 = vmatprep.mubr.bf16.mxu0 0
      %1882 = vmatmul.mubr.bf16.gmra.mrb[0].mxu0 %v1772
      %v1883 = vpop.f32.mrb[0].mxu0
      %v1884 = vadd.f32 0.0, %v1883
      %v1885 = vpop.f32.mrb[0].mxu0
      %v1886 = vpop.f32.mrb[0].mxu0
      %v1887 = vadd.f32 0.0, %v1886
      %v1888 = vpop.f32.mrb[0].mxu0
      %1889 = vdwg.mxu0
      %v1890 = vadd.f32 %v1365, %v1812
      %v1891 = vadd.f32 %v1366, %v1815
      %v1892 = vadd.f32 %v1367, %v1820
      %v1893 = vadd.f32 %v1368, %v1823
      %v1894 = vadd.f32 %v1369, %v1828
      %v1895 = vadd.f32 %v1370, %v1831
      %v1896 = vadd.f32 %v1371, %v1836
      %v1897 = vadd.f32 %v1372, %v1839
      %v1898 = vadd.f32 %v1373, %v1844
      %v1899 = vadd.f32 %v1374, %v1847
      %v1900 = vadd.f32 %v1375, %v1852
      %v1901 = vadd.f32 %v1376, %v1855
      %v1902 = vadd.f32 %v1377, %v1860
      %v1903 = vadd.f32 %v1378, %v1863
      %v1904 = vadd.f32 %v1379, %v1868
      %v1905 = vadd.f32 %v1380, %v1871
      %v1906 = vadd.f32 %v1381, %v1876
      %v1907 = vadd.f32 %v1382, %v1879
      %v1908 = vadd.f32 %v1383, %v1884
      %v1909 = vadd.f32 %v1384, %v1887
      %s1910 = scalar_lea.vmem %s1, 8
      %v1911 = vld [vmem:[%s1910] sm:$0x3]
      %v1912 = vunpack.c.l.b16 %v1677
      %v1913 = vunpack.c.l.b16 %v1687
      %v1914 = vpack.c.b16 %v1913, %v1912
      %v1916 = vsel %vm967, %v1914, 0
      %v1919 = vsel %vm998, %v1911, 0
      %1921 = vmatprep.subr.bf16.mxu0 0
      %1922 = vmatpush1.bf16.msra.mxu0 %v1919
      %1923 = vmatprep.subr.bf16.mxu0 0
      %1924 = vmatpush1.bf16.msra.mxu0 0
      %1925 = vmatprep.subr.bf16.mxu0 0
      %1926 = vmatpush1.bf16.msra.mxu0 0
      %1927 = vmatprep.subr.bf16.mxu0 0
      %1928 = vmatpush1.bf16.msra.mxu0 0
      %1929 = vmatprep.subr.bf16.mxu0 0
      %1930 = vmatpush1.bf16.msra.mxu0 0
      %1931 = vmatprep.subr.bf16.mxu0 0
      %1932 = vmatpush1.bf16.msra.mxu0 0
      %1933 = vmatprep.subr.bf16.mxu0 0
      %1934 = vmatpush1.bf16.msra.mxu0 0
      %1935 = vmatprep.subr.bf16.mxu0 0
      %1936 = vmatpush1.bf16.msra.mxu0 0
      %1937 = vmatprep.subr.bf16.mxu0 0
      %1938 = vmatpush1.bf16.msra.mxu0 0
      %1939 = vmatprep.subr.bf16.mxu0 0
      %1940 = vmatpush1.bf16.msra.mxu0 0
      %1941 = vmatprep.subr.bf16.mxu0 0
      %1942 = vmatpush1.bf16.msra.mxu0 0
      %1943 = vmatprep.subr.bf16.mxu0 0
      %1944 = vmatpush1.bf16.msra.mxu0 0
      %1945 = vmatprep.subr.bf16.mxu0 0
      %1946 = vmatpush1.bf16.msra.mxu0 0
      %1947 = vmatprep.subr.bf16.mxu0 0
      %1948 = vmatpush1.bf16.msra.mxu0 0
      %1949 = vmatprep.subr.bf16.mxu0 0
      %1950 = vmatpush1.bf16.msra.mxu0 0
      %1951 = vmatprep.subr.bf16.mxu0 0
      %1952 = vmatpush1.bf16.msra.mxu0 0
      %1953 = vmatprep.mubr.bf16.mxu0 0
      %1954 = vmatmul.mubr.bf16.gmra.mrb[0].mxu0 %v1748
      %v1955 = vpop.f32.mrb[0].mxu0
      %v1956 = vadd.f32 0.0, %v1955
      %v1957 = vpop.f32.mrb[0].mxu0
      %v1958 = vpop.f32.mrb[0].mxu0
      %v1959 = vadd.f32 0.0, %v1958
      %v1960 = vpop.f32.mrb[0].mxu0
      %1961 = vmatprep.mubr.bf16.mxu0 0
      %1962 = vmatmul.mubr.bf16.gmra.mrb[0].mxu0 %v1751
      %v1963 = vpop.f32.mrb[0].mxu0
      %v1964 = vadd.f32 0.0, %v1963
      %v1965 = vpop.f32.mrb[0].mxu0
      %v1966 = vpop.f32.mrb[0].mxu0
      %v1967 = vadd.f32 0.0, %v1966
      %v1968 = vpop.f32.mrb[0].mxu0
      %1969 = vmatprep.mubr.bf16.mxu0 0
      %1970 = vmatmul.mubr.bf16.gmra.mrb[0].mxu0 %v1754
      %v1971 = vpop.f32.mrb[0].mxu0
      %v1972 = vadd.f32 0.0, %v1971
      %v1973 = vpop.f32.mrb[0].mxu0
      %v1974 = vpop.f32.mrb[0].mxu0
      %v1975 = vadd.f32 0.0, %v1974
      %v1976 = vpop.f32.mrb[0].mxu0
      %1977 = vmatprep.mubr.bf16.mxu0 0
      %1978 = vmatmul.mubr.bf16.gmra.mrb[0].mxu0 %v1757
      %v1979 = vpop.f32.mrb[0].mxu0
      %v1980 = vadd.f32 0.0, %v1979
      %v1981 = vpop.f32.mrb[0].mxu0
      %v1982 = vpop.f32.mrb[0].mxu0
      %v1983 = vadd.f32 0.0, %v1982
      %v1984 = vpop.f32.mrb[0].mxu0
      %1985 = vmatprep.mubr.bf16.mxu0 0
      %1986 = vmatmul.mubr.bf16.gmra.mrb[0].mxu0 %v1760
      %v1987 = vpop.f32.mrb[0].mxu0
      %v1988 = vadd.f32 0.0, %v1987
      %v1989 = vpop.f32.mrb[0].mxu0
      %v1990 = vpop.f32.mrb[0].mxu0
      %v1991 = vadd.f32 0.0, %v1990
      %v1992 = vpop.f32.mrb[0].mxu0
      %1993 = vmatprep.mubr.bf16.mxu0 0
      %1994 = vmatmul.mubr.bf16.gmra.mrb[0].mxu0 %v1763
      %v1995 = vpop.f32.mrb[0].mxu0
      %v1996 = vadd.f32 0.0, %v1995
      %v1997 = vpop.f32.mrb[0].mxu0
      %v1998 = vpop.f32.mrb[0].mxu0
      %v1999 = vadd.f32 0.0, %v1998
      %v2000 = vpop.f32.mrb[0].mxu0
      %2001 = vmatprep.mubr.bf16.mxu0 0
      %2002 = vmatmul.mubr.bf16.gmra.mrb[0].mxu0 %v1766
      %v2003 = vpop.f32.mrb[0].mxu0
      %v2004 = vadd.f32 0.0, %v2003
      %v2005 = vpop.f32.mrb[0].mxu0
      %v2006 = vpop.f32.mrb[0].mxu0
      %v2007 = vadd.f32 0.0, %v2006
      %v2008 = vpop.f32.mrb[0].mxu0
      %2009 = vmatprep.mubr.bf16.mxu0 0
      %2010 = vmatmul.mubr.bf16.gmra.mrb[0].mxu0 %v1769
      %v2011 = vpop.f32.mrb[0].mxu0
      %v2012 = vadd.f32 0.0, %v2011
      %v2013 = vpop.f32.mrb[0].mxu0
      %v2014 = vpop.f32.mrb[0].mxu0
      %v2015 = vadd.f32 0.0, %v2014
      %v2016 = vpop.f32.mrb[0].mxu0
      %2017 = vmatprep.mubr.bf16.mxu0 0
      %2018 = vmatmul.mubr.bf16.gmra.mrb[0].mxu0 %v1772
      %v2019 = vpop.f32.mrb[0].mxu0
      %v2020 = vadd.f32 0.0, %v2019
      %v2021 = vpop.f32.mrb[0].mxu0
      %v2022 = vpop.f32.mrb[0].mxu0
      %v2023 = vadd.f32 0.0, %v2022
      %v2024 = vpop.f32.mrb[0].mxu0
      %2025 = vmatprep.mubr.bf16.mxu0 0
      %2026 = vmatmul.mubr.bf16.gmra.mrb[0].mxu0 %v1916
      %v2027 = vpop.f32.mrb[0].mxu0
      %v2028 = vadd.f32 0.0, %v2027
      %v2029 = vpop.f32.mrb[0].mxu0
      %v2030 = vpop.f32.mrb[0].mxu0
      %v2031 = vadd.f32 0.0, %v2030
      %v2032 = vpop.f32.mrb[0].mxu0
      %2033 = vdwg.mxu0
      %v2034 = vadd.f32 %v1890, %v1956
      %v2035 = vadd.f32 %v1891, %v1959
      %v2036 = vadd.f32 %v1892, %v1964
      %v2037 = vadd.f32 %v1893, %v1967
      %v2038 = vadd.f32 %v1894, %v1972
      %v2039 = vadd.f32 %v1895, %v1975
      %v2040 = vadd.f32 %v1896, %v1980
      %v2041 = vadd.f32 %v1897, %v1983
      %v2042 = vadd.f32 %v1898, %v1988
      %v2043 = vadd.f32 %v1899, %v1991
      %v2044 = vadd.f32 %v1900, %v1996
      %v2045 = vadd.f32 %v1901, %v1999
      %v2046 = vadd.f32 %v1902, %v2004
      %v2047 = vadd.f32 %v1903, %v2007
      %v2048 = vadd.f32 %v1904, %v2012
      %v2049 = vadd.f32 %v1905, %v2015
      %v2050 = vadd.f32 %v1906, %v2020
      %v2051 = vadd.f32 %v1907, %v2023
      %v2052 = vadd.f32 %v1908, %v2028
      %v2053 = vadd.f32 %v1909, %v2031
      %s2054 = scalar_lea.vmem %s1, 14
      %v2055 = vld [vmem:[%s2054] sm:$0x3]
      %v2056 = vunpack.c.l.b16 %v1701
      %v2057 = vunpack.c.l.b16 %v1711
      %v2058 = vpack.c.b16 %v2057, %v2056
      %v2060 = vsel %vm967, %v2058, 0
      %v2063 = vsel %vm998, %v2055, 0
      %2065 = vmatprep.subr.bf16.mxu0 0
      %2066 = vmatpush1.bf16.msra.mxu0 %v2063
      %2067 = vmatprep.subr.bf16.mxu0 0
      %2068 = vmatpush1.bf16.msra.mxu0 0
      %2069 = vmatprep.subr.bf16.mxu0 0
      %2070 = vmatpush1.bf16.msra.mxu0 0
      %2071 = vmatprep.subr.bf16.mxu0 0
      %2072 = vmatpush1.bf16.msra.mxu0 0
      %2073 = vmatprep.subr.bf16.mxu0 0
      %2074 = vmatpush1.bf16.msra.mxu0 0
      %2075 = vmatprep.subr.bf16.mxu0 0
      %2076 = vmatpush1.bf16.msra.mxu0 0
      %2077 = vmatprep.subr.bf16.mxu0 0
      %2078 = vmatpush1.bf16.msra.mxu0 0
      %2079 = vmatprep.subr.bf16.mxu0 0
      %2080 = vmatpush1.bf16.msra.mxu0 0
      %2081 = vmatprep.subr.bf16.mxu0 0
      %2082 = vmatpush1.bf16.msra.mxu0 0
      %2083 = vmatprep.subr.bf16.mxu0 0
      %2084 = vmatpush1.bf16.msra.mxu0 0
      %2085 = vmatprep.subr.bf16.mxu0 0
      %2086 = vmatpush1.bf16.msra.mxu0 0
      %2087 = vmatprep.subr.bf16.mxu0 0
      %2088 = vmatpush1.bf16.msra.mxu0 0
      %2089 = vmatprep.subr.bf16.mxu0 0
      %2090 = vmatpush1.bf16.msra.mxu0 0
      %2091 = vmatprep.subr.bf16.mxu0 0
      %2092 = vmatpush1.bf16.msra.mxu0 0
      %2093 = vmatprep.subr.bf16.mxu0 0
      %2094 = vmatpush1.bf16.msra.mxu0 0
      %2095 = vmatprep.subr.bf16.mxu0 0
      %2096 = vmatpush1.bf16.msra.mxu0 0
      %2097 = vmatprep.mubr.bf16.mxu0 0
      %2098 = vmatmul.mubr.bf16.gmra.mrb[0].mxu0 %v1751
      %v2099 = vpop.f32.mrb[0].mxu0
      %v2100 = vadd.f32 0.0, %v2099
      %v2101 = vpop.f32.mrb[0].mxu0
      %v2102 = vpop.f32.mrb[0].mxu0
      %v2103 = vadd.f32 0.0, %v2102
      %v2104 = vpop.f32.mrb[0].mxu0
      %2105 = vmatprep.mubr.bf16.mxu0 0
      %2106 = vmatmul.mubr.bf16.gmra.mrb[0].mxu0 %v1754
      %v2107 = vpop.f32.mrb[0].mxu0
      %v2108 = vadd.f32 0.0, %v2107
      %v2109 = vpop.f32.mrb[0].mxu0
      %v2110 = vpop.f32.mrb[0].mxu0
      %v2111 = vadd.f32 0.0, %v2110
      %v2112 = vpop.f32.mrb[0].mxu0
      %2113 = vmatprep.mubr.bf16.mxu0 0
      %2114 = vmatmul.mubr.bf16.gmra.mrb[0].mxu0 %v1757
      %v2115 = vpop.f32.mrb[0].mxu0
      %v2116 = vadd.f32 0.0, %v2115
      %v2117 = vpop.f32.mrb[0].mxu0
      %v2118 = vpop.f32.mrb[0].mxu0
      %v2119 = vadd.f32 0.0, %v2118
      %v2120 = vpop.f32.mrb[0].mxu0
      %2121 = vmatprep.mubr.bf16.mxu0 0
      %2122 = vmatmul.mubr.bf16.gmra.mrb[0].mxu0 %v1760
      %v2123 = vpop.f32.mrb[0].mxu0
      %v2124 = vadd.f32 0.0, %v2123
      %v2125 = vpop.f32.mrb[0].mxu0
      %v2126 = vpop.f32.mrb[0].mxu0
      %v2127 = vadd.f32 0.0, %v2126
      %v2128 = vpop.f32.mrb[0].mxu0
      %2129 = vmatprep.mubr.bf16.mxu0 0
      %2130 = vmatmul.mubr.bf16.gmra.mrb[0].mxu0 %v1763
      %v2131 = vpop.f32.mrb[0].mxu0
      %v2132 = vadd.f32 0.0, %v2131
      %v2133 = vpop.f32.mrb[0].mxu0
      %v2134 = vpop.f32.mrb[0].mxu0
      %v2135 = vadd.f32 0.0, %v2134
      %v2136 = vpop.f32.mrb[0].mxu0
      %2137 = vmatprep.mubr.bf16.mxu0 0
      %2138 = vmatmul.mubr.bf16.gmra.mrb[0].mxu0 %v1766
      %v2139 = vpop.f32.mrb[0].mxu0
      %v2140 = vadd.f32 0.0, %v2139
      %v2141 = vpop.f32.mrb[0].mxu0
      %v2142 = vpop.f32.mrb[0].mxu0
      %v2143 = vadd.f32 0.0, %v2142
      %v2144 = vpop.f32.mrb[0].mxu0
      %2145 = vmatprep.mubr.bf16.mxu0 0
      %2146 = vmatmul.mubr.bf16.gmra.mrb[0].mxu0 %v1769
      %v2147 = vpop.f32.mrb[0].mxu0
      %v2148 = vadd.f32 0.0, %v2147
      %v2149 = vpop.f32.mrb[0].mxu0
      %v2150 = vpop.f32.mrb[0].mxu0
      %v2151 = vadd.f32 0.0, %v2150
      %v2152 = vpop.f32.mrb[0].mxu0
      %2153 = vmatprep.mubr.bf16.mxu0 0
      %2154 = vmatmul.mubr.bf16.gmra.mrb[0].mxu0 %v1772
      %v2155 = vpop.f32.mrb[0].mxu0
      %v2156 = vadd.f32 0.0, %v2155
      %v2157 = vpop.f32.mrb[0].mxu0
      %v2158 = vpop.f32.mrb[0].mxu0
      %v2159 = vadd.f32 0.0, %v2158
      %v2160 = vpop.f32.mrb[0].mxu0
      %2161 = vmatprep.mubr.bf16.mxu0 0
      %2162 = vmatmul.mubr.bf16.gmra.mrb[0].mxu0 %v1916
      %v2163 = vpop.f32.mrb[0].mxu0
      %v2164 = vadd.f32 0.0, %v2163
      %v2165 = vpop.f32.mrb[0].mxu0
      %v2166 = vpop.f32.mrb[0].mxu0
      %v2167 = vadd.f32 0.0, %v2166
      %v2168 = vpop.f32.mrb[0].mxu0
      %2169 = vmatprep.mubr.bf16.mxu0 0
      %2170 = vmatmul.mubr.bf16.gmra.mrb[0].mxu0 %v2060
      %v2171 = vpop.f32.mrb[0].mxu0
      %v2172 = vadd.f32 0.0, %v2171
      %v2173 = vpop.f32.mrb[0].mxu0
      %v2174 = vpop.f32.mrb[0].mxu0
      %v2175 = vadd.f32 0.0, %v2174
      %v2176 = vpop.f32.mrb[0].mxu0
      %2177 = vdwg.mxu0
      %v2178 = vadd.f32 %v2034, %v2100
      %v2179 = vadd.f32 %v2035, %v2103
      %v2180 = vadd.f32 %v2036, %v2108
      %v2181 = vadd.f32 %v2037, %v2111
      %v2182 = vadd.f32 %v2038, %v2116
      %v2183 = vadd.f32 %v2039, %v2119
      %v2184 = vadd.f32 %v2040, %v2124
      %v2185 = vadd.f32 %v2041, %v2127
      %v2186 = vadd.f32 %v2042, %v2132
      %v2187 = vadd.f32 %v2043, %v2135
      %v2188 = vadd.f32 %v2044, %v2140
      %v2189 = vadd.f32 %v2045, %v2143
      %v2190 = vadd.f32 %v2046, %v2148
      %v2191 = vadd.f32 %v2047, %v2151
      %v2192 = vadd.f32 %v2048, %v2156
      %v2193 = vadd.f32 %v2049, %v2159
      %v2194 = vadd.f32 %v2050, %v2164
      %v2195 = vadd.f32 %v2051, %v2167
      %v2196 = vadd.f32 %v2052, %v2172
      %v2197 = vadd.f32 %v2053, %v2175
      %v2198 = vld [vmem:[%s889] sm:$0xe]
      %v2199 = vld [vmem:[%s889 + $0xc] sm:$0xe]
      %v2200 = vld [vmem:[%s889 + $0x18] sm:$0xe]
      %v2201 = vld [vmem:[%s889 + $0x24] sm:$0xe]
      %v2202 = vld [vmem:[%s889 + $0x30] sm:$0xe]
      %v2203 = vld [vmem:[%s889 + $0x3c] sm:$0xe]
      %v2204 = vld [vmem:[%s889 + $0x48] sm:$0xe]
      %v2205 = vld [vmem:[%s889 + $0x54] sm:$0xe]
      %v2206 = vld [vmem:[%s889 + $0x60] sm:$0xe]
      %v2207 = vld [vmem:[%s889 + $0x6c] sm:$0xe]
      %v2208 = vld [vmem:[%s889 + $0x78] sm:$0xe]
      %v2209 = vld [vmem:[%s889 + $0x84] sm:$0xe]
      %vm2246 = vcmask 1042432
      %vm2247 = vcmask 1046532
      %vm2248 = vmor %vm2246, %vm2247
      %v2249 = vrot.slane %v2198, 5
      %v2250 = vrot.slane %v2249, 4
      %v2251 = vrot.slane %v1386, 5
      %v2252 = vsel %vm2248, %v2250, %v2251
      %v2253 = vrot.slane %v2251, 4
      %v2254 = vrot.slane %v1387, 5
      %v2255 = vsel %vm2248, %v2253, %v2254
      %v2256 = vrot.slane %v2199, 5
      %v2257 = vrot.slane %v2256, 4
      %v2258 = vrot.slane %v1389, 5
      %v2259 = vsel %vm2248, %v2257, %v2258
      %v2260 = vrot.slane %v2258, 4
      %v2261 = vrot.slane %v1390, 5
      %v2262 = vsel %vm2248, %v2260, %v2261
      %v2263 = vrot.slane %v2200, 5
      %v2264 = vrot.slane %v2263, 4
      %v2265 = vrot.slane %v1392, 5
      %v2266 = vsel %vm2248, %v2264, %v2265
      %v2267 = vrot.slane %v2265, 4
      %v2268 = vrot.slane %v1393, 5
      %v2269 = vsel %vm2248, %v2267, %v2268
      %v2270 = vrot.slane %v2201, 5
      %v2271 = vrot.slane %v2270, 4
      %v2272 = vrot.slane %v1395, 5
      %v2273 = vsel %vm2248, %v2271, %v2272
      %v2274 = vrot.slane %v2272, 4
      %v2275 = vrot.slane %v1396, 5
      %v2276 = vsel %vm2248, %v2274, %v2275
      %v2277 = vrot.slane %v2202, 5
      %v2278 = vrot.slane %v2277, 4
      %v2279 = vrot.slane %v1398, 5
      %v2280 = vsel %vm2248, %v2278, %v2279
      %v2281 = vrot.slane %v2279, 4
      %v2282 = vrot.slane %v1399, 5
      %v2283 = vsel %vm2248, %v2281, %v2282
      %v2284 = vrot.slane %v2203, 5
      %v2285 = vrot.slane %v2284, 4
      %v2286 = vrot.slane %v1401, 5
      %v2287 = vsel %vm2248, %v2285, %v2286
      %v2288 = vrot.slane %v2286, 4
      %v2289 = vrot.slane %v1402, 5
      %v2290 = vsel %vm2248, %v2288, %v2289
      %v2291 = vrot.slane %v2204, 5
      %v2292 = vrot.slane %v2291, 4
      %v2293 = vrot.slane %v1404, 5
      %v2294 = vsel %vm2248, %v2292, %v2293
      %v2295 = vrot.slane %v2293, 4
      %v2296 = vrot.slane %v1405, 5
      %v2297 = vsel %vm2248, %v2295, %v2296
      %v2298 = vrot.slane %v2205, 5
      %v2299 = vrot.slane %v2298, 4
      %v2300 = vrot.slane %v1407, 5
      %v2301 = vsel %vm2248, %v2299, %v2300
      %v2302 = vrot.slane %v2300, 4
      %v2303 = vrot.slane %v1408, 5
      %v2304 = vsel %vm2248, %v2302, %v2303
      %v2305 = vrot.slane %v2206, 5
      %v2306 = vrot.slane %v2305, 4
      %v2307 = vrot.slane %v1410, 5
      %v2308 = vsel %vm2248, %v2306, %v2307
      %v2309 = vrot.slane %v2307, 4
      %v2310 = vrot.slane %v1411, 5
      %v2311 = vsel %vm2248, %v2309, %v2310
      %v2312 = vrot.slane %v2207, 5
      %v2313 = vrot.slane %v2312, 4
      %v2314 = vrot.slane %v1413, 5
      %v2315 = vsel %vm2248, %v2313, %v2314
      %v2316 = vrot.slane %v2314, 4
      %v2317 = vrot.slane %v1414, 5
      %v2318 = vsel %vm2248, %v2316, %v2317
      %v2319 = vrot.slane %v2208, 5
      %v2320 = vrot.slane %v2319, 4
      %v2321 = vrot.slane %v1416, 5
      %v2322 = vsel %vm2248, %v2320, %v2321
      %v2323 = vrot.slane %v2321, 4
      %v2324 = vrot.slane %v1417, 5
      %v2325 = vsel %vm2248, %v2323, %v2324
      %v2326 = vrot.slane %v2209, 5
      %v2327 = vrot.slane %v2326, 4
      %v2328 = vrot.slane %v1419, 5
      %v2329 = vsel %vm2248, %v2327, %v2328
      %v2330 = vrot.slane %v2328, 4
      %v2331 = vrot.slane %v1420, 5
      %v2332 = vsel %vm2248, %v2330, %v2331
      %s2333 = scalar_lea.vmem %s1, 4
      %v2334 = vld [vmem:[%s2333] sm:$0x3]
      %v2335 = vunpack.c.l.b16 %v2252
      %v2336 = vunpack.c.l.b16 %v2255
      %v2337 = vunpack.c.l.b16 %v2259
      %v2338 = vunpack.c.l.b16 %v2262
      %v2339 = vunpack.c.l.b16 %v2266
      %v2340 = vunpack.c.l.b16 %v2269
      %v2341 = vunpack.c.l.b16 %v2273
      %v2342 = vunpack.c.l.b16 %v2276
      %v2343 = vunpack.c.l.b16 %v2280
      %v2344 = vunpack.c.l.b16 %v2283
      %v2345 = vunpack.c.l.b16 %v2287
      %v2346 = vunpack.c.l.b16 %v2290
      %v2347 = vunpack.c.l.b16 %v2294
      %v2348 = vunpack.c.l.b16 %v2297
      %v2349 = vunpack.c.l.b16 %v2301
      %v2350 = vunpack.c.l.b16 %v2304
      %v2351 = vunpack.c.l.b16 %v2308
      %v2352 = vunpack.c.l.b16 %v2311
      %v2353 = vunpack.c.l.b16 %v2315
      %v2354 = vunpack.c.l.b16 %v2318
      %v2355 = vpack.c.b16 %v2336, %v2335
      %v2356 = vpack.c.b16 %v2338, %v2337
      %v2357 = vpack.c.b16 %v2340, %v2339
      %v2358 = vpack.c.b16 %v2342, %v2341
      %v2359 = vpack.c.b16 %v2344, %v2343
      %v2360 = vpack.c.b16 %v2346, %v2345
      %v2361 = vpack.c.b16 %v2348, %v2347
      %v2362 = vpack.c.b16 %v2350, %v2349
      %v2363 = vpack.c.b16 %v2352, %v2351
      %v2364 = vpack.c.b16 %v2354, %v2353
      %v2366 = vsel %vm967, %v2355, 0
      %v2369 = vsel %vm967, %v2356, 0
      %v2372 = vsel %vm967, %v2357, 0
      %v2375 = vsel %vm967, %v2358, 0
      %v2378 = vsel %vm967, %v2359, 0
      %v2381 = vsel %vm967, %v2360, 0
      %v2384 = vsel %vm967, %v2361, 0
      %v2387 = vsel %vm967, %v2362, 0
      %v2390 = vsel %vm967, %v2363, 0
      %v2393 = vsel %vm967, %v2364, 0
      %v2396 = vsel %vm998, %v2334, 0
      %2398 = vmatprep.subr.bf16.mxu0 0
      %2399 = vmatpush1.bf16.msra.mxu0 %v2396
      %2400 = vmatprep.subr.bf16.mxu0 0
      %2401 = vmatpush1.bf16.msra.mxu0 0
      %2402 = vmatprep.subr.bf16.mxu0 0
      %2403 = vmatpush1.bf16.msra.mxu0 0
      %2404 = vmatprep.subr.bf16.mxu0 0
      %2405 = vmatpush1.bf16.msra.mxu0 0
      %2406 = vmatprep.subr.bf16.mxu0 0
      %2407 = vmatpush1.bf16.msra.mxu0 0
      %2408 = vmatprep.subr.bf16.mxu0 0
      %2409 = vmatpush1.bf16.msra.mxu0 0
      %2410 = vmatprep.subr.bf16.mxu0 0
      %2411 = vmatpush1.bf16.msra.mxu0 0
      %2412 = vmatprep.subr.bf16.mxu0 0
      %2413 = vmatpush1.bf16.msra.mxu0 0
      %2414 = vmatprep.subr.bf16.mxu0 0
      %2415 = vmatpush1.bf16.msra.mxu0 0
      %2416 = vmatprep.subr.bf16.mxu0 0
      %2417 = vmatpush1.bf16.msra.mxu0 0
      %2418 = vmatprep.subr.bf16.mxu0 0
      %2419 = vmatpush1.bf16.msra.mxu0 0
      %2420 = vmatprep.subr.bf16.mxu0 0
      %2421 = vmatpush1.bf16.msra.mxu0 0
      %2422 = vmatprep.subr.bf16.mxu0 0
      %2423 = vmatpush1.bf16.msra.mxu0 0
      %2424 = vmatprep.subr.bf16.mxu0 0
      %2425 = vmatpush1.bf16.msra.mxu0 0
      %2426 = vmatprep.subr.bf16.mxu0 0
      %2427 = vmatpush1.bf16.msra.mxu0 0
      %2428 = vmatprep.subr.bf16.mxu0 0
      %2429 = vmatpush1.bf16.msra.mxu0 0
      %2430 = vmatprep.mubr.bf16.mxu0 0
      %2431 = vmatmul.mubr.bf16.gmra.mrb[0].mxu0 %v2366
      %v2432 = vpop.f32.mrb[0].mxu0
      %v2433 = vadd.f32 0.0, %v2432
      %v2434 = vpop.f32.mrb[0].mxu0
      %v2435 = vpop.f32.mrb[0].mxu0
      %v2436 = vadd.f32 0.0, %v2435
      %v2437 = vpop.f32.mrb[0].mxu0
      %2438 = vmatprep.mubr.bf16.mxu0 0
      %2439 = vmatmul.mubr.bf16.gmra.mrb[0].mxu0 %v2369
      %v2440 = vpop.f32.mrb[0].mxu0
      %v2441 = vadd.f32 0.0, %v2440
      %v2442 = vpop.f32.mrb[0].mxu0
      %v2443 = vpop.f32.mrb[0].mxu0
      %v2444 = vadd.f32 0.0, %v2443
      %v2445 = vpop.f32.mrb[0].mxu0
      %2446 = vmatprep.mubr.bf16.mxu0 0
      %2447 = vmatmul.mubr.bf16.gmra.mrb[0].mxu0 %v2372
      %v2448 = vpop.f32.mrb[0].mxu0
      %v2449 = vadd.f32 0.0, %v2448
      %v2450 = vpop.f32.mrb[0].mxu0
      %v2451 = vpop.f32.mrb[0].mxu0
      %v2452 = vadd.f32 0.0, %v2451
      %v2453 = vpop.f32.mrb[0].mxu0
      %2454 = vmatprep.mubr.bf16.mxu0 0
      %2455 = vmatmul.mubr.bf16.gmra.mrb[0].mxu0 %v2375
      %v2456 = vpop.f32.mrb[0].mxu0
      %v2457 = vadd.f32 0.0, %v2456
      %v2458 = vpop.f32.mrb[0].mxu0
      %v2459 = vpop.f32.mrb[0].mxu0
      %v2460 = vadd.f32 0.0, %v2459
      %v2461 = vpop.f32.mrb[0].mxu0
      %2462 = vmatprep.mubr.bf16.mxu0 0
      %2463 = vmatmul.mubr.bf16.gmra.mrb[0].mxu0 %v2378
      %v2464 = vpop.f32.mrb[0].mxu0
      %v2465 = vadd.f32 0.0, %v2464
      %v2466 = vpop.f32.mrb[0].mxu0
      %v2467 = vpop.f32.mrb[0].mxu0
      %v2468 = vadd.f32 0.0, %v2467
      %v2469 = vpop.f32.mrb[0].mxu0
      %2470 = vmatprep.mubr.bf16.mxu0 0
      %2471 = vmatmul.mubr.bf16.gmra.mrb[0].mxu0 %v2381
      %v2472 = vpop.f32.mrb[0].mxu0
      %v2473 = vadd.f32 0.0, %v2472
      %v2474 = vpop.f32.mrb[0].mxu0
      %v2475 = vpop.f32.mrb[0].mxu0
      %v2476 = vadd.f32 0.0, %v2475
      %v2477 = vpop.f32.mrb[0].mxu0
      %2478 = vmatprep.mubr.bf16.mxu0 0
      %2479 = vmatmul.mubr.bf16.gmra.mrb[0].mxu0 %v2384
      %v2480 = vpop.f32.mrb[0].mxu0
      %v2481 = vadd.f32 0.0, %v2480
      %v2482 = vpop.f32.mrb[0].mxu0
      %v2483 = vpop.f32.mrb[0].mxu0
      %v2484 = vadd.f32 0.0, %v2483
      %v2485 = vpop.f32.mrb[0].mxu0
      %2486 = vmatprep.mubr.bf16.mxu0 0
      %2487 = vmatmul.mubr.bf16.gmra.mrb[0].mxu0 %v2387
      %v2488 = vpop.f32.mrb[0].mxu0
      %v2489 = vadd.f32 0.0, %v2488
      %v2490 = vpop.f32.mrb[0].mxu0
      %v2491 = vpop.f32.mrb[0].mxu0
      %v2492 = vadd.f32 0.0, %v2491
      %v2493 = vpop.f32.mrb[0].mxu0
      %2494 = vmatprep.mubr.bf16.mxu0 0
      %2495 = vmatmul.mubr.bf16.gmra.mrb[0].mxu0 %v2390
      %v2496 = vpop.f32.mrb[0].mxu0
      %v2497 = vadd.f32 0.0, %v2496
      %v2498 = vpop.f32.mrb[0].mxu0
      %v2499 = vpop.f32.mrb[0].mxu0
      %v2500 = vadd.f32 0.0, %v2499
      %v2501 = vpop.f32.mrb[0].mxu0
      %2502 = vmatprep.mubr.bf16.mxu0 0
      %2503 = vmatmul.mubr.bf16.gmra.mrb[0].mxu0 %v2393
      %v2504 = vpop.f32.mrb[0].mxu0
      %v2505 = vadd.f32 0.0, %v2504
      %v2506 = vpop.f32.mrb[0].mxu0
      %v2507 = vpop.f32.mrb[0].mxu0
      %v2508 = vadd.f32 0.0, %v2507
      %v2509 = vpop.f32.mrb[0].mxu0
      %2510 = vdwg.mxu0
      %v2511 = vadd.f32 %v2178, %v2433
      %v2512 = vadd.f32 %v2179, %v2436
      %v2513 = vadd.f32 %v2180, %v2441
      %v2514 = vadd.f32 %v2181, %v2444
      %v2515 = vadd.f32 %v2182, %v2449
      %v2516 = vadd.f32 %v2183, %v2452
      %v2517 = vadd.f32 %v2184, %v2457
      %v2518 = vadd.f32 %v2185, %v2460
      %v2519 = vadd.f32 %v2186, %v2465
      %v2520 = vadd.f32 %v2187, %v2468
      %v2521 = vadd.f32 %v2188, %v2473
      %v2522 = vadd.f32 %v2189, %v2476
      %v2523 = vadd.f32 %v2190, %v2481
      %v2524 = vadd.f32 %v2191, %v2484
      %v2525 = vadd.f32 %v2192, %v2489
      %v2526 = vadd.f32 %v2193, %v2492
      %v2527 = vadd.f32 %v2194, %v2497
      %v2528 = vadd.f32 %v2195, %v2500
      %v2529 = vadd.f32 %v2196, %v2505
      %v2530 = vadd.f32 %v2197, %v2508
      %s2531 = scalar_lea.vmem %s1, 10
      %v2532 = vld [vmem:[%s2531] sm:$0x3]
      %v2533 = vunpack.c.l.b16 %v2322
      %v2534 = vunpack.c.l.b16 %v2325
      %v2535 = vpack.c.b16 %v2534, %v2533
      %v2537 = vsel %vm967, %v2535, 0
      %v2540 = vsel %vm998, %v2532, 0
      %2542 = vmatprep.subr.bf16.mxu0 0
      %2543 = vmatpush1.bf16.msra.mxu0 %v2540
      %2544 = vmatprep.subr.bf16.mxu0 0
      %2545 = vmatpush1.bf16.msra.mxu0 0
      %2546 = vmatprep.subr.bf16.mxu0 0
      %2547 = vmatpush1.bf16.msra.mxu0 0
      %2548 = vmatprep.subr.bf16.mxu0 0
      %2549 = vmatpush1.bf16.msra.mxu0 0
      %2550 = vmatprep.subr.bf16.mxu0 0
      %2551 = vmatpush1.bf16.msra.mxu0 0
      %2552 = vmatprep.subr.bf16.mxu0 0
      %2553 = vmatpush1.bf16.msra.mxu0 0
      %2554 = vmatprep.subr.bf16.mxu0 0
      %2555 = vmatpush1.bf16.msra.mxu0 0
      %2556 = vmatprep.subr.bf16.mxu0 0
      %2557 = vmatpush1.bf16.msra.mxu0 0
      %2558 = vmatprep.subr.bf16.mxu0 0
      %2559 = vmatpush1.bf16.msra.mxu0 0
      %2560 = vmatprep.subr.bf16.mxu0 0
      %2561 = vmatpush1.bf16.msra.mxu0 0
      %2562 = vmatprep.subr.bf16.mxu0 0
      %2563 = vmatpush1.bf16.msra.mxu0 0
      %2564 = vmatprep.subr.bf16.mxu0 0
      %2565 = vmatpush1.bf16.msra.mxu0 0
      %2566 = vmatprep.subr.bf16.mxu0 0
      %2567 = vmatpush1.bf16.msra.mxu0 0
      %2568 = vmatprep.subr.bf16.mxu0 0
      %2569 = vmatpush1.bf16.msra.mxu0 0
      %2570 = vmatprep.subr.bf16.mxu0 0
      %2571 = vmatpush1.bf16.msra.mxu0 0
      %2572 = vmatprep.subr.bf16.mxu0 0
      %2573 = vmatpush1.bf16.msra.mxu0 0
      %2574 = vmatprep.mubr.bf16.mxu0 0
      %2575 = vmatmul.mubr.bf16.gmra.mrb[0].mxu0 %v2369
      %v2576 = vpop.f32.mrb[0].mxu0
      %v2577 = vadd.f32 0.0, %v2576
      %v2578 = vpop.f32.mrb[0].mxu0
      %v2579 = vpop.f32.mrb[0].mxu0
      %v2580 = vadd.f32 0.0, %v2579
      %v2581 = vpop.f32.mrb[0].mxu0
      %2582 = vmatprep.mubr.bf16.mxu0 0
      %2583 = vmatmul.mubr.bf16.gmra.mrb[0].mxu0 %v2372
      %v2584 = vpop.f32.mrb[0].mxu0
      %v2585 = vadd.f32 0.0, %v2584
      %v2586 = vpop.f32.mrb[0].mxu0
      %v2587 = vpop.f32.mrb[0].mxu0
      %v2588 = vadd.f32 0.0, %v2587
      %v2589 = vpop.f32.mrb[0].mxu0
      %2590 = vmatprep.mubr.bf16.mxu0 0
      %2591 = vmatmul.mubr.bf16.gmra.mrb[0].mxu0 %v2375
      %v2592 = vpop.f32.mrb[0].mxu0
      %v2593 = vadd.f32 0.0, %v2592
      %v2594 = vpop.f32.mrb[0].mxu0
      %v2595 = vpop.f32.mrb[0].mxu0
      %v2596 = vadd.f32 0.0, %v2595
      %v2597 = vpop.f32.mrb[0].mxu0
      %2598 = vmatprep.mubr.bf16.mxu0 0
      %2599 = vmatmul.mubr.bf16.gmra.mrb[0].mxu0 %v2378
      %v2600 = vpop.f32.mrb[0].mxu0
      %v2601 = vadd.f32 0.0, %v2600
      %v2602 = vpop.f32.mrb[0].mxu0
      %v2603 = vpop.f32.mrb[0].mxu0
      %v2604 = vadd.f32 0.0, %v2603
      %v2605 = vpop.f32.mrb[0].mxu0
      %2606 = vmatprep.mubr.bf16.mxu0 0
      %2607 = vmatmul.mubr.bf16.gmra.mrb[0].mxu0 %v2381
      %v2608 = vpop.f32.mrb[0].mxu0
      %v2609 = vadd.f32 0.0, %v2608
      %v2610 = vpop.f32.mrb[0].mxu0
      %v2611 = vpop.f32.mrb[0].mxu0
      %v2612 = vadd.f32 0.0, %v2611
      %v2613 = vpop.f32.mrb[0].mxu0
      %2614 = vmatprep.mubr.bf16.mxu0 0
      %2615 = vmatmul.mubr.bf16.gmra.mrb[0].mxu0 %v2384
      %v2616 = vpop.f32.mrb[0].mxu0
      %v2617 = vadd.f32 0.0, %v2616
      %v2618 = vpop.f32.mrb[0].mxu0
      %v2619 = vpop.f32.mrb[0].mxu0
      %v2620 = vadd.f32 0.0, %v2619
      %v2621 = vpop.f32.mrb[0].mxu0
      %2622 = vmatprep.mubr.bf16.mxu0 0
      %2623 = vmatmul.mubr.bf16.gmra.mrb[0].mxu0 %v2387
      %v2624 = vpop.f32.mrb[0].mxu0
      %v2625 = vadd.f32 0.0, %v2624
      %v2626 = vpop.f32.mrb[0].mxu0
      %v2627 = vpop.f32.mrb[0].mxu0
      %v2628 = vadd.f32 0.0, %v2627
      %v2629 = vpop.f32.mrb[0].mxu0
      %2630 = vmatprep.mubr.bf16.mxu0 0
      %2631 = vmatmul.mubr.bf16.gmra.mrb[0].mxu0 %v2390
      %v2632 = vpop.f32.mrb[0].mxu0
      %v2633 = vadd.f32 0.0, %v2632
      %v2634 = vpop.f32.mrb[0].mxu0
      %v2635 = vpop.f32.mrb[0].mxu0
      %v2636 = vadd.f32 0.0, %v2635
      %v2637 = vpop.f32.mrb[0].mxu0
      %2638 = vmatprep.mubr.bf16.mxu0 0
      %2639 = vmatmul.mubr.bf16.gmra.mrb[0].mxu0 %v2393
      %v2640 = vpop.f32.mrb[0].mxu0
      %v2641 = vadd.f32 0.0, %v2640
      %v2642 = vpop.f32.mrb[0].mxu0
      %v2643 = vpop.f32.mrb[0].mxu0
      %v2644 = vadd.f32 0.0, %v2643
      %v2645 = vpop.f32.mrb[0].mxu0
      %2646 = vmatprep.mubr.bf16.mxu0 0
      %2647 = vmatmul.mubr.bf16.gmra.mrb[0].mxu0 %v2537
      %v2648 = vpop.f32.mrb[0].mxu0
      %v2649 = vadd.f32 0.0, %v2648
      %v2650 = vpop.f32.mrb[0].mxu0
      %v2651 = vpop.f32.mrb[0].mxu0
      %v2652 = vadd.f32 0.0, %v2651
      %v2653 = vpop.f32.mrb[0].mxu0
      %2654 = vdwg.mxu0
      %v2655 = vadd.f32 %v2511, %v2577
      %v2656 = vadd.f32 %v2512, %v2580
      %v2657 = vadd.f32 %v2513, %v2585
      %v2658 = vadd.f32 %v2514, %v2588
      %v2659 = vadd.f32 %v2515, %v2593
      %v2660 = vadd.f32 %v2516, %v2596
      %v2661 = vadd.f32 %v2517, %v2601
      %v2662 = vadd.f32 %v2518, %v2604
      %v2663 = vadd.f32 %v2519, %v2609
      %v2664 = vadd.f32 %v2520, %v2612
      %v2665 = vadd.f32 %v2521, %v2617
      %v2666 = vadd.f32 %v2522, %v2620
      %v2667 = vadd.f32 %v2523, %v2625
      %v2668 = vadd.f32 %v2524, %v2628
      %v2669 = vadd.f32 %v2525, %v2633
      %v2670 = vadd.f32 %v2526, %v2636
      %v2671 = vadd.f32 %v2527, %v2641
      %v2672 = vadd.f32 %v2528, %v2644
      %v2673 = vadd.f32 %v2529, %v2649
      %v2674 = vadd.f32 %v2530, %v2652
      %s2675 = scalar_lea.vmem %s1, 16
      %v2676 = vld [vmem:[%s2675] sm:$0x3]
      %v2677 = vunpack.c.l.b16 %v2329
      %v2678 = vunpack.c.l.b16 %v2332
      %v2679 = vpack.c.b16 %v2678, %v2677
      %v2681 = vsel %vm967, %v2679, 0
      %v2684 = vsel %vm998, %v2676, 0
      %2686 = vmatprep.subr.bf16.mxu0 0
      %2687 = vmatpush1.bf16.msra.mxu0 %v2684
      %2688 = vmatprep.subr.bf16.mxu0 0
      %2689 = vmatpush1.bf16.msra.mxu0 0
      %2690 = vmatprep.subr.bf16.mxu0 0
      %2691 = vmatpush1.bf16.msra.mxu0 0
      %2692 = vmatprep.subr.bf16.mxu0 0
      %2693 = vmatpush1.bf16.msra.mxu0 0
      %2694 = vmatprep.subr.bf16.mxu0 0
      %2695 = vmatpush1.bf16.msra.mxu0 0
      %2696 = vmatprep.subr.bf16.mxu0 0
      %2697 = vmatpush1.bf16.msra.mxu0 0
      %2698 = vmatprep.subr.bf16.mxu0 0
      %2699 = vmatpush1.bf16.msra.mxu0 0
      %2700 = vmatprep.subr.bf16.mxu0 0
      %2701 = vmatpush1.bf16.msra.mxu0 0
      %2702 = vmatprep.subr.bf16.mxu0 0
      %2703 = vmatpush1.bf16.msra.mxu0 0
      %2704 = vmatprep.subr.bf16.mxu0 0
      %2705 = vmatpush1.bf16.msra.mxu0 0
      %2706 = vmatprep.subr.bf16.mxu0 0
      %2707 = vmatpush1.bf16.msra.mxu0 0
      %2708 = vmatprep.subr.bf16.mxu0 0
      %2709 = vmatpush1.bf16.msra.mxu0 0
      %2710 = vmatprep.subr.bf16.mxu0 0
      %2711 = vmatpush1.bf16.msra.mxu0 0
      %2712 = vmatprep.subr.bf16.mxu0 0
      %2713 = vmatpush1.bf16.msra.mxu0 0
      %2714 = vmatprep.subr.bf16.mxu0 0
      %2715 = vmatpush1.bf16.msra.mxu0 0
      %2716 = vmatprep.subr.bf16.mxu0 0
      %2717 = vmatpush1.bf16.msra.mxu0 0
      %2718 = vmatprep.mubr.bf16.mxu0 0
      %2719 = vmatmul.mubr.bf16.gmra.mrb[0].mxu0 %v2372
      %v2720 = vpop.f32.mrb[0].mxu0
      %v2721 = vadd.f32 0.0, %v2720
      %v2722 = vpop.f32.mrb[0].mxu0
      %v2723 = vpop.f32.mrb[0].mxu0
      %v2724 = vadd.f32 0.0, %v2723
      %v2725 = vpop.f32.mrb[0].mxu0
      %2726 = vmatprep.mubr.bf16.mxu0 0
      %2727 = vmatmul.mubr.bf16.gmra.mrb[0].mxu0 %v2375
      %v2728 = vpop.f32.mrb[0].mxu0
      %v2729 = vadd.f32 0.0, %v2728
      %v2730 = vpop.f32.mrb[0].mxu0
      %v2731 = vpop.f32.mrb[0].mxu0
      %v2732 = vadd.f32 0.0, %v2731
      %v2733 = vpop.f32.mrb[0].mxu0
      %2734 = vmatprep.mubr.bf16.mxu0 0
      %2735 = vmatmul.mubr.bf16.gmra.mrb[0].mxu0 %v2378
      %v2736 = vpop.f32.mrb[0].mxu0
      %v2737 = vadd.f32 0.0, %v2736
      %v2738 = vpop.f32.mrb[0].mxu0
      %v2739 = vpop.f32.mrb[0].mxu0
      %v2740 = vadd.f32 0.0, %v2739
      %v2741 = vpop.f32.mrb[0].mxu0
      %2742 = vmatprep.mubr.bf16.mxu0 0
      %2743 = vmatmul.mubr.bf16.gmra.mrb[0].mxu0 %v2381
      %v2744 = vpop.f32.mrb[0].mxu0
      %v2745 = vadd.f32 0.0, %v2744
      %v2746 = vpop.f32.mrb[0].mxu0
      %v2747 = vpop.f32.mrb[0].mxu0
      %v2748 = vadd.f32 0.0, %v2747
      %v2749 = vpop.f32.mrb[0].mxu0
      %2750 = vmatprep.mubr.bf16.mxu0 0
      %2751 = vmatmul.mubr.bf16.gmra.mrb[0].mxu0 %v2384
      %v2752 = vpop.f32.mrb[0].mxu0
      %v2753 = vadd.f32 0.0, %v2752
      %v2754 = vpop.f32.mrb[0].mxu0
      %v2755 = vpop.f32.mrb[0].mxu0
      %v2756 = vadd.f32 0.0, %v2755
      %v2757 = vpop.f32.mrb[0].mxu0
      %2758 = vmatprep.mubr.bf16.mxu0 0
      %2759 = vmatmul.mubr.bf16.gmra.mrb[0].mxu0 %v2387
      %v2760 = vpop.f32.mrb[0].mxu0
      %v2761 = vadd.f32 0.0, %v2760
      %v2762 = vpop.f32.mrb[0].mxu0
      %v2763 = vpop.f32.mrb[0].mxu0
      %v2764 = vadd.f32 0.0, %v2763
      %v2765 = vpop.f32.mrb[0].mxu0
      %2766 = vmatprep.mubr.bf16.mxu0 0
      %2767 = vmatmul.mubr.bf16.gmra.mrb[0].mxu0 %v2390
      %v2768 = vpop.f32.mrb[0].mxu0
      %v2769 = vadd.f32 0.0, %v2768
      %v2770 = vpop.f32.mrb[0].mxu0
      %v2771 = vpop.f32.mrb[0].mxu0
      %v2772 = vadd.f32 0.0, %v2771
      %v2773 = vpop.f32.mrb[0].mxu0
      %2774 = vmatprep.mubr.bf16.mxu0 0
      %2775 = vmatmul.mubr.bf16.gmra.mrb[0].mxu0 %v2393
      %v2776 = vpop.f32.mrb[0].mxu0
      %v2777 = vadd.f32 0.0, %v2776
      %v2778 = vpop.f32.mrb[0].mxu0
      %v2779 = vpop.f32.mrb[0].mxu0
      %v2780 = vadd.f32 0.0, %v2779
      %v2781 = vpop.f32.mrb[0].mxu0
      %2782 = vmatprep.mubr.bf16.mxu0 0
      %2783 = vmatmul.mubr.bf16.gmra.mrb[0].mxu0 %v2537
      %v2784 = vpop.f32.mrb[0].mxu0
      %v2785 = vadd.f32 0.0, %v2784
      %v2786 = vpop.f32.mrb[0].mxu0
      %v2787 = vpop.f32.mrb[0].mxu0
      %v2788 = vadd.f32 0.0, %v2787
      %v2789 = vpop.f32.mrb[0].mxu0
      %2790 = vmatprep.mubr.bf16.mxu0 0
      %2791 = vmatmul.mubr.bf16.gmra.mrb[0].mxu0 %v2681
      %v2792 = vpop.f32.mrb[0].mxu0
      %v2793 = vadd.f32 0.0, %v2792
      %v2794 = vpop.f32.mrb[0].mxu0
      %v2795 = vpop.f32.mrb[0].mxu0
      %v2796 = vadd.f32 0.0, %v2795
      %v2797 = vpop.f32.mrb[0].mxu0
      %2798 = vdwg.mxu0
      %v2799 = vadd.f32 %v2655, %v2721
      %v2800 = vadd.f32 %v2656, %v2724
      %v2801 = vadd.f32 %v2657, %v2729
      %v2802 = vadd.f32 %v2658, %v2732
      %v2803 = vadd.f32 %v2659, %v2737
      %v2804 = vadd.f32 %v2660, %v2740
      %v2805 = vadd.f32 %v2661, %v2745
      %v2806 = vadd.f32 %v2662, %v2748
      %v2807 = vadd.f32 %v2663, %v2753
      %v2808 = vadd.f32 %v2664, %v2756
      %v2809 = vadd.f32 %v2665, %v2761
      %v2810 = vadd.f32 %v2666, %v2764
      %v2811 = vadd.f32 %v2667, %v2769
      %v2812 = vadd.f32 %v2668, %v2772
      %v2813 = vadd.f32 %v2669, %v2777
      %v2814 = vadd.f32 %v2670, %v2780
      %v2815 = vadd.f32 %v2671, %v2785
      %v2816 = vadd.f32 %v2672, %v2788
      %v2817 = vadd.f32 %v2673, %v2793
      %v2818 = vadd.f32 %v2674, %v2796
      %v2819 = vld [vmem:[%s2] sm:$0x1]
      %v2821 = vlaneseq
      %v2822 = vshrl.u32 %v2821, 7
      %v2823 = vsub.s32 0, %v2822
      %v2824 = vrot.slane %v2819, %v2823
      %v2826 = vadd.f32 %v2799, %v2824
      %v2827 = vadd.f32 %v2800, %v2824
      %v2828 = vadd.f32 %v2801, %v2824
      %v2829 = vadd.f32 %v2802, %v2824
      %v2830 = vadd.f32 %v2803, %v2824
      %v2831 = vadd.f32 %v2804, %v2824
      %v2832 = vadd.f32 %v2805, %v2824
      %v2833 = vadd.f32 %v2806, %v2824
      %v2834 = vadd.f32 %v2807, %v2824
      %v2835 = vadd.f32 %v2808, %v2824
      %v2836 = vadd.f32 %v2809, %v2824
      %v2837 = vadd.f32 %v2810, %v2824
      %v2838 = vadd.f32 %v2811, %v2824
      %v2839 = vadd.f32 %v2812, %v2824
      %v2840 = vadd.f32 %v2813, %v2824
      %v2841 = vadd.f32 %v2814, %v2824
      %v2842 = vadd.f32 %v2815, %v2824
      %v2843 = vadd.f32 %v2816, %v2824
      %v2844 = vadd.f32 %v2817, %v2824
      %v2845 = vadd.f32 %v2818, %v2824
      %v2846 = vmax.f32 %v2826, 0.0
      %v2847 = vmax.f32 %v2827, 0.0
      %v2848 = vmax.f32 %v2828, 0.0
      %v2849 = vmax.f32 %v2829, 0.0
      %v2850 = vmax.f32 %v2830, 0.0
      %v2851 = vmax.f32 %v2831, 0.0
      %v2852 = vmax.f32 %v2832, 0.0
      %v2853 = vmax.f32 %v2833, 0.0
      %v2854 = vmax.f32 %v2834, 0.0
      %v2855 = vmax.f32 %v2835, 0.0
      %v2856 = vmax.f32 %v2836, 0.0
      %v2857 = vmax.f32 %v2837, 0.0
      %v2858 = vmax.f32 %v2838, 0.0
      %v2859 = vmax.f32 %v2839, 0.0
      %v2860 = vmax.f32 %v2840, 0.0
      %v2861 = vmax.f32 %v2841, 0.0
      %v2862 = vmax.f32 %v2842, 0.0
      %v2863 = vmax.f32 %v2843, 0.0
      %v2864 = vmax.f32 %v2844, 0.0
      %v2865 = vmax.f32 %v2845, 0.0
      %s2866 = ssub.s32 %s886, 1
      %v2867 = vstv %s2866
      %v2868 = vadd.s32 %v2867, 1
      %v2869 = vadd.s32 %v2867, 2
      %v2870 = vadd.s32 %v2867, 3
      %v2871 = vadd.s32 %v2867, 4
      %v2872 = vadd.s32 %v2867, 5
      %v2873 = vadd.s32 %v2867, 6
      %v2874 = vadd.s32 %v2867, 7
      %v2875 = vadd.s32 %v2867, 8
      %v2876 = vadd.s32 %v2867, 9
      %vm2877 = vcmp.ge.s32.totalorder %v2867, 0
      %vm2878 = vcmp.ge.s32.totalorder %v2868, 0
      %vm2879 = vcmp.ge.s32.totalorder %v2869, 0
      %vm2880 = vcmp.ge.s32.totalorder %v2870, 0
      %vm2881 = vcmp.ge.s32.totalorder %v2871, 0
      %vm2882 = vcmp.ge.s32.totalorder %v2872, 0
      %vm2883 = vcmp.ge.s32.totalorder %v2873, 0
      %vm2884 = vcmp.ge.s32.totalorder %v2874, 0
      %vm2885 = vcmp.ge.s32.totalorder %v2875, 0
      %vm2886 = vcmp.ge.s32.totalorder %v2876, 0
      %vm2887 = vcmp.lt.s32.totalorder %v2867, 16
      %vm2888 = vcmp.lt.s32.totalorder %v2868, 16
      %vm2889 = vcmp.lt.s32.totalorder %v2869, 16
      %vm2890 = vcmp.lt.s32.totalorder %v2870, 16
      %vm2891 = vcmp.lt.s32.totalorder %v2871, 16
      %vm2892 = vcmp.lt.s32.totalorder %v2872, 16
      %vm2893 = vcmp.lt.s32.totalorder %v2873, 16
      %vm2894 = vcmp.lt.s32.totalorder %v2874, 16
      %vm2895 = vcmp.lt.s32.totalorder %v2875, 16
      %vm2896 = vcmp.lt.s32.totalorder %v2876, 16
      %vm2897 = vmand %vm2877, %vm2887
      %vm2898 = vmand %vm2878, %vm2888
      %vm2899 = vmand %vm2879, %vm2889
      %vm2900 = vmand %vm2880, %vm2890
      %vm2901 = vmand %vm2881, %vm2891
      %vm2902 = vmand %vm2882, %vm2892
      %vm2903 = vmand %vm2883, %vm2893
      %vm2904 = vmand %vm2884, %vm2894
      %vm2905 = vmand %vm2885, %vm2895
      %vm2906 = vmand %vm2886, %vm2896
      %v2907 = vsel %vm2897, 1, 0
      %v2908 = vsel %vm2898, 1, 0
      %v2909 = vsel %vm2899, 1, 0
      %v2910 = vsel %vm2900, 1, 0
      %v2911 = vsel %vm2901, 1, 0
      %v2912 = vsel %vm2902, 1, 0
      %v2913 = vsel %vm2903, 1, 0
      %v2914 = vsel %vm2904, 1, 0
      %v2915 = vsel %vm2905, 1, 0
      %v2916 = vsel %vm2906, 1, 0
      %vm2917 = vcmp.eq.s32.totalorder %v2907, 1
      %vm2918 = vcmp.eq.s32.totalorder %v2908, 1
      %vm2919 = vcmp.eq.s32.totalorder %v2909, 1
      %vm2920 = vcmp.eq.s32.totalorder %v2910, 1
      %vm2921 = vcmp.eq.s32.totalorder %v2911, 1
      %vm2922 = vcmp.eq.s32.totalorder %v2912, 1
      %vm2923 = vcmp.eq.s32.totalorder %v2913, 1
      %vm2924 = vcmp.eq.s32.totalorder %v2914, 1
      %vm2925 = vcmp.eq.s32.totalorder %v2915, 1
      %vm2926 = vcmp.eq.s32.totalorder %v2916, 1
      %v2927 = vsel %vm2917, %v2846, 0.0
      %v2928 = vsel %vm2917, %v2847, 0.0
      %v2929 = vsel %vm2918, %v2848, 0.0
      %v2930 = vsel %vm2918, %v2849, 0.0
      %v2931 = vsel %vm2919, %v2850, 0.0
      %v2932 = vsel %vm2919, %v2851, 0.0
      %v2933 = vsel %vm2920, %v2852, 0.0
      %v2934 = vsel %vm2920, %v2853, 0.0
      %v2935 = vsel %vm2921, %v2854, 0.0
      %v2936 = vsel %vm2921, %v2855, 0.0
      %v2937 = vsel %vm2922, %v2856, 0.0
      %v2938 = vsel %vm2922, %v2857, 0.0
      %v2939 = vsel %vm2923, %v2858, 0.0
      %v2940 = vsel %vm2923, %v2859, 0.0
      %v2941 = vsel %vm2924, %v2860, 0.0
      %v2942 = vsel %vm2924, %v2861, 0.0
      %v2943 = vsel %vm2925, %v2862, 0.0
      %v2944 = vsel %vm2925, %v2863, 0.0
      %v2945 = vsel %vm2926, %v2864, 0.0
      %v2946 = vsel %vm2926, %v2865, 0.0
      %vm2947 = vcmask 24576
      %vm2948 = vsmask.f32 256
      %vm2949 = vmand %vm2947, %vm2948
      %v2950 = vld [vmem:[#allocation3] sm:$0x1]
      %v2951 = vsel %vm2949, 0, %v2950
      %2952 = vst [vmem:[#allocation3] sm:$0x1] %v2951
      %v2953 = vld [vmem:[#allocation3 + $0xc] sm:$0x1]
      %v2954 = vsel %vm2949, 0, %v2953
      %2955 = vst [vmem:[#allocation3 + $0xc] sm:$0x1] %v2954
      %v2956 = vld [vmem:[#allocation3 + $0x18] sm:$0x1]
      %v2957 = vsel %vm2949, 0, %v2956
      %2958 = vst [vmem:[#allocation3 + $0x18] sm:$0x1] %v2957
      %v2959 = vld [vmem:[#allocation3 + $0x24] sm:$0x1]
      %v2960 = vsel %vm2949, 0, %v2959
      %2961 = vst [vmem:[#allocation3 + $0x24] sm:$0x1] %v2960
      %v2962 = vld [vmem:[#allocation3 + $0x30] sm:$0x1]
      %v2963 = vsel %vm2949, 0, %v2962
      %2964 = vst [vmem:[#allocation3 + $0x30] sm:$0x1] %v2963
      %v2965 = vld [vmem:[#allocation3 + $0x3c] sm:$0x1]
      %v2966 = vsel %vm2949, 0, %v2965
      %2967 = vst [vmem:[#allocation3 + $0x3c] sm:$0x1] %v2966
      %v2968 = vld [vmem:[#allocation3 + $0x48] sm:$0x1]
      %v2969 = vsel %vm2949, 0, %v2968
      %2970 = vst [vmem:[#allocation3 + $0x48] sm:$0x1] %v2969
      %v2971 = vld [vmem:[#allocation3 + $0x54] sm:$0x1]
      %v2972 = vsel %vm2949, 0, %v2971
      %2973 = vst [vmem:[#allocation3 + $0x54] sm:$0x1] %v2972
      %v2974 = vld [vmem:[#allocation3 + $0x60] sm:$0x1]
      %v2975 = vsel %vm2949, 0, %v2974
      %2976 = vst [vmem:[#allocation3 + $0x60] sm:$0x1] %v2975
      %v2977 = vld [vmem:[#allocation3 + $0x6c] sm:$0x1]
      %v2978 = vsel %vm2949, 0, %v2977
      %2979 = vst [vmem:[#allocation3 + $0x6c] sm:$0x1] %v2978
      %vm2980 = vsmask.f32 7938
      %vm2981 = vmand %vm2947, %vm2980
      %v2982 = vld [vmem:[#allocation3 + $0x8] sm:$0x1]
      %v2983 = vsel %vm2981, 0, %v2982
      %2984 = vst [vmem:[#allocation3 + $0x8] sm:$0x1] %v2983
      %v2985 = vld [vmem:[#allocation3 + $0x14] sm:$0x1]
      %v2986 = vsel %vm2981, 0, %v2985
      %2987 = vst [vmem:[#allocation3 + $0x14] sm:$0x1] %v2986
      %v2988 = vld [vmem:[#allocation3 + $0x20] sm:$0x1]
      %v2989 = vsel %vm2981, 0, %v2988
      %2990 = vst [vmem:[#allocation3 + $0x20] sm:$0x1] %v2989
      %v2991 = vld [vmem:[#allocation3 + $0x2c] sm:$0x1]
      %v2992 = vsel %vm2981, 0, %v2991
      %2993 = vst [vmem:[#allocation3 + $0x2c] sm:$0x1] %v2992
      %v2994 = vld [vmem:[#allocation3 + $0x38] sm:$0x1]
      %v2995 = vsel %vm2981, 0, %v2994
      %2996 = vst [vmem:[#allocation3 + $0x38] sm:$0x1] %v2995
      %v2997 = vld [vmem:[#allocation3 + $0x44] sm:$0x1]
      %v2998 = vsel %vm2981, 0, %v2997
      %2999 = vst [vmem:[#allocation3 + $0x44] sm:$0x1] %v2998
      %v3000 = vld [vmem:[#allocation3 + $0x50] sm:$0x1]
      %v3001 = vsel %vm2981, 0, %v3000
      %3002 = vst [vmem:[#allocation3 + $0x50] sm:$0x1] %v3001
      %v3003 = vld [vmem:[#allocation3 + $0x5c] sm:$0x1]
      %v3004 = vsel %vm2981, 0, %v3003
      %3005 = vst [vmem:[#allocation3 + $0x5c] sm:$0x1] %v3004
      %v3006 = vld [vmem:[#allocation3 + $0x68] sm:$0x1]
      %v3007 = vsel %vm2981, 0, %v3006
      %3008 = vst [vmem:[#allocation3 + $0x68] sm:$0x1] %v3007
      %v3009 = vld [vmem:[#allocation3 + $0x74] sm:$0x1]
      %v3010 = vsel %vm2981, 0, %v3009
      %3011 = vst [vmem:[#allocation3 + $0x74] sm:$0x1] %v3010
      %v3012 = vpack.c.bf16 %v2928, %v2927
      %v3013 = vpack.c.bf16 %v2930, %v2929
      %v3014 = vpack.c.bf16 %v2932, %v2931
      %v3015 = vpack.c.bf16 %v2934, %v2933
      %v3016 = vpack.c.bf16 %v2936, %v2935
      %v3017 = vpack.c.bf16 %v2938, %v2937
      %v3018 = vpack.c.bf16 %v2940, %v2939
      %v3019 = vpack.c.bf16 %v2942, %v2941
      %v3020 = vpack.c.bf16 %v2944, %v2943
      %v3021 = vpack.c.bf16 %v2946, %v2945
      %v3032 = vunpack.c.l.b16 %v3012
      %v3033 = vunpack.c.h.b16 %v3012
      %v3034 = vunpack.c.l.b16 %v3013
      %v3035 = vunpack.c.h.b16 %v3013
      %v3036 = vunpack.c.l.b16 %v3014
      %v3037 = vunpack.c.h.b16 %v3014
      %v3038 = vunpack.c.l.b16 %v3015
      %v3039 = vunpack.c.h.b16 %v3015
      %v3040 = vunpack.c.l.b16 %v3016
      %v3041 = vunpack.c.h.b16 %v3016
      %v3042 = vunpack.c.l.b16 %v3017
      %v3043 = vunpack.c.h.b16 %v3017
      %v3044 = vunpack.c.l.b16 %v3018
      %v3045 = vunpack.c.h.b16 %v3018
      %v3046 = vunpack.c.l.b16 %v3019
      %v3047 = vunpack.c.h.b16 %v3019
      %v3048 = vunpack.c.l.b16 %v3020
      %v3049 = vunpack.c.h.b16 %v3020
      %v3050 = vunpack.c.l.b16 %v3021
      %v3051 = vunpack.c.h.b16 %v3021
      %v3052 = vpack.c.b16 %v3032, %v3032
      %v3053 = vpack.c.b16 %v3033, %v3033
      %v3054 = vpack.c.b16 %v3034, %v3034
      %v3055 = vpack.c.b16 %v3035, %v3035
      %v3056 = vpack.c.b16 %v3036, %v3036
      %v3057 = vpack.c.b16 %v3037, %v3037
      %v3058 = vpack.c.b16 %v3038, %v3038
      %v3059 = vpack.c.b16 %v3039, %v3039
      %v3060 = vpack.c.b16 %v3040, %v3040
      %v3061 = vpack.c.b16 %v3041, %v3041
      %v3062 = vpack.c.b16 %v3042, %v3042
      %v3063 = vpack.c.b16 %v3043, %v3043
      %v3064 = vpack.c.b16 %v3044, %v3044
      %v3065 = vpack.c.b16 %v3045, %v3045
      %v3066 = vpack.c.b16 %v3046, %v3046
      %v3067 = vpack.c.b16 %v3047, %v3047
      %v3068 = vpack.c.b16 %v3048, %v3048
      %v3069 = vpack.c.b16 %v3049, %v3049
      %v3070 = vpack.c.b16 %v3050, %v3050
      %v3071 = vpack.c.b16 %v3051, %v3051
      %vm3072 = vsmask.f32 4368
      %vm3073 = vmor %vm2948, %vm3072
      %v3075 = vshrl.u32 %v3052, 16
      %v3077 = vrot.slane %v3075, 7
      %v3078 = vshll.u32 %v3052, 16
      %v3080 = vor.u32 %v3077, %v3078
      %v3081 = vrot.slane %v3077, 4
      %v3083 = vshrl.u32 %v3053, 16
      %v3085 = vrot.slane %v3083, 7
      %v3086 = vshll.u32 %v3053, 16
      %v3088 = vor.u32 %v3085, %v3086
      %v3089 = vsel %vm3073, %v3081, %v3088
      %v3090 = vrot.slane %v3085, 4
      %v3092 = vshrl.u32 %v3054, 16
      %v3094 = vrot.slane %v3092, 7
      %v3095 = vshll.u32 %v3054, 16
      %v3097 = vor.u32 %v3094, %v3095
      %v3098 = vrot.slane %v3094, 4
      %v3100 = vshrl.u32 %v3055, 16
      %v3102 = vrot.slane %v3100, 7
      %v3103 = vshll.u32 %v3055, 16
      %v3105 = vor.u32 %v3102, %v3103
      %v3106 = vsel %vm3073, %v3098, %v3105
      %v3107 = vrot.slane %v3102, 4
      %v3109 = vshrl.u32 %v3056, 16
      %v3111 = vrot.slane %v3109, 7
      %v3112 = vshll.u32 %v3056, 16
      %v3114 = vor.u32 %v3111, %v3112
      %v3115 = vrot.slane %v3111, 4
      %v3117 = vshrl.u32 %v3057, 16
      %v3119 = vrot.slane %v3117, 7
      %v3120 = vshll.u32 %v3057, 16
      %v3122 = vor.u32 %v3119, %v3120
      %v3123 = vsel %vm3073, %v3115, %v3122
      %v3124 = vrot.slane %v3119, 4
      %v3126 = vshrl.u32 %v3058, 16
      %v3128 = vrot.slane %v3126, 7
      %v3129 = vshll.u32 %v3058, 16
      %v3131 = vor.u32 %v3128, %v3129
      %v3132 = vrot.slane %v3128, 4
      %v3134 = vshrl.u32 %v3059, 16
      %v3136 = vrot.slane %v3134, 7
      %v3137 = vshll.u32 %v3059, 16
      %v3139 = vor.u32 %v3136, %v3137
      %v3140 = vsel %vm3073, %v3132, %v3139
      %v3141 = vrot.slane %v3136, 4
      %v3143 = vshrl.u32 %v3060, 16
      %v3145 = vrot.slane %v3143, 7
      %v3146 = vshll.u32 %v3060, 16
      %v3148 = vor.u32 %v3145, %v3146
      %v3149 = vrot.slane %v3145, 4
      %v3151 = vshrl.u32 %v3061, 16
      %v3153 = vrot.slane %v3151, 7
      %v3154 = vshll.u32 %v3061, 16
      %v3156 = vor.u32 %v3153, %v3154
      %v3157 = vsel %vm3073, %v3149, %v3156
      %v3158 = vrot.slane %v3153, 4
      %v3160 = vshrl.u32 %v3062, 16
      %v3162 = vrot.slane %v3160, 7
      %v3163 = vshll.u32 %v3062, 16
      %v3165 = vor.u32 %v3162, %v3163
      %v3166 = vrot.slane %v3162, 4
      %v3168 = vshrl.u32 %v3063, 16
      %v3170 = vrot.slane %v3168, 7
      %v3171 = vshll.u32 %v3063, 16
      %v3173 = vor.u32 %v3170, %v3171
      %v3174 = vsel %vm3073, %v3166, %v3173
      %v3175 = vrot.slane %v3170, 4
      %v3177 = vshrl.u32 %v3064, 16
      %v3179 = vrot.slane %v3177, 7
      %v3180 = vshll.u32 %v3064, 16
      %v3182 = vor.u32 %v3179, %v3180
      %v3183 = vrot.slane %v3179, 4
      %v3185 = vshrl.u32 %v3065, 16
      %v3187 = vrot.slane %v3185, 7
      %v3188 = vshll.u32 %v3065, 16
      %v3190 = vor.u32 %v3187, %v3188
      %v3191 = vsel %vm3073, %v3183, %v3190
      %v3192 = vrot.slane %v3187, 4
      %v3194 = vshrl.u32 %v3066, 16
      %v3196 = vrot.slane %v3194, 7
      %v3197 = vshll.u32 %v3066, 16
      %v3199 = vor.u32 %v3196, %v3197
      %v3200 = vrot.slane %v3196, 4
      %v3202 = vshrl.u32 %v3067, 16
      %v3204 = vrot.slane %v3202, 7
      %v3205 = vshll.u32 %v3067, 16
      %v3207 = vor.u32 %v3204, %v3205
      %v3208 = vsel %vm3073, %v3200, %v3207
      %v3209 = vrot.slane %v3204, 4
      %v3211 = vshrl.u32 %v3068, 16
      %v3213 = vrot.slane %v3211, 7
      %v3214 = vshll.u32 %v3068, 16
      %v3216 = vor.u32 %v3213, %v3214
      %v3217 = vrot.slane %v3213, 4
      %v3219 = vshrl.u32 %v3069, 16
      %v3221 = vrot.slane %v3219, 7
      %v3222 = vshll.u32 %v3069, 16
      %v3224 = vor.u32 %v3221, %v3222
      %v3225 = vsel %vm3073, %v3217, %v3224
      %v3226 = vrot.slane %v3221, 4
      %v3228 = vshrl.u32 %v3070, 16
      %v3230 = vrot.slane %v3228, 7
      %v3231 = vshll.u32 %v3070, 16
      %v3233 = vor.u32 %v3230, %v3231
      %v3234 = vrot.slane %v3230, 4
      %v3236 = vshrl.u32 %v3071, 16
      %v3238 = vrot.slane %v3236, 7
      %v3239 = vshll.u32 %v3071, 16
      %v3241 = vor.u32 %v3238, %v3239
      %v3242 = vsel %vm3073, %v3234, %v3241
      %v3243 = vrot.slane %v3238, 4
      %vm3274 = vcmask 27648
      %vm3275 = vmand %vm3274, %vm2980
      %v3276 = vld [vmem:[#allocation3] sm:$0xf]
      %v3277 = vsel %vm3275, %v3080, %v3276
      %3278 = vst [vmem:[#allocation3] sm:$0xf] %v3277
      %vm3279 = vcmask 27648
      %3280 = vst.msk [vmem:[#allocation3 + $0x4] sm:$0xf] %vm3279, %v3089
      %v3281 = vld [vmem:[#allocation3 + $0x8] sm:$0x1]
      %v3282 = vsel %vm2949, %v3090, %v3281
      %3283 = vst [vmem:[#allocation3 + $0x8] sm:$0x1] %v3282
      %v3284 = vld [vmem:[#allocation3 + $0xc] sm:$0xf]
      %v3285 = vsel %vm3275, %v3097, %v3284
      %3286 = vst [vmem:[#allocation3 + $0xc] sm:$0xf] %v3285
      %3287 = vst.msk [vmem:[#allocation3 + $0x10] sm:$0xf] %vm3279, %v3106
      %v3288 = vld [vmem:[#allocation3 + $0x14] sm:$0x1]
      %v3289 = vsel %vm2949, %v3107, %v3288
      %3290 = vst [vmem:[#allocation3 + $0x14] sm:$0x1] %v3289
      %v3291 = vld [vmem:[#allocation3 + $0x18] sm:$0xf]
      %v3292 = vsel %vm3275, %v3114, %v3291
      %3293 = vst [vmem:[#allocation3 + $0x18] sm:$0xf] %v3292
      %3294 = vst.msk [vmem:[#allocation3 + $0x1c] sm:$0xf] %vm3279, %v3123
      %v3295 = vld [vmem:[#allocation3 + $0x20] sm:$0x1]
      %v3296 = vsel %vm2949, %v3124, %v3295
      %3297 = vst [vmem:[#allocation3 + $0x20] sm:$0x1] %v3296
      %v3298 = vld [vmem:[#allocation3 + $0x24] sm:$0xf]
      %v3299 = vsel %vm3275, %v3131, %v3298
      %3300 = vst [vmem:[#allocation3 + $0x24] sm:$0xf] %v3299
      %3301 = vst.msk [vmem:[#allocation3 + $0x28] sm:$0xf] %vm3279, %v3140
      %v3302 = vld [vmem:[#allocation3 + $0x2c] sm:$0x1]
      %v3303 = vsel %vm2949, %v3141, %v3302
      %3304 = vst [vmem:[#allocation3 + $0x2c] sm:$0x1] %v3303
      %v3305 = vld [vmem:[#allocation3 + $0x30] sm:$0xf]
      %v3306 = vsel %vm3275, %v3148, %v3305
      %3307 = vst [vmem:[#allocation3 + $0x30] sm:$0xf] %v3306
      %3308 = vst.msk [vmem:[#allocation3 + $0x34] sm:$0xf] %vm3279, %v3157
      %v3309 = vld [vmem:[#allocation3 + $0x38] sm:$0x1]
      %v3310 = vsel %vm2949, %v3158, %v3309
      %3311 = vst [vmem:[#allocation3 + $0x38] sm:$0x1] %v3310
      %v3312 = vld [vmem:[#allocation3 + $0x3c] sm:$0xf]
      %v3313 = vsel %vm3275, %v3165, %v3312
      %3314 = vst [vmem:[#allocation3 + $0x3c] sm:$0xf] %v3313
      %3315 = vst.msk [vmem:[#allocation3 + $0x40] sm:$0xf] %vm3279, %v3174
      %v3316 = vld [vmem:[#allocation3 + $0x44] sm:$0x1]
      %v3317 = vsel %vm2949, %v3175, %v3316
      %3318 = vst [vmem:[#allocation3 + $0x44] sm:$0x1] %v3317
      %v3319 = vld [vmem:[#allocation3 + $0x48] sm:$0xf]
      %v3320 = vsel %vm3275, %v3182, %v3319
      %3321 = vst [vmem:[#allocation3 + $0x48] sm:$0xf] %v3320
      %3322 = vst.msk [vmem:[#allocation3 + $0x4c] sm:$0xf] %vm3279, %v3191
      %v3323 = vld [vmem:[#allocation3 + $0x50] sm:$0x1]
      %v3324 = vsel %vm2949, %v3192, %v3323
      %3325 = vst [vmem:[#allocation3 + $0x50] sm:$0x1] %v3324
      %v3326 = vld [vmem:[#allocation3 + $0x54] sm:$0xf]
      %v3327 = vsel %vm3275, %v3199, %v3326
      %3328 = vst [vmem:[#allocation3 + $0x54] sm:$0xf] %v3327
      %3329 = vst.msk [vmem:[#allocation3 + $0x58] sm:$0xf] %vm3279, %v3208
      %v3330 = vld [vmem:[#allocation3 + $0x5c] sm:$0x1]
      %v3331 = vsel %vm2949, %v3209, %v3330
      %3332 = vst [vmem:[#allocation3 + $0x5c] sm:$0x1] %v3331
      %v3333 = vld [vmem:[#allocation3 + $0x60] sm:$0xf]
      %v3334 = vsel %vm3275, %v3216, %v3333
      %3335 = vst [vmem:[#allocation3 + $0x60] sm:$0xf] %v3334
      %3336 = vst.msk [vmem:[#allocation3 + $0x64] sm:$0xf] %vm3279, %v3225
      %v3337 = vld [vmem:[#allocation3 + $0x68] sm:$0x1]
      %v3338 = vsel %vm2949, %v3226, %v3337
      %3339 = vst [vmem:[#allocation3 + $0x68] sm:$0x1] %v3338
      %v3340 = vld [vmem:[#allocation3 + $0x6c] sm:$0xf]
      %v3341 = vsel %vm3275, %v3233, %v3340
      %3342 = vst [vmem:[#allocation3 + $0x6c] sm:$0xf] %v3341
      %3343 = vst.msk [vmem:[#allocation3 + $0x70] sm:$0xf] %vm3279, %v3242
      %v3344 = vld [vmem:[#allocation3 + $0x74] sm:$0x1]
      %v3345 = vsel %vm2949, %v3243, %v3344
      %3346 = vst [vmem:[#allocation3 + $0x74] sm:$0x1] %v3345
      %v3347 = vld [vmem:[#allocation3] sm:$0xf]
      %v3348 = vld [vmem:[#allocation3 + $0x4] sm:$0xf]
      %v3349 = vld [vmem:[#allocation3 + $0xc] sm:$0xf]
      %v3350 = vld [vmem:[#allocation3 + $0x10] sm:$0xf]
      %v3351 = vld [vmem:[#allocation3 + $0x18] sm:$0xf]
      %v3352 = vld [vmem:[#allocation3 + $0x1c] sm:$0xf]
      %v3353 = vld [vmem:[#allocation3 + $0x24] sm:$0xf]
      %v3354 = vld [vmem:[#allocation3 + $0x28] sm:$0xf]
      %v3355 = vld [vmem:[#allocation3 + $0x30] sm:$0xf]
      %v3356 = vld [vmem:[#allocation3 + $0x34] sm:$0xf]
      %v3357 = vld [vmem:[#allocation3 + $0x3c] sm:$0xf]
      %v3358 = vld [vmem:[#allocation3 + $0x40] sm:$0xf]
      %v3359 = vld [vmem:[#allocation3 + $0x48] sm:$0xf]
      %v3360 = vld [vmem:[#allocation3 + $0x4c] sm:$0xf]
      %v3361 = vld [vmem:[#allocation3 + $0x54] sm:$0xf]
      %v3362 = vld [vmem:[#allocation3 + $0x58] sm:$0xf]
      %v3363 = vld [vmem:[#allocation3 + $0x60] sm:$0xf]
      %v3364 = vld [vmem:[#allocation3 + $0x64] sm:$0xf]
      %v3365 = vld [vmem:[#allocation3 + $0x6c] sm:$0xf]
      %v3366 = vld [vmem:[#allocation3 + $0x70] sm:$0xf]
      %v3367 = vld [vmem:[%s3] sm:$0x3]
      %s3368 = scalar_lea.vmem %s3, 6
      %v3369 = vld [vmem:[%s3368] sm:$0x3]
      %v3386 = vunpack.c.l.b16 %v3349
      %v3387 = vunpack.c.l.b16 %v3350
      %v3388 = vunpack.c.l.b16 %v3351
      %v3389 = vunpack.c.l.b16 %v3352
      %v3390 = vunpack.c.l.b16 %v3353
      %v3391 = vunpack.c.l.b16 %v3354
      %v3392 = vunpack.c.l.b16 %v3355
      %v3393 = vunpack.c.l.b16 %v3356
      %v3394 = vunpack.c.l.b16 %v3357
      %v3395 = vunpack.c.l.b16 %v3358
      %v3396 = vunpack.c.l.b16 %v3359
      %v3397 = vunpack.c.l.b16 %v3360
      %v3398 = vunpack.c.l.b16 %v3361
      %v3399 = vunpack.c.l.b16 %v3362
      %v3400 = vunpack.c.l.b16 %v3363
      %v3401 = vunpack.c.l.b16 %v3364
      %v3402 = vpack.c.b16 %v3387, %v3386
      %v3403 = vpack.c.b16 %v3389, %v3388
      %v3404 = vpack.c.b16 %v3391, %v3390
      %v3405 = vpack.c.b16 %v3393, %v3392
      %v3406 = vpack.c.b16 %v3395, %v3394
      %v3407 = vpack.c.b16 %v3397, %v3396
      %v3408 = vpack.c.b16 %v3399, %v3398
      %v3409 = vpack.c.b16 %v3401, %v3400
      %v3411 = vsel %vm967, %v3402, 0
      %v3414 = vsel %vm967, %v3403, 0
      %v3417 = vsel %vm967, %v3404, 0
      %v3420 = vsel %vm967, %v3405, 0
      %v3423 = vsel %vm967, %v3406, 0
      %v3426 = vsel %vm967, %v3407, 0
      %v3429 = vsel %vm967, %v3408, 0
      %v3432 = vsel %vm967, %v3409, 0
      %v3435 = vsel %vm998, %v3369, 0
      %3437 = vmatprep.subr.bf16.mxu0 0
      %3438 = vmatpush1.bf16.msra.mxu0 %v3435
      %3439 = vmatprep.subr.bf16.mxu0 0
      %3440 = vmatpush1.bf16.msra.mxu0 0
      %3441 = vmatprep.subr.bf16.mxu0 0
      %3442 = vmatpush1.bf16.msra.mxu0 0
      %3443 = vmatprep.subr.bf16.mxu0 0
      %3444 = vmatpush1.bf16.msra.mxu0 0
      %3445 = vmatprep.subr.bf16.mxu0 0
      %3446 = vmatpush1.bf16.msra.mxu0 0
      %3447 = vmatprep.subr.bf16.mxu0 0
      %3448 = vmatpush1.bf16.msra.mxu0 0
      %3449 = vmatprep.subr.bf16.mxu0 0
      %3450 = vmatpush1.bf16.msra.mxu0 0
      %3451 = vmatprep.subr.bf16.mxu0 0
      %3452 = vmatpush1.bf16.msra.mxu0 0
      %3453 = vmatprep.subr.bf16.mxu0 0
      %3454 = vmatpush1.bf16.msra.mxu0 0
      %3455 = vmatprep.subr.bf16.mxu0 0
      %3456 = vmatpush1.bf16.msra.mxu0 0
      %3457 = vmatprep.subr.bf16.mxu0 0
      %3458 = vmatpush1.bf16.msra.mxu0 0
      %3459 = vmatprep.subr.bf16.mxu0 0
      %3460 = vmatpush1.bf16.msra.mxu0 0
      %3461 = vmatprep.subr.bf16.mxu0 0
      %3462 = vmatpush1.bf16.msra.mxu0 0
      %3463 = vmatprep.subr.bf16.mxu0 0
      %3464 = vmatpush1.bf16.msra.mxu0 0
      %3465 = vmatprep.subr.bf16.mxu0 0
      %3466 = vmatpush1.bf16.msra.mxu0 0
      %3467 = vmatprep.subr.bf16.mxu0 0
      %3468 = vmatpush1.bf16.msra.mxu0 0
      %3469 = vmatprep.mubr.bf16.mxu0 0
      %3470 = vmatmul.mubr.bf16.gmra.mrb[0].mxu0 %v3411
      %v3471 = vpop.f32.mrb[0].mxu0
      %v3472 = vadd.f32 0.0, %v3471
      %v3473 = vpop.f32.mrb[0].mxu0
      %v3474 = vpop.f32.mrb[0].mxu0
      %v3475 = vadd.f32 0.0, %v3474
      %v3476 = vpop.f32.mrb[0].mxu0
      %3477 = vmatprep.mubr.bf16.mxu0 0
      %3478 = vmatmul.mubr.bf16.gmra.mrb[0].mxu0 %v3414
      %v3479 = vpop.f32.mrb[0].mxu0
      %v3480 = vadd.f32 0.0, %v3479
      %v3481 = vpop.f32.mrb[0].mxu0
      %v3482 = vpop.f32.mrb[0].mxu0
      %v3483 = vadd.f32 0.0, %v3482
      %v3484 = vpop.f32.mrb[0].mxu0
      %3485 = vmatprep.mubr.bf16.mxu0 0
      %3486 = vmatmul.mubr.bf16.gmra.mrb[0].mxu0 %v3417
      %v3487 = vpop.f32.mrb[0].mxu0
      %v3488 = vadd.f32 0.0, %v3487
      %v3489 = vpop.f32.mrb[0].mxu0
      %v3490 = vpop.f32.mrb[0].mxu0
      %v3491 = vadd.f32 0.0, %v3490
      %v3492 = vpop.f32.mrb[0].mxu0
      %3493 = vmatprep.mubr.bf16.mxu0 0
      %3494 = vmatmul.mubr.bf16.gmra.mrb[0].mxu0 %v3420
      %v3495 = vpop.f32.mrb[0].mxu0
      %v3496 = vadd.f32 0.0, %v3495
      %v3497 = vpop.f32.mrb[0].mxu0
      %v3498 = vpop.f32.mrb[0].mxu0
      %v3499 = vadd.f32 0.0, %v3498
      %v3500 = vpop.f32.mrb[0].mxu0
      %3501 = vmatprep.mubr.bf16.mxu0 0
      %3502 = vmatmul.mubr.bf16.gmra.mrb[0].mxu0 %v3423
      %v3503 = vpop.f32.mrb[0].mxu0
      %v3504 = vadd.f32 0.0, %v3503
      %v3505 = vpop.f32.mrb[0].mxu0
      %v3506 = vpop.f32.mrb[0].mxu0
      %v3507 = vadd.f32 0.0, %v3506
      %v3508 = vpop.f32.mrb[0].mxu0
      %3509 = vmatprep.mubr.bf16.mxu0 0
      %3510 = vmatmul.mubr.bf16.gmra.mrb[0].mxu0 %v3426
      %v3511 = vpop.f32.mrb[0].mxu0
      %v3512 = vadd.f32 0.0, %v3511
      %v3513 = vpop.f32.mrb[0].mxu0
      %v3514 = vpop.f32.mrb[0].mxu0
      %v3515 = vadd.f32 0.0, %v3514
      %v3516 = vpop.f32.mrb[0].mxu0
      %3517 = vmatprep.mubr.bf16.mxu0 0
      %3518 = vmatmul.mubr.bf16.gmra.mrb[0].mxu0 %v3429
      %v3519 = vpop.f32.mrb[0].mxu0
      %v3520 = vadd.f32 0.0, %v3519
      %v3521 = vpop.f32.mrb[0].mxu0
      %v3522 = vpop.f32.mrb[0].mxu0
      %v3523 = vadd.f32 0.0, %v3522
      %v3524 = vpop.f32.mrb[0].mxu0
      %3525 = vmatprep.mubr.bf16.mxu0 0
      %3526 = vmatmul.mubr.bf16.gmra.mrb[0].mxu0 %v3432
      %v3527 = vpop.f32.mrb[0].mxu0
      %v3528 = vadd.f32 0.0, %v3527
      %v3529 = vpop.f32.mrb[0].mxu0
      %v3530 = vpop.f32.mrb[0].mxu0
      %v3531 = vadd.f32 0.0, %v3530
      %v3532 = vpop.f32.mrb[0].mxu0
      %3533 = vdwg.mxu0
      %v3536 = vunpack.c.l.b16 %v3347
      %v3537 = vunpack.c.l.b16 %v3348
      %v3538 = vpack.c.b16 %v3537, %v3536
      %v3540 = vsel %vm967, %v3538, 0
      %v3543 = vsel %vm998, %v3367, 0
      %3545 = vmatprep.subr.bf16.mxu0 0
      %3546 = vmatpush1.bf16.msra.mxu0 %v3543
      %3547 = vmatprep.subr.bf16.mxu0 0
      %3548 = vmatpush1.bf16.msra.mxu0 0
      %3549 = vmatprep.subr.bf16.mxu0 0
      %3550 = vmatpush1.bf16.msra.mxu0 0
      %3551 = vmatprep.subr.bf16.mxu0 0
      %3552 = vmatpush1.bf16.msra.mxu0 0
      %3553 = vmatprep.subr.bf16.mxu0 0
      %3554 = vmatpush1.bf16.msra.mxu0 0
      %3555 = vmatprep.subr.bf16.mxu0 0
      %3556 = vmatpush1.bf16.msra.mxu0 0
      %3557 = vmatprep.subr.bf16.mxu0 0
      %3558 = vmatpush1.bf16.msra.mxu0 0
      %3559 = vmatprep.subr.bf16.mxu0 0
      %3560 = vmatpush1.bf16.msra.mxu0 0
      %3561 = vmatprep.subr.bf16.mxu0 0
      %3562 = vmatpush1.bf16.msra.mxu0 0
      %3563 = vmatprep.subr.bf16.mxu0 0
      %3564 = vmatpush1.bf16.msra.mxu0 0
      %3565 = vmatprep.subr.bf16.mxu0 0
      %3566 = vmatpush1.bf16.msra.mxu0 0
      %3567 = vmatprep.subr.bf16.mxu0 0
      %3568 = vmatpush1.bf16.msra.mxu0 0
      %3569 = vmatprep.subr.bf16.mxu0 0
      %3570 = vmatpush1.bf16.msra.mxu0 0
      %3571 = vmatprep.subr.bf16.mxu0 0
      %3572 = vmatpush1.bf16.msra.mxu0 0
      %3573 = vmatprep.subr.bf16.mxu0 0
      %3574 = vmatpush1.bf16.msra.mxu0 0
      %3575 = vmatprep.subr.bf16.mxu0 0
      %3576 = vmatpush1.bf16.msra.mxu0 0
      %3577 = vmatprep.mubr.bf16.mxu0 0
      %3578 = vmatmul.mubr.bf16.gmra.mrb[0].mxu0 %v3540
      %v3579 = vpop.f32.mrb[0].mxu0
      %v3580 = vadd.f32 %v3472, %v3579
      %v3581 = vpop.f32.mrb[0].mxu0
      %v3582 = vpop.f32.mrb[0].mxu0
      %v3583 = vadd.f32 %v3475, %v3582
      %v3584 = vpop.f32.mrb[0].mxu0
      %3585 = vmatprep.mubr.bf16.mxu0 0
      %3586 = vmatmul.mubr.bf16.gmra.mrb[0].mxu0 %v3411
      %v3587 = vpop.f32.mrb[0].mxu0
      %v3588 = vadd.f32 %v3480, %v3587
      %v3589 = vpop.f32.mrb[0].mxu0
      %v3590 = vpop.f32.mrb[0].mxu0
      %v3591 = vadd.f32 %v3483, %v3590
      %v3592 = vpop.f32.mrb[0].mxu0
      %3593 = vmatprep.mubr.bf16.mxu0 0
      %3594 = vmatmul.mubr.bf16.gmra.mrb[0].mxu0 %v3414
      %v3595 = vpop.f32.mrb[0].mxu0
      %v3596 = vadd.f32 %v3488, %v3595
      %v3597 = vpop.f32.mrb[0].mxu0
      %v3598 = vpop.f32.mrb[0].mxu0
      %v3599 = vadd.f32 %v3491, %v3598
      %v3600 = vpop.f32.mrb[0].mxu0
      %3601 = vmatprep.mubr.bf16.mxu0 0
      %3602 = vmatmul.mubr.bf16.gmra.mrb[0].mxu0 %v3417
      %v3603 = vpop.f32.mrb[0].mxu0
      %v3604 = vadd.f32 %v3496, %v3603
      %v3605 = vpop.f32.mrb[0].mxu0
      %v3606 = vpop.f32.mrb[0].mxu0
      %v3607 = vadd.f32 %v3499, %v3606
      %v3608 = vpop.f32.mrb[0].mxu0
      %3609 = vmatprep.mubr.bf16.mxu0 0
      %3610 = vmatmul.mubr.bf16.gmra.mrb[0].mxu0 %v3420
      %v3611 = vpop.f32.mrb[0].mxu0
      %v3612 = vadd.f32 %v3504, %v3611
      %v3613 = vpop.f32.mrb[0].mxu0
      %v3614 = vpop.f32.mrb[0].mxu0
      %v3615 = vadd.f32 %v3507, %v3614
      %v3616 = vpop.f32.mrb[0].mxu0
      %3617 = vmatprep.mubr.bf16.mxu0 0
      %3618 = vmatmul.mubr.bf16.gmra.mrb[0].mxu0 %v3423
      %v3619 = vpop.f32.mrb[0].mxu0
      %v3620 = vadd.f32 %v3512, %v3619
      %v3621 = vpop.f32.mrb[0].mxu0
      %v3622 = vpop.f32.mrb[0].mxu0
      %v3623 = vadd.f32 %v3515, %v3622
      %v3624 = vpop.f32.mrb[0].mxu0
      %3625 = vmatprep.mubr.bf16.mxu0 0
      %3626 = vmatmul.mubr.bf16.gmra.mrb[0].mxu0 %v3426
      %v3627 = vpop.f32.mrb[0].mxu0
      %v3628 = vadd.f32 %v3520, %v3627
      %v3629 = vpop.f32.mrb[0].mxu0
      %v3630 = vpop.f32.mrb[0].mxu0
      %v3631 = vadd.f32 %v3523, %v3630
      %v3632 = vpop.f32.mrb[0].mxu0
      %3633 = vmatprep.mubr.bf16.mxu0 0
      %3634 = vmatmul.mubr.bf16.gmra.mrb[0].mxu0 %v3429
      %v3635 = vpop.f32.mrb[0].mxu0
      %v3636 = vadd.f32 %v3528, %v3635
      %v3637 = vpop.f32.mrb[0].mxu0
      %v3638 = vpop.f32.mrb[0].mxu0
      %v3639 = vadd.f32 %v3531, %v3638
      %v3640 = vpop.f32.mrb[0].mxu0
      %3641 = vdwg.mxu0
      %s3642 = scalar_lea.vmem %s3, 12
      %v3643 = vld [vmem:[%s3642] sm:$0x3]
      %v3646 = vunpack.c.l.b16 %v3365
      %v3647 = vunpack.c.l.b16 %v3366
      %v3648 = vpack.c.b16 %v3647, %v3646
      %v3650 = vsel %vm967, %v3648, 0
      %v3653 = vsel %vm998, %v3643, 0
      %3655 = vmatprep.subr.bf16.mxu0 0
      %3656 = vmatpush1.bf16.msra.mxu0 %v3653
      %3657 = vmatprep.subr.bf16.mxu0 0
      %3658 = vmatpush1.bf16.msra.mxu0 0
      %3659 = vmatprep.subr.bf16.mxu0 0
      %3660 = vmatpush1.bf16.msra.mxu0 0
      %3661 = vmatprep.subr.bf16.mxu0 0
      %3662 = vmatpush1.bf16.msra.mxu0 0
      %3663 = vmatprep.subr.bf16.mxu0 0
      %3664 = vmatpush1.bf16.msra.mxu0 0
      %3665 = vmatprep.subr.bf16.mxu0 0
      %3666 = vmatpush1.bf16.msra.mxu0 0
      %3667 = vmatprep.subr.bf16.mxu0 0
      %3668 = vmatpush1.bf16.msra.mxu0 0
      %3669 = vmatprep.subr.bf16.mxu0 0
      %3670 = vmatpush1.bf16.msra.mxu0 0
      %3671 = vmatprep.subr.bf16.mxu0 0
      %3672 = vmatpush1.bf16.msra.mxu0 0
      %3673 = vmatprep.subr.bf16.mxu0 0
      %3674 = vmatpush1.bf16.msra.mxu0 0
      %3675 = vmatprep.subr.bf16.mxu0 0
      %3676 = vmatpush1.bf16.msra.mxu0 0
      %3677 = vmatprep.subr.bf16.mxu0 0
      %3678 = vmatpush1.bf16.msra.mxu0 0
      %3679 = vmatprep.subr.bf16.mxu0 0
      %3680 = vmatpush1.bf16.msra.mxu0 0
      %3681 = vmatprep.subr.bf16.mxu0 0
      %3682 = vmatpush1.bf16.msra.mxu0 0
      %3683 = vmatprep.subr.bf16.mxu0 0
      %3684 = vmatpush1.bf16.msra.mxu0 0
      %3685 = vmatprep.subr.bf16.mxu0 0
      %3686 = vmatpush1.bf16.msra.mxu0 0
      %3687 = vmatprep.mubr.bf16.mxu0 0
      %3688 = vmatmul.mubr.bf16.gmra.mrb[0].mxu0 %v3414
      %v3689 = vpop.f32.mrb[0].mxu0
      %v3690 = vadd.f32 0.0, %v3689
      %v3691 = vpop.f32.mrb[0].mxu0
      %v3692 = vpop.f32.mrb[0].mxu0
      %v3693 = vadd.f32 0.0, %v3692
      %v3694 = vpop.f32.mrb[0].mxu0
      %3695 = vmatprep.mubr.bf16.mxu0 0
      %3696 = vmatmul.mubr.bf16.gmra.mrb[0].mxu0 %v3417
      %v3697 = vpop.f32.mrb[0].mxu0
      %v3698 = vadd.f32 0.0, %v3697
      %v3699 = vpop.f32.mrb[0].mxu0
      %v3700 = vpop.f32.mrb[0].mxu0
      %v3701 = vadd.f32 0.0, %v3700
      %v3702 = vpop.f32.mrb[0].mxu0
      %3703 = vmatprep.mubr.bf16.mxu0 0
      %3704 = vmatmul.mubr.bf16.gmra.mrb[0].mxu0 %v3420
      %v3705 = vpop.f32.mrb[0].mxu0
      %v3706 = vadd.f32 0.0, %v3705
      %v3707 = vpop.f32.mrb[0].mxu0
      %v3708 = vpop.f32.mrb[0].mxu0
      %v3709 = vadd.f32 0.0, %v3708
      %v3710 = vpop.f32.mrb[0].mxu0
      %3711 = vmatprep.mubr.bf16.mxu0 0
      %3712 = vmatmul.mubr.bf16.gmra.mrb[0].mxu0 %v3423
      %v3713 = vpop.f32.mrb[0].mxu0
      %v3714 = vadd.f32 0.0, %v3713
      %v3715 = vpop.f32.mrb[0].mxu0
      %v3716 = vpop.f32.mrb[0].mxu0
      %v3717 = vadd.f32 0.0, %v3716
      %v3718 = vpop.f32.mrb[0].mxu0
      %3719 = vmatprep.mubr.bf16.mxu0 0
      %3720 = vmatmul.mubr.bf16.gmra.mrb[0].mxu0 %v3426
      %v3721 = vpop.f32.mrb[0].mxu0
      %v3722 = vadd.f32 0.0, %v3721
      %v3723 = vpop.f32.mrb[0].mxu0
      %v3724 = vpop.f32.mrb[0].mxu0
      %v3725 = vadd.f32 0.0, %v3724
      %v3726 = vpop.f32.mrb[0].mxu0
      %3727 = vmatprep.mubr.bf16.mxu0 0
      %3728 = vmatmul.mubr.bf16.gmra.mrb[0].mxu0 %v3429
      %v3729 = vpop.f32.mrb[0].mxu0
      %v3730 = vadd.f32 0.0, %v3729
      %v3731 = vpop.f32.mrb[0].mxu0
      %v3732 = vpop.f32.mrb[0].mxu0
      %v3733 = vadd.f32 0.0, %v3732
      %v3734 = vpop.f32.mrb[0].mxu0
      %3735 = vmatprep.mubr.bf16.mxu0 0
      %3736 = vmatmul.mubr.bf16.gmra.mrb[0].mxu0 %v3432
      %v3737 = vpop.f32.mrb[0].mxu0
      %v3738 = vadd.f32 0.0, %v3737
      %v3739 = vpop.f32.mrb[0].mxu0
      %v3740 = vpop.f32.mrb[0].mxu0
      %v3741 = vadd.f32 0.0, %v3740
      %v3742 = vpop.f32.mrb[0].mxu0
      %3743 = vmatprep.mubr.bf16.mxu0 0
      %3744 = vmatmul.mubr.bf16.gmra.mrb[0].mxu0 %v3650
      %v3745 = vpop.f32.mrb[0].mxu0
      %v3746 = vadd.f32 0.0, %v3745
      %v3747 = vpop.f32.mrb[0].mxu0
      %v3748 = vpop.f32.mrb[0].mxu0
      %v3749 = vadd.f32 0.0, %v3748
      %v3750 = vpop.f32.mrb[0].mxu0
      %3751 = vdwg.mxu0
      %v3752 = vadd.f32 %v3580, %v3690
      %v3753 = vadd.f32 %v3583, %v3693
      %v3754 = vadd.f32 %v3588, %v3698
      %v3755 = vadd.f32 %v3591, %v3701
      %v3756 = vadd.f32 %v3596, %v3706
      %v3757 = vadd.f32 %v3599, %v3709
      %v3758 = vadd.f32 %v3604, %v3714
      %v3759 = vadd.f32 %v3607, %v3717
      %v3760 = vadd.f32 %v3612, %v3722
      %v3761 = vadd.f32 %v3615, %v3725
      %v3762 = vadd.f32 %v3620, %v3730
      %v3763 = vadd.f32 %v3623, %v3733
      %v3764 = vadd.f32 %v3628, %v3738
      %v3765 = vadd.f32 %v3631, %v3741
      %v3766 = vadd.f32 %v3636, %v3746
      %v3767 = vadd.f32 %v3639, %v3749
      %v3768 = vld [vmem:[#allocation3] sm:$0xf]
      %v3769 = vld [vmem:[#allocation3 + $0x4] sm:$0xf]
      %v3770 = vld [vmem:[#allocation3 + $0x8] sm:$0x1]
      %v3771 = vld [vmem:[#allocation3 + $0xc] sm:$0xf]
      %v3772 = vld [vmem:[#allocation3 + $0x10] sm:$0xf]
      %v3773 = vld [vmem:[#allocation3 + $0x14] sm:$0x1]
      %v3774 = vld [vmem:[#allocation3 + $0x18] sm:$0xf]
      %v3775 = vld [vmem:[#allocation3 + $0x1c] sm:$0xf]
      %v3776 = vld [vmem:[#allocation3 + $0x20] sm:$0x1]
      %v3777 = vld [vmem:[#allocation3 + $0x24] sm:$0xf]
      %v3778 = vld [vmem:[#allocation3 + $0x28] sm:$0xf]
      %v3779 = vld [vmem:[#allocation3 + $0x2c] sm:$0x1]
      %v3780 = vld [vmem:[#allocation3 + $0x30] sm:$0xf]
      %v3781 = vld [vmem:[#allocation3 + $0x34] sm:$0xf]
      %v3782 = vld [vmem:[#allocation3 + $0x38] sm:$0x1]
      %v3783 = vld [vmem:[#allocation3 + $0x3c] sm:$0xf]
      %v3784 = vld [vmem:[#allocation3 + $0x40] sm:$0xf]
      %v3785 = vld [vmem:[#allocation3 + $0x44] sm:$0x1]
      %v3786 = vld [vmem:[#allocation3 + $0x48] sm:$0xf]
      %v3787 = vld [vmem:[#allocation3 + $0x4c] sm:$0xf]
      %v3788 = vld [vmem:[#allocation3 + $0x50] sm:$0x1]
      %v3789 = vld [vmem:[#allocation3 + $0x54] sm:$0xf]
      %v3790 = vld [vmem:[#allocation3 + $0x58] sm:$0xf]
      %v3791 = vld [vmem:[#allocation3 + $0x5c] sm:$0x1]
      %v3792 = vld [vmem:[#allocation3 + $0x60] sm:$0xf]
      %v3793 = vld [vmem:[#allocation3 + $0x64] sm:$0xf]
      %v3794 = vld [vmem:[#allocation3 + $0x68] sm:$0x1]
      %v3795 = vld [vmem:[#allocation3 + $0x6c] sm:$0xf]
      %v3796 = vld [vmem:[#allocation3 + $0x70] sm:$0xf]
      %v3797 = vld [vmem:[#allocation3 + $0x74] sm:$0x1]
      %v3799 = vshrl.u32 %v3768, 16
      %v3801 = vrot.slane %v3799, 4
      %v3802 = vshll.u32 %v3768, 16
      %v3804 = vrot.slane %v3802, 5
      %v3805 = vor.u32 %v3801, %v3804
      %v3806 = vrot.slane %v3805, 4
      %v3808 = vshll.u32 %v3769, 16
      %v3810 = vrot.slane %v3808, 5
      %v3811 = vsel %vm1423, %v3806, %v3810
      %v3812 = vshrl.u32 %v3769, 16
      %v3814 = vrot.slane %v3812, 4
      %v3815 = vor.u32 %v3814, %v3810
      %v3816 = vrot.slane %v3815, 4
      %v3818 = vshll.u32 %v3770, 16
      %v3820 = vrot.slane %v3818, 5
      %v3821 = vsel %vm1423, %v3816, %v3820
      %v3823 = vshrl.u32 %v3771, 16
      %v3825 = vrot.slane %v3823, 4
      %v3826 = vshll.u32 %v3771, 16
      %v3828 = vrot.slane %v3826, 5
      %v3829 = vor.u32 %v3825, %v3828
      %v3830 = vrot.slane %v3829, 4
      %v3832 = vshll.u32 %v3772, 16
      %v3834 = vrot.slane %v3832, 5
      %v3835 = vsel %vm1423, %v3830, %v3834
      %v3836 = vshrl.u32 %v3772, 16
      %v3838 = vrot.slane %v3836, 4
      %v3839 = vor.u32 %v3838, %v3834
      %v3840 = vrot.slane %v3839, 4
      %v3842 = vshll.u32 %v3773, 16
      %v3844 = vrot.slane %v3842, 5
      %v3845 = vsel %vm1423, %v3840, %v3844
      %v3847 = vshrl.u32 %v3774, 16
      %v3849 = vrot.slane %v3847, 4
      %v3850 = vshll.u32 %v3774, 16
      %v3852 = vrot.slane %v3850, 5
      %v3853 = vor.u32 %v3849, %v3852
      %v3854 = vrot.slane %v3853, 4
      %v3856 = vshll.u32 %v3775, 16
      %v3858 = vrot.slane %v3856, 5
      %v3859 = vsel %vm1423, %v3854, %v3858
      %v3860 = vshrl.u32 %v3775, 16
      %v3862 = vrot.slane %v3860, 4
      %v3863 = vor.u32 %v3862, %v3858
      %v3864 = vrot.slane %v3863, 4
      %v3866 = vshll.u32 %v3776, 16
      %v3868 = vrot.slane %v3866, 5
      %v3869 = vsel %vm1423, %v3864, %v3868
      %v3871 = vshrl.u32 %v3777, 16
      %v3873 = vrot.slane %v3871, 4
      %v3874 = vshll.u32 %v3777, 16
      %v3876 = vrot.slane %v3874, 5
      %v3877 = vor.u32 %v3873, %v3876
      %v3878 = vrot.slane %v3877, 4
      %v3880 = vshll.u32 %v3778, 16
      %v3882 = vrot.slane %v3880, 5
      %v3883 = vsel %vm1423, %v3878, %v3882
      %v3884 = vshrl.u32 %v3778, 16
      %v3886 = vrot.slane %v3884, 4
      %v3887 = vor.u32 %v3886, %v3882
      %v3888 = vrot.slane %v3887, 4
      %v3890 = vshll.u32 %v3779, 16
      %v3892 = vrot.slane %v3890, 5
      %v3893 = vsel %vm1423, %v3888, %v3892
      %v3895 = vshrl.u32 %v3780, 16
      %v3897 = vrot.slane %v3895, 4
      %v3898 = vshll.u32 %v3780, 16
      %v3900 = vrot.slane %v3898, 5
      %v3901 = vor.u32 %v3897, %v3900
      %v3902 = vrot.slane %v3901, 4
      %v3904 = vshll.u32 %v3781, 16
      %v3906 = vrot.slane %v3904, 5
      %v3907 = vsel %vm1423, %v3902, %v3906
      %v3908 = vshrl.u32 %v3781, 16
      %v3910 = vrot.slane %v3908, 4
      %v3911 = vor.u32 %v3910, %v3906
      %v3912 = vrot.slane %v3911, 4
      %v3914 = vshll.u32 %v3782, 16
      %v3916 = vrot.slane %v3914, 5
      %v3917 = vsel %vm1423, %v3912, %v3916
      %v3919 = vshrl.u32 %v3783, 16
      %v3921 = vrot.slane %v3919, 4
      %v3922 = vshll.u32 %v3783, 16
      %v3924 = vrot.slane %v3922, 5
      %v3925 = vor.u32 %v3921, %v3924
      %v3926 = vrot.slane %v3925, 4
      %v3928 = vshll.u32 %v3784, 16
      %v3930 = vrot.slane %v3928, 5
      %v3931 = vsel %vm1423, %v3926, %v3930
      %v3932 = vshrl.u32 %v3784, 16
      %v3934 = vrot.slane %v3932, 4
      %v3935 = vor.u32 %v3934, %v3930
      %v3936 = vrot.slane %v3935, 4
      %v3938 = vshll.u32 %v3785, 16
      %v3940 = vrot.slane %v3938, 5
      %v3941 = vsel %vm1423, %v3936, %v3940
      %v3943 = vshrl.u32 %v3786, 16
      %v3945 = vrot.slane %v3943, 4
      %v3946 = vshll.u32 %v3786, 16
      %v3948 = vrot.slane %v3946, 5
      %v3949 = vor.u32 %v3945, %v3948
      %v3950 = vrot.slane %v3949, 4
      %v3952 = vshll.u32 %v3787, 16
      %v3954 = vrot.slane %v3952, 5
      %v3955 = vsel %vm1423, %v3950, %v3954
      %v3956 = vshrl.u32 %v3787, 16
      %v3958 = vrot.slane %v3956, 4
      %v3959 = vor.u32 %v3958, %v3954
      %v3960 = vrot.slane %v3959, 4
      %v3962 = vshll.u32 %v3788, 16
      %v3964 = vrot.slane %v3962, 5
      %v3965 = vsel %vm1423, %v3960, %v3964
      %v3967 = vshrl.u32 %v3789, 16
      %v3969 = vrot.slane %v3967, 4
      %v3970 = vshll.u32 %v3789, 16
      %v3972 = vrot.slane %v3970, 5
      %v3973 = vor.u32 %v3969, %v3972
      %v3974 = vrot.slane %v3973, 4
      %v3976 = vshll.u32 %v3790, 16
      %v3978 = vrot.slane %v3976, 5
      %v3979 = vsel %vm1423, %v3974, %v3978
      %v3980 = vshrl.u32 %v3790, 16
      %v3982 = vrot.slane %v3980, 4
      %v3983 = vor.u32 %v3982, %v3978
      %v3984 = vrot.slane %v3983, 4
      %v3986 = vshll.u32 %v3791, 16
      %v3988 = vrot.slane %v3986, 5
      %v3989 = vsel %vm1423, %v3984, %v3988
      %v3991 = vshrl.u32 %v3792, 16
      %v3993 = vrot.slane %v3991, 4
      %v3994 = vshll.u32 %v3792, 16
      %v3996 = vrot.slane %v3994, 5
      %v3997 = vor.u32 %v3993, %v3996
      %v3998 = vrot.slane %v3997, 4
      %v4000 = vshll.u32 %v3793, 16
      %v4002 = vrot.slane %v4000, 5
      %v4003 = vsel %vm1423, %v3998, %v4002
      %v4004 = vshrl.u32 %v3793, 16
      %v4006 = vrot.slane %v4004, 4
      %v4007 = vor.u32 %v4006, %v4002
      %v4008 = vrot.slane %v4007, 4
      %v4010 = vshll.u32 %v3794, 16
      %v4012 = vrot.slane %v4010, 5
      %v4013 = vsel %vm1423, %v4008, %v4012
      %v4015 = vshrl.u32 %v3795, 16
      %v4017 = vrot.slane %v4015, 4
      %v4018 = vshll.u32 %v3795, 16
      %v4020 = vrot.slane %v4018, 5
      %v4021 = vor.u32 %v4017, %v4020
      %v4022 = vrot.slane %v4021, 4
      %v4024 = vshll.u32 %v3796, 16
      %v4026 = vrot.slane %v4024, 5
      %v4027 = vsel %vm1423, %v4022, %v4026
      %v4028 = vshrl.u32 %v3796, 16
      %v4030 = vrot.slane %v4028, 4
      %v4031 = vor.u32 %v4030, %v4026
      %v4032 = vrot.slane %v4031, 4
      %v4034 = vshll.u32 %v3797, 16
      %v4036 = vrot.slane %v4034, 5
      %v4037 = vsel %vm1423, %v4032, %v4036
      %s4038 = scalar_lea.vmem %s3, 2
      %v4039 = vld [vmem:[%s4038] sm:$0x3]
      %v4040 = vunpack.c.l.b16 %v3811
      %v4041 = vunpack.c.l.b16 %v3821
      %v4042 = vunpack.c.l.b16 %v3835
      %v4043 = vunpack.c.l.b16 %v3845
      %v4044 = vunpack.c.l.b16 %v3859
      %v4045 = vunpack.c.l.b16 %v3869
      %v4046 = vunpack.c.l.b16 %v3883
      %v4047 = vunpack.c.l.b16 %v3893
      %v4048 = vunpack.c.l.b16 %v3907
      %v4049 = vunpack.c.l.b16 %v3917
      %v4050 = vunpack.c.l.b16 %v3931
      %v4051 = vunpack.c.l.b16 %v3941
      %v4052 = vunpack.c.l.b16 %v3955
      %v4053 = vunpack.c.l.b16 %v3965
      %v4054 = vunpack.c.l.b16 %v3979
      %v4055 = vunpack.c.l.b16 %v3989
      %v4056 = vpack.c.b16 %v4041, %v4040
      %v4057 = vpack.c.b16 %v4043, %v4042
      %v4058 = vpack.c.b16 %v4045, %v4044
      %v4059 = vpack.c.b16 %v4047, %v4046
      %v4060 = vpack.c.b16 %v4049, %v4048
      %v4061 = vpack.c.b16 %v4051, %v4050
      %v4062 = vpack.c.b16 %v4053, %v4052
      %v4063 = vpack.c.b16 %v4055, %v4054
      %v4065 = vsel %vm967, %v4056, 0
      %v4068 = vsel %vm967, %v4057, 0
      %v4071 = vsel %vm967, %v4058, 0
      %v4074 = vsel %vm967, %v4059, 0
      %v4077 = vsel %vm967, %v4060, 0
      %v4080 = vsel %vm967, %v4061, 0
      %v4083 = vsel %vm967, %v4062, 0
      %v4086 = vsel %vm967, %v4063, 0
      %v4089 = vsel %vm998, %v4039, 0
      %4091 = vmatprep.subr.bf16.mxu0 0
      %4092 = vmatpush1.bf16.msra.mxu0 %v4089
      %4093 = vmatprep.subr.bf16.mxu0 0
      %4094 = vmatpush1.bf16.msra.mxu0 0
      %4095 = vmatprep.subr.bf16.mxu0 0
      %4096 = vmatpush1.bf16.msra.mxu0 0
      %4097 = vmatprep.subr.bf16.mxu0 0
      %4098 = vmatpush1.bf16.msra.mxu0 0
      %4099 = vmatprep.subr.bf16.mxu0 0
      %4100 = vmatpush1.bf16.msra.mxu0 0
      %4101 = vmatprep.subr.bf16.mxu0 0
      %4102 = vmatpush1.bf16.msra.mxu0 0
      %4103 = vmatprep.subr.bf16.mxu0 0
      %4104 = vmatpush1.bf16.msra.mxu0 0
      %4105 = vmatprep.subr.bf16.mxu0 0
      %4106 = vmatpush1.bf16.msra.mxu0 0
      %4107 = vmatprep.subr.bf16.mxu0 0
      %4108 = vmatpush1.bf16.msra.mxu0 0
      %4109 = vmatprep.subr.bf16.mxu0 0
      %4110 = vmatpush1.bf16.msra.mxu0 0
      %4111 = vmatprep.subr.bf16.mxu0 0
      %4112 = vmatpush1.bf16.msra.mxu0 0
      %4113 = vmatprep.subr.bf16.mxu0 0
      %4114 = vmatpush1.bf16.msra.mxu0 0
      %4115 = vmatprep.subr.bf16.mxu0 0
      %4116 = vmatpush1.bf16.msra.mxu0 0
      %4117 = vmatprep.subr.bf16.mxu0 0
      %4118 = vmatpush1.bf16.msra.mxu0 0
      %4119 = vmatprep.subr.bf16.mxu0 0
      %4120 = vmatpush1.bf16.msra.mxu0 0
      %4121 = vmatprep.subr.bf16.mxu0 0
      %4122 = vmatpush1.bf16.msra.mxu0 0
      %4123 = vmatprep.mubr.bf16.mxu0 0
      %4124 = vmatmul.mubr.bf16.gmra.mrb[0].mxu0 %v4065
      %v4125 = vpop.f32.mrb[0].mxu0
      %v4126 = vadd.f32 0.0, %v4125
      %v4127 = vpop.f32.mrb[0].mxu0
      %v4128 = vpop.f32.mrb[0].mxu0
      %v4129 = vadd.f32 0.0, %v4128
      %v4130 = vpop.f32.mrb[0].mxu0
      %4131 = vmatprep.mubr.bf16.mxu0 0
      %4132 = vmatmul.mubr.bf16.gmra.mrb[0].mxu0 %v4068
      %v4133 = vpop.f32.mrb[0].mxu0
      %v4134 = vadd.f32 0.0, %v4133
      %v4135 = vpop.f32.mrb[0].mxu0
      %v4136 = vpop.f32.mrb[0].mxu0
      %v4137 = vadd.f32 0.0, %v4136
      %v4138 = vpop.f32.mrb[0].mxu0
      %4139 = vmatprep.mubr.bf16.mxu0 0
      %4140 = vmatmul.mubr.bf16.gmra.mrb[0].mxu0 %v4071
      %v4141 = vpop.f32.mrb[0].mxu0
      %v4142 = vadd.f32 0.0, %v4141
      %v4143 = vpop.f32.mrb[0].mxu0
      %v4144 = vpop.f32.mrb[0].mxu0
      %v4145 = vadd.f32 0.0, %v4144
      %v4146 = vpop.f32.mrb[0].mxu0
      %4147 = vmatprep.mubr.bf16.mxu0 0
      %4148 = vmatmul.mubr.bf16.gmra.mrb[0].mxu0 %v4074
      %v4149 = vpop.f32.mrb[0].mxu0
      %v4150 = vadd.f32 0.0, %v4149
      %v4151 = vpop.f32.mrb[0].mxu0
      %v4152 = vpop.f32.mrb[0].mxu0
      %v4153 = vadd.f32 0.0, %v4152
      %v4154 = vpop.f32.mrb[0].mxu0
      %4155 = vmatprep.mubr.bf16.mxu0 0
      %4156 = vmatmul.mubr.bf16.gmra.mrb[0].mxu0 %v4077
      %v4157 = vpop.f32.mrb[0].mxu0
      %v4158 = vadd.f32 0.0, %v4157
      %v4159 = vpop.f32.mrb[0].mxu0
      %v4160 = vpop.f32.mrb[0].mxu0
      %v4161 = vadd.f32 0.0, %v4160
      %v4162 = vpop.f32.mrb[0].mxu0
      %4163 = vmatprep.mubr.bf16.mxu0 0
      %4164 = vmatmul.mubr.bf16.gmra.mrb[0].mxu0 %v4080
      %v4165 = vpop.f32.mrb[0].mxu0
      %v4166 = vadd.f32 0.0, %v4165
      %v4167 = vpop.f32.mrb[0].mxu0
      %v4168 = vpop.f32.mrb[0].mxu0
      %v4169 = vadd.f32 0.0, %v4168
      %v4170 = vpop.f32.mrb[0].mxu0
      %4171 = vmatprep.mubr.bf16.mxu0 0
      %4172 = vmatmul.mubr.bf16.gmra.mrb[0].mxu0 %v4083
      %v4173 = vpop.f32.mrb[0].mxu0
      %v4174 = vadd.f32 0.0, %v4173
      %v4175 = vpop.f32.mrb[0].mxu0
      %v4176 = vpop.f32.mrb[0].mxu0
      %v4177 = vadd.f32 0.0, %v4176
      %v4178 = vpop.f32.mrb[0].mxu0
      %4179 = vmatprep.mubr.bf16.mxu0 0
      %4180 = vmatmul.mubr.bf16.gmra.mrb[0].mxu0 %v4086
      %v4181 = vpop.f32.mrb[0].mxu0
      %v4182 = vadd.f32 0.0, %v4181
      %v4183 = vpop.f32.mrb[0].mxu0
      %v4184 = vpop.f32.mrb[0].mxu0
      %v4185 = vadd.f32 0.0, %v4184
      %v4186 = vpop.f32.mrb[0].mxu0
      %4187 = vdwg.mxu0
      %v4188 = vadd.f32 %v3752, %v4126
      %v4189 = vadd.f32 %v3753, %v4129
      %v4190 = vadd.f32 %v3754, %v4134
      %v4191 = vadd.f32 %v3755, %v4137
      %v4192 = vadd.f32 %v3756, %v4142
      %v4193 = vadd.f32 %v3757, %v4145
      %v4194 = vadd.f32 %v3758, %v4150
      %v4195 = vadd.f32 %v3759, %v4153
      %v4196 = vadd.f32 %v3760, %v4158
      %v4197 = vadd.f32 %v3761, %v4161
      %v4198 = vadd.f32 %v3762, %v4166
      %v4199 = vadd.f32 %v3763, %v4169
      %v4200 = vadd.f32 %v3764, %v4174
      %v4201 = vadd.f32 %v3765, %v4177
      %v4202 = vadd.f32 %v3766, %v4182
      %v4203 = vadd.f32 %v3767, %v4185
      %s4204 = scalar_lea.vmem %s3, 8
      %v4205 = vld [vmem:[%s4204] sm:$0x3]
      %v4206 = vunpack.c.l.b16 %v4003
      %v4207 = vunpack.c.l.b16 %v4013
      %v4208 = vpack.c.b16 %v4207, %v4206
      %v4210 = vsel %vm967, %v4208, 0
      %v4213 = vsel %vm998, %v4205, 0
      %4215 = vmatprep.subr.bf16.mxu0 0
      %4216 = vmatpush1.bf16.msra.mxu0 %v4213
      %4217 = vmatprep.subr.bf16.mxu0 0
      %4218 = vmatpush1.bf16.msra.mxu0 0
      %4219 = vmatprep.subr.bf16.mxu0 0
      %4220 = vmatpush1.bf16.msra.mxu0 0
      %4221 = vmatprep.subr.bf16.mxu0 0
      %4222 = vmatpush1.bf16.msra.mxu0 0
      %4223 = vmatprep.subr.bf16.mxu0 0
      %4224 = vmatpush1.bf16.msra.mxu0 0
      %4225 = vmatprep.subr.bf16.mxu0 0
      %4226 = vmatpush1.bf16.msra.mxu0 0
      %4227 = vmatprep.subr.bf16.mxu0 0
      %4228 = vmatpush1.bf16.msra.mxu0 0
      %4229 = vmatprep.subr.bf16.mxu0 0
      %4230 = vmatpush1.bf16.msra.mxu0 0
      %4231 = vmatprep.subr.bf16.mxu0 0
      %4232 = vmatpush1.bf16.msra.mxu0 0
      %4233 = vmatprep.subr.bf16.mxu0 0
      %4234 = vmatpush1.bf16.msra.mxu0 0
      %4235 = vmatprep.subr.bf16.mxu0 0
      %4236 = vmatpush1.bf16.msra.mxu0 0
      %4237 = vmatprep.subr.bf16.mxu0 0
      %4238 = vmatpush1.bf16.msra.mxu0 0
      %4239 = vmatprep.subr.bf16.mxu0 0
      %4240 = vmatpush1.bf16.msra.mxu0 0
      %4241 = vmatprep.subr.bf16.mxu0 0
      %4242 = vmatpush1.bf16.msra.mxu0 0
      %4243 = vmatprep.subr.bf16.mxu0 0
      %4244 = vmatpush1.bf16.msra.mxu0 0
      %4245 = vmatprep.subr.bf16.mxu0 0
      %4246 = vmatpush1.bf16.msra.mxu0 0
      %4247 = vmatprep.mubr.bf16.mxu0 0
      %4248 = vmatmul.mubr.bf16.gmra.mrb[0].mxu0 %v4068
      %v4249 = vpop.f32.mrb[0].mxu0
      %v4250 = vadd.f32 0.0, %v4249
      %v4251 = vpop.f32.mrb[0].mxu0
      %v4252 = vpop.f32.mrb[0].mxu0
      %v4253 = vadd.f32 0.0, %v4252
      %v4254 = vpop.f32.mrb[0].mxu0
      %4255 = vmatprep.mubr.bf16.mxu0 0
      %4256 = vmatmul.mubr.bf16.gmra.mrb[0].mxu0 %v4071
      %v4257 = vpop.f32.mrb[0].mxu0
      %v4258 = vadd.f32 0.0, %v4257
      %v4259 = vpop.f32.mrb[0].mxu0
      %v4260 = vpop.f32.mrb[0].mxu0
      %v4261 = vadd.f32 0.0, %v4260
      %v4262 = vpop.f32.mrb[0].mxu0
      %4263 = vmatprep.mubr.bf16.mxu0 0
      %4264 = vmatmul.mubr.bf16.gmra.mrb[0].mxu0 %v4074
      %v4265 = vpop.f32.mrb[0].mxu0
      %v4266 = vadd.f32 0.0, %v4265
      %v4267 = vpop.f32.mrb[0].mxu0
      %v4268 = vpop.f32.mrb[0].mxu0
      %v4269 = vadd.f32 0.0, %v4268
      %v4270 = vpop.f32.mrb[0].mxu0
      %4271 = vmatprep.mubr.bf16.mxu0 0
      %4272 = vmatmul.mubr.bf16.gmra.mrb[0].mxu0 %v4077
      %v4273 = vpop.f32.mrb[0].mxu0
      %v4274 = vadd.f32 0.0, %v4273
      %v4275 = vpop.f32.mrb[0].mxu0
      %v4276 = vpop.f32.mrb[0].mxu0
      %v4277 = vadd.f32 0.0, %v4276
      %v4278 = vpop.f32.mrb[0].mxu0
      %4279 = vmatprep.mubr.bf16.mxu0 0
      %4280 = vmatmul.mubr.bf16.gmra.mrb[0].mxu0 %v4080
      %v4281 = vpop.f32.mrb[0].mxu0
      %v4282 = vadd.f32 0.0, %v4281
      %v4283 = vpop.f32.mrb[0].mxu0
      %v4284 = vpop.f32.mrb[0].mxu0
      %v4285 = vadd.f32 0.0, %v4284
      %v4286 = vpop.f32.mrb[0].mxu0
      %4287 = vmatprep.mubr.bf16.mxu0 0
      %4288 = vmatmul.mubr.bf16.gmra.mrb[0].mxu0 %v4083
      %v4289 = vpop.f32.mrb[0].mxu0
      %v4290 = vadd.f32 0.0, %v4289
      %v4291 = vpop.f32.mrb[0].mxu0
      %v4292 = vpop.f32.mrb[0].mxu0
      %v4293 = vadd.f32 0.0, %v4292
      %v4294 = vpop.f32.mrb[0].mxu0
      %4295 = vmatprep.mubr.bf16.mxu0 0
      %4296 = vmatmul.mubr.bf16.gmra.mrb[0].mxu0 %v4086
      %v4297 = vpop.f32.mrb[0].mxu0
      %v4298 = vadd.f32 0.0, %v4297
      %v4299 = vpop.f32.mrb[0].mxu0
      %v4300 = vpop.f32.mrb[0].mxu0
      %v4301 = vadd.f32 0.0, %v4300
      %v4302 = vpop.f32.mrb[0].mxu0
      %4303 = vmatprep.mubr.bf16.mxu0 0
      %4304 = vmatmul.mubr.bf16.gmra.mrb[0].mxu0 %v4210
      %v4305 = vpop.f32.mrb[0].mxu0
      %v4306 = vadd.f32 0.0, %v4305
      %v4307 = vpop.f32.mrb[0].mxu0
      %v4308 = vpop.f32.mrb[0].mxu0
      %v4309 = vadd.f32 0.0, %v4308
      %v4310 = vpop.f32.mrb[0].mxu0
      %4311 = vdwg.mxu0
      %v4312 = vadd.f32 %v4188, %v4250
      %v4313 = vadd.f32 %v4189, %v4253
      %v4314 = vadd.f32 %v4190, %v4258
      %v4315 = vadd.f32 %v4191, %v4261
      %v4316 = vadd.f32 %v4192, %v4266
      %v4317 = vadd.f32 %v4193, %v4269
      %v4318 = vadd.f32 %v4194, %v4274
      %v4319 = vadd.f32 %v4195, %v4277
      %v4320 = vadd.f32 %v4196, %v4282
      %v4321 = vadd.f32 %v4197, %v4285
      %v4322 = vadd.f32 %v4198, %v4290
      %v4323 = vadd.f32 %v4199, %v4293
      %v4324 = vadd.f32 %v4200, %v4298
      %v4325 = vadd.f32 %v4201, %v4301
      %v4326 = vadd.f32 %v4202, %v4306
      %v4327 = vadd.f32 %v4203, %v4309
      %s4328 = scalar_lea.vmem %s3, 14
      %v4329 = vld [vmem:[%s4328] sm:$0x3]
      %v4330 = vunpack.c.l.b16 %v4027
      %v4331 = vunpack.c.l.b16 %v4037
      %v4332 = vpack.c.b16 %v4331, %v4330
      %v4334 = vsel %vm967, %v4332, 0
      %v4337 = vsel %vm998, %v4329, 0
      %4339 = vmatprep.subr.bf16.mxu0 0
      %4340 = vmatpush1.bf16.msra.mxu0 %v4337
      %4341 = vmatprep.subr.bf16.mxu0 0
      %4342 = vmatpush1.bf16.msra.mxu0 0
      %4343 = vmatprep.subr.bf16.mxu0 0
      %4344 = vmatpush1.bf16.msra.mxu0 0
      %4345 = vmatprep.subr.bf16.mxu0 0
      %4346 = vmatpush1.bf16.msra.mxu0 0
      %4347 = vmatprep.subr.bf16.mxu0 0
      %4348 = vmatpush1.bf16.msra.mxu0 0
      %4349 = vmatprep.subr.bf16.mxu0 0
      %4350 = vmatpush1.bf16.msra.mxu0 0
      %4351 = vmatprep.subr.bf16.mxu0 0
      %4352 = vmatpush1.bf16.msra.mxu0 0
      %4353 = vmatprep.subr.bf16.mxu0 0
      %4354 = vmatpush1.bf16.msra.mxu0 0
      %4355 = vmatprep.subr.bf16.mxu0 0
      %4356 = vmatpush1.bf16.msra.mxu0 0
      %4357 = vmatprep.subr.bf16.mxu0 0
      %4358 = vmatpush1.bf16.msra.mxu0 0
      %4359 = vmatprep.subr.bf16.mxu0 0
      %4360 = vmatpush1.bf16.msra.mxu0 0
      %4361 = vmatprep.subr.bf16.mxu0 0
      %4362 = vmatpush1.bf16.msra.mxu0 0
      %4363 = vmatprep.subr.bf16.mxu0 0
      %4364 = vmatpush1.bf16.msra.mxu0 0
      %4365 = vmatprep.subr.bf16.mxu0 0
      %4366 = vmatpush1.bf16.msra.mxu0 0
      %4367 = vmatprep.subr.bf16.mxu0 0
      %4368 = vmatpush1.bf16.msra.mxu0 0
      %4369 = vmatprep.subr.bf16.mxu0 0
      %4370 = vmatpush1.bf16.msra.mxu0 0
      %4371 = vmatprep.mubr.bf16.mxu0 0
      %4372 = vmatmul.mubr.bf16.gmra.mrb[0].mxu0 %v4071
      %v4373 = vpop.f32.mrb[0].mxu0
      %v4374 = vadd.f32 0.0, %v4373
      %v4375 = vpop.f32.mrb[0].mxu0
      %v4376 = vpop.f32.mrb[0].mxu0
      %v4377 = vadd.f32 0.0, %v4376
      %v4378 = vpop.f32.mrb[0].mxu0
      %4379 = vmatprep.mubr.bf16.mxu0 0
      %4380 = vmatmul.mubr.bf16.gmra.mrb[0].mxu0 %v4074
      %v4381 = vpop.f32.mrb[0].mxu0
      %v4382 = vadd.f32 0.0, %v4381
      %v4383 = vpop.f32.mrb[0].mxu0
      %v4384 = vpop.f32.mrb[0].mxu0
      %v4385 = vadd.f32 0.0, %v4384
      %v4386 = vpop.f32.mrb[0].mxu0
      %4387 = vmatprep.mubr.bf16.mxu0 0
      %4388 = vmatmul.mubr.bf16.gmra.mrb[0].mxu0 %v4077
      %v4389 = vpop.f32.mrb[0].mxu0
      %v4390 = vadd.f32 0.0, %v4389
      %v4391 = vpop.f32.mrb[0].mxu0
      %v4392 = vpop.f32.mrb[0].mxu0
      %v4393 = vadd.f32 0.0, %v4392
      %v4394 = vpop.f32.mrb[0].mxu0
      %4395 = vmatprep.mubr.bf16.mxu0 0
      %4396 = vmatmul.mubr.bf16.gmra.mrb[0].mxu0 %v4080
      %v4397 = vpop.f32.mrb[0].mxu0
      %v4398 = vadd.f32 0.0, %v4397
      %v4399 = vpop.f32.mrb[0].mxu0
      %v4400 = vpop.f32.mrb[0].mxu0
      %v4401 = vadd.f32 0.0, %v4400
      %v4402 = vpop.f32.mrb[0].mxu0
      %4403 = vmatprep.mubr.bf16.mxu0 0
      %4404 = vmatmul.mubr.bf16.gmra.mrb[0].mxu0 %v4083
      %v4405 = vpop.f32.mrb[0].mxu0
      %v4406 = vadd.f32 0.0, %v4405
      %v4407 = vpop.f32.mrb[0].mxu0
      %v4408 = vpop.f32.mrb[0].mxu0
      %v4409 = vadd.f32 0.0, %v4408
      %v4410 = vpop.f32.mrb[0].mxu0
      %4411 = vmatprep.mubr.bf16.mxu0 0
      %4412 = vmatmul.mubr.bf16.gmra.mrb[0].mxu0 %v4086
      %v4413 = vpop.f32.mrb[0].mxu0
      %v4414 = vadd.f32 0.0, %v4413
      %v4415 = vpop.f32.mrb[0].mxu0
      %v4416 = vpop.f32.mrb[0].mxu0
      %v4417 = vadd.f32 0.0, %v4416
      %v4418 = vpop.f32.mrb[0].mxu0
      %4419 = vmatprep.mubr.bf16.mxu0 0
      %4420 = vmatmul.mubr.bf16.gmra.mrb[0].mxu0 %v4210
      %v4421 = vpop.f32.mrb[0].mxu0
      %v4422 = vadd.f32 0.0, %v4421
      %v4423 = vpop.f32.mrb[0].mxu0
      %v4424 = vpop.f32.mrb[0].mxu0
      %v4425 = vadd.f32 0.0, %v4424
      %v4426 = vpop.f32.mrb[0].mxu0
      %4427 = vmatprep.mubr.bf16.mxu0 0
      %4428 = vmatmul.mubr.bf16.gmra.mrb[0].mxu0 %v4334
      %v4429 = vpop.f32.mrb[0].mxu0
      %v4430 = vadd.f32 0.0, %v4429
      %v4431 = vpop.f32.mrb[0].mxu0
      %v4432 = vpop.f32.mrb[0].mxu0
      %v4433 = vadd.f32 0.0, %v4432
      %v4434 = vpop.f32.mrb[0].mxu0
      %4435 = vdwg.mxu0
      %v4436 = vadd.f32 %v4312, %v4374
      %v4437 = vadd.f32 %v4313, %v4377
      %v4438 = vadd.f32 %v4314, %v4382
      %v4439 = vadd.f32 %v4315, %v4385
      %v4440 = vadd.f32 %v4316, %v4390
      %v4441 = vadd.f32 %v4317, %v4393
      %v4442 = vadd.f32 %v4318, %v4398
      %v4443 = vadd.f32 %v4319, %v4401
      %v4444 = vadd.f32 %v4320, %v4406
      %v4445 = vadd.f32 %v4321, %v4409
      %v4446 = vadd.f32 %v4322, %v4414
      %v4447 = vadd.f32 %v4323, %v4417
      %v4448 = vadd.f32 %v4324, %v4422
      %v4449 = vadd.f32 %v4325, %v4425
      %v4450 = vadd.f32 %v4326, %v4430
      %v4451 = vadd.f32 %v4327, %v4433
      %v4452 = vld [vmem:[#allocation3] sm:$0xe]
      %v4453 = vld [vmem:[#allocation3 + $0xc] sm:$0xe]
      %v4454 = vld [vmem:[#allocation3 + $0x18] sm:$0xe]
      %v4455 = vld [vmem:[#allocation3 + $0x24] sm:$0xe]
      %v4456 = vld [vmem:[#allocation3 + $0x30] sm:$0xe]
      %v4457 = vld [vmem:[#allocation3 + $0x3c] sm:$0xe]
      %v4458 = vld [vmem:[#allocation3 + $0x48] sm:$0xe]
      %v4459 = vld [vmem:[#allocation3 + $0x54] sm:$0xe]
      %v4460 = vld [vmem:[#allocation3 + $0x60] sm:$0xe]
      %v4461 = vld [vmem:[#allocation3 + $0x6c] sm:$0xe]
      %v4492 = vrot.slane %v4452, 5
      %v4493 = vrot.slane %v4492, 4
      %v4494 = vrot.slane %v3769, 5
      %v4495 = vsel %vm2248, %v4493, %v4494
      %v4496 = vrot.slane %v4494, 4
      %v4497 = vrot.slane %v3770, 5
      %v4498 = vsel %vm2248, %v4496, %v4497
      %v4499 = vrot.slane %v4453, 5
      %v4500 = vrot.slane %v4499, 4
      %v4501 = vrot.slane %v3772, 5
      %v4502 = vsel %vm2248, %v4500, %v4501
      %v4503 = vrot.slane %v4501, 4
      %v4504 = vrot.slane %v3773, 5
      %v4505 = vsel %vm2248, %v4503, %v4504
      %v4506 = vrot.slane %v4454, 5
      %v4507 = vrot.slane %v4506, 4
      %v4508 = vrot.slane %v3775, 5
      %v4509 = vsel %vm2248, %v4507, %v4508
      %v4510 = vrot.slane %v4508, 4
      %v4511 = vrot.slane %v3776, 5
      %v4512 = vsel %vm2248, %v4510, %v4511
      %v4513 = vrot.slane %v4455, 5
      %v4514 = vrot.slane %v4513, 4
      %v4515 = vrot.slane %v3778, 5
      %v4516 = vsel %vm2248, %v4514, %v4515
      %v4517 = vrot.slane %v4515, 4
      %v4518 = vrot.slane %v3779, 5
      %v4519 = vsel %vm2248, %v4517, %v4518
      %v4520 = vrot.slane %v4456, 5
      %v4521 = vrot.slane %v4520, 4
      %v4522 = vrot.slane %v3781, 5
      %v4523 = vsel %vm2248, %v4521, %v4522
      %v4524 = vrot.slane %v4522, 4
      %v4525 = vrot.slane %v3782, 5
      %v4526 = vsel %vm2248, %v4524, %v4525
      %v4527 = vrot.slane %v4457, 5
      %v4528 = vrot.slane %v4527, 4
      %v4529 = vrot.slane %v3784, 5
      %v4530 = vsel %vm2248, %v4528, %v4529
      %v4531 = vrot.slane %v4529, 4
      %v4532 = vrot.slane %v3785, 5
      %v4533 = vsel %vm2248, %v4531, %v4532
      %v4534 = vrot.slane %v4458, 5
      %v4535 = vrot.slane %v4534, 4
      %v4536 = vrot.slane %v3787, 5
      %v4537 = vsel %vm2248, %v4535, %v4536
      %v4538 = vrot.slane %v4536, 4
      %v4539 = vrot.slane %v3788, 5
      %v4540 = vsel %vm2248, %v4538, %v4539
      %v4541 = vrot.slane %v4459, 5
      %v4542 = vrot.slane %v4541, 4
      %v4543 = vrot.slane %v3790, 5
      %v4544 = vsel %vm2248, %v4542, %v4543
      %v4545 = vrot.slane %v4543, 4
      %v4546 = vrot.slane %v3791, 5
      %v4547 = vsel %vm2248, %v4545, %v4546
      %v4548 = vrot.slane %v4460, 5
      %v4549 = vrot.slane %v4548, 4
      %v4550 = vrot.slane %v3793, 5
      %v4551 = vsel %vm2248, %v4549, %v4550
      %v4552 = vrot.slane %v4550, 4
      %v4553 = vrot.slane %v3794, 5
      %v4554 = vsel %vm2248, %v4552, %v4553
      %v4555 = vrot.slane %v4461, 5
      %v4556 = vrot.slane %v4555, 4
      %v4557 = vrot.slane %v3796, 5
      %v4558 = vsel %vm2248, %v4556, %v4557
      %v4559 = vrot.slane %v4557, 4
      %v4560 = vrot.slane %v3797, 5
      %v4561 = vsel %vm2248, %v4559, %v4560
      %s4562 = scalar_lea.vmem %s3, 4
      %v4563 = vld [vmem:[%s4562] sm:$0x3]
      %v4564 = vunpack.c.l.b16 %v4495
      %v4565 = vunpack.c.l.b16 %v4498
      %v4566 = vunpack.c.l.b16 %v4502
      %v4567 = vunpack.c.l.b16 %v4505
      %v4568 = vunpack.c.l.b16 %v4509
      %v4569 = vunpack.c.l.b16 %v4512
      %v4570 = vunpack.c.l.b16 %v4516
      %v4571 = vunpack.c.l.b16 %v4519
      %v4572 = vunpack.c.l.b16 %v4523
      %v4573 = vunpack.c.l.b16 %v4526
      %v4574 = vunpack.c.l.b16 %v4530
      %v4575 = vunpack.c.l.b16 %v4533
      %v4576 = vunpack.c.l.b16 %v4537
      %v4577 = vunpack.c.l.b16 %v4540
      %v4578 = vunpack.c.l.b16 %v4544
      %v4579 = vunpack.c.l.b16 %v4547
      %v4580 = vpack.c.b16 %v4565, %v4564
      %v4581 = vpack.c.b16 %v4567, %v4566
      %v4582 = vpack.c.b16 %v4569, %v4568
      %v4583 = vpack.c.b16 %v4571, %v4570
      %v4584 = vpack.c.b16 %v4573, %v4572
      %v4585 = vpack.c.b16 %v4575, %v4574
      %v4586 = vpack.c.b16 %v4577, %v4576
      %v4587 = vpack.c.b16 %v4579, %v4578
      %v4589 = vsel %vm967, %v4580, 0
      %v4592 = vsel %vm967, %v4581, 0
      %v4595 = vsel %vm967, %v4582, 0
      %v4598 = vsel %vm967, %v4583, 0
      %v4601 = vsel %vm967, %v4584, 0
      %v4604 = vsel %vm967, %v4585, 0
      %v4607 = vsel %vm967, %v4586, 0
      %v4610 = vsel %vm967, %v4587, 0
      %v4613 = vsel %vm998, %v4563, 0
      %4615 = vmatprep.subr.bf16.mxu0 0
      %4616 = vmatpush1.bf16.msra.mxu0 %v4613
      %4617 = vmatprep.subr.bf16.mxu0 0
      %4618 = vmatpush1.bf16.msra.mxu0 0
      %4619 = vmatprep.subr.bf16.mxu0 0
      %4620 = vmatpush1.bf16.msra.mxu0 0
      %4621 = vmatprep.subr.bf16.mxu0 0
      %4622 = vmatpush1.bf16.msra.mxu0 0
      %4623 = vmatprep.subr.bf16.mxu0 0
      %4624 = vmatpush1.bf16.msra.mxu0 0
      %4625 = vmatprep.subr.bf16.mxu0 0
      %4626 = vmatpush1.bf16.msra.mxu0 0
      %4627 = vmatprep.subr.bf16.mxu0 0
      %4628 = vmatpush1.bf16.msra.mxu0 0
      %4629 = vmatprep.subr.bf16.mxu0 0
      %4630 = vmatpush1.bf16.msra.mxu0 0
      %4631 = vmatprep.subr.bf16.mxu0 0
      %4632 = vmatpush1.bf16.msra.mxu0 0
      %4633 = vmatprep.subr.bf16.mxu0 0
      %4634 = vmatpush1.bf16.msra.mxu0 0
      %4635 = vmatprep.subr.bf16.mxu0 0
      %4636 = vmatpush1.bf16.msra.mxu0 0
      %4637 = vmatprep.subr.bf16.mxu0 0
      %4638 = vmatpush1.bf16.msra.mxu0 0
      %4639 = vmatprep.subr.bf16.mxu0 0
      %4640 = vmatpush1.bf16.msra.mxu0 0
      %4641 = vmatprep.subr.bf16.mxu0 0
      %4642 = vmatpush1.bf16.msra.mxu0 0
      %4643 = vmatprep.subr.bf16.mxu0 0
      %4644 = vmatpush1.bf16.msra.mxu0 0
      %4645 = vmatprep.subr.bf16.mxu0 0
      %4646 = vmatpush1.bf16.msra.mxu0 0
      %4647 = vmatprep.mubr.bf16.mxu0 0
      %4648 = vmatmul.mubr.bf16.gmra.mrb[0].mxu0 %v4589
      %v4649 = vpop.f32.mrb[0].mxu0
      %v4650 = vadd.f32 0.0, %v4649
      %v4651 = vpop.f32.mrb[0].mxu0
      %v4652 = vpop.f32.mrb[0].mxu0
      %v4653 = vadd.f32 0.0, %v4652
      %v4654 = vpop.f32.mrb[0].mxu0
      %4655 = vmatprep.mubr.bf16.mxu0 0
      %4656 = vmatmul.mubr.bf16.gmra.mrb[0].mxu0 %v4592
      %v4657 = vpop.f32.mrb[0].mxu0
      %v4658 = vadd.f32 0.0, %v4657
      %v4659 = vpop.f32.mrb[0].mxu0
      %v4660 = vpop.f32.mrb[0].mxu0
      %v4661 = vadd.f32 0.0, %v4660
      %v4662 = vpop.f32.mrb[0].mxu0
      %4663 = vmatprep.mubr.bf16.mxu0 0
      %4664 = vmatmul.mubr.bf16.gmra.mrb[0].mxu0 %v4595
      %v4665 = vpop.f32.mrb[0].mxu0
      %v4666 = vadd.f32 0.0, %v4665
      %v4667 = vpop.f32.mrb[0].mxu0
      %v4668 = vpop.f32.mrb[0].mxu0
      %v4669 = vadd.f32 0.0, %v4668
      %v4670 = vpop.f32.mrb[0].mxu0
      %4671 = vmatprep.mubr.bf16.mxu0 0
      %4672 = vmatmul.mubr.bf16.gmra.mrb[0].mxu0 %v4598
      %v4673 = vpop.f32.mrb[0].mxu0
      %v4674 = vadd.f32 0.0, %v4673
      %v4675 = vpop.f32.mrb[0].mxu0
      %v4676 = vpop.f32.mrb[0].mxu0
      %v4677 = vadd.f32 0.0, %v4676
      %v4678 = vpop.f32.mrb[0].mxu0
      %4679 = vmatprep.mubr.bf16.mxu0 0
      %4680 = vmatmul.mubr.bf16.gmra.mrb[0].mxu0 %v4601
      %v4681 = vpop.f32.mrb[0].mxu0
      %v4682 = vadd.f32 0.0, %v4681
      %v4683 = vpop.f32.mrb[0].mxu0
      %v4684 = vpop.f32.mrb[0].mxu0
      %v4685 = vadd.f32 0.0, %v4684
      %v4686 = vpop.f32.mrb[0].mxu0
      %4687 = vmatprep.mubr.bf16.mxu0 0
      %4688 = vmatmul.mubr.bf16.gmra.mrb[0].mxu0 %v4604
      %v4689 = vpop.f32.mrb[0].mxu0
      %v4690 = vadd.f32 0.0, %v4689
      %v4691 = vpop.f32.mrb[0].mxu0
      %v4692 = vpop.f32.mrb[0].mxu0
      %v4693 = vadd.f32 0.0, %v4692
      %v4694 = vpop.f32.mrb[0].mxu0
      %4695 = vmatprep.mubr.bf16.mxu0 0
      %4696 = vmatmul.mubr.bf16.gmra.mrb[0].mxu0 %v4607
      %v4697 = vpop.f32.mrb[0].mxu0
      %v4698 = vadd.f32 0.0, %v4697
      %v4699 = vpop.f32.mrb[0].mxu0
      %v4700 = vpop.f32.mrb[0].mxu0
      %v4701 = vadd.f32 0.0, %v4700
      %v4702 = vpop.f32.mrb[0].mxu0
      %4703 = vmatprep.mubr.bf16.mxu0 0
      %4704 = vmatmul.mubr.bf16.gmra.mrb[0].mxu0 %v4610
      %v4705 = vpop.f32.mrb[0].mxu0
      %v4706 = vadd.f32 0.0, %v4705
      %v4707 = vpop.f32.mrb[0].mxu0
      %v4708 = vpop.f32.mrb[0].mxu0
      %v4709 = vadd.f32 0.0, %v4708
      %v4710 = vpop.f32.mrb[0].mxu0
      %4711 = vdwg.mxu0
      %v4712 = vadd.f32 %v4436, %v4650
      %v4713 = vadd.f32 %v4437, %v4653
      %v4714 = vadd.f32 %v4438, %v4658
      %v4715 = vadd.f32 %v4439, %v4661
      %v4716 = vadd.f32 %v4440, %v4666
      %v4717 = vadd.f32 %v4441, %v4669
      %v4718 = vadd.f32 %v4442, %v4674
      %v4719 = vadd.f32 %v4443, %v4677
      %v4720 = vadd.f32 %v4444, %v4682
      %v4721 = vadd.f32 %v4445, %v4685
      %v4722 = vadd.f32 %v4446, %v4690
      %v4723 = vadd.f32 %v4447, %v4693
      %v4724 = vadd.f32 %v4448, %v4698
      %v4725 = vadd.f32 %v4449, %v4701
      %v4726 = vadd.f32 %v4450, %v4706
      %v4727 = vadd.f32 %v4451, %v4709
      %s4728 = scalar_lea.vmem %s3, 10
      %v4729 = vld [vmem:[%s4728] sm:$0x3]
      %v4730 = vunpack.c.l.b16 %v4551
      %v4731 = vunpack.c.l.b16 %v4554
      %v4732 = vpack.c.b16 %v4731, %v4730
      %v4734 = vsel %vm967, %v4732, 0
      %v4737 = vsel %vm998, %v4729, 0
      %4739 = vmatprep.subr.bf16.mxu0 0
      %4740 = vmatpush1.bf16.msra.mxu0 %v4737
      %4741 = vmatprep.subr.bf16.mxu0 0
      %4742 = vmatpush1.bf16.msra.mxu0 0
      %4743 = vmatprep.subr.bf16.mxu0 0
      %4744 = vmatpush1.bf16.msra.mxu0 0
      %4745 = vmatprep.subr.bf16.mxu0 0
      %4746 = vmatpush1.bf16.msra.mxu0 0
      %4747 = vmatprep.subr.bf16.mxu0 0
      %4748 = vmatpush1.bf16.msra.mxu0 0
      %4749 = vmatprep.subr.bf16.mxu0 0
      %4750 = vmatpush1.bf16.msra.mxu0 0
      %4751 = vmatprep.subr.bf16.mxu0 0
      %4752 = vmatpush1.bf16.msra.mxu0 0
      %4753 = vmatprep.subr.bf16.mxu0 0
      %4754 = vmatpush1.bf16.msra.mxu0 0
      %4755 = vmatprep.subr.bf16.mxu0 0
      %4756 = vmatpush1.bf16.msra.mxu0 0
      %4757 = vmatprep.subr.bf16.mxu0 0
      %4758 = vmatpush1.bf16.msra.mxu0 0
      %4759 = vmatprep.subr.bf16.mxu0 0
      %4760 = vmatpush1.bf16.msra.mxu0 0
      %4761 = vmatprep.subr.bf16.mxu0 0
      %4762 = vmatpush1.bf16.msra.mxu0 0
      %4763 = vmatprep.subr.bf16.mxu0 0
      %4764 = vmatpush1.bf16.msra.mxu0 0
      %4765 = vmatprep.subr.bf16.mxu0 0
      %4766 = vmatpush1.bf16.msra.mxu0 0
      %4767 = vmatprep.subr.bf16.mxu0 0
      %4768 = vmatpush1.bf16.msra.mxu0 0
      %4769 = vmatprep.subr.bf16.mxu0 0
      %4770 = vmatpush1.bf16.msra.mxu0 0
      %4771 = vmatprep.mubr.bf16.mxu0 0
      %4772 = vmatmul.mubr.bf16.gmra.mrb[0].mxu0 %v4592
      %v4773 = vpop.f32.mrb[0].mxu0
      %v4774 = vadd.f32 0.0, %v4773
      %v4775 = vpop.f32.mrb[0].mxu0
      %v4776 = vpop.f32.mrb[0].mxu0
      %v4777 = vadd.f32 0.0, %v4776
      %v4778 = vpop.f32.mrb[0].mxu0
      %4779 = vmatprep.mubr.bf16.mxu0 0
      %4780 = vmatmul.mubr.bf16.gmra.mrb[0].mxu0 %v4595
      %v4781 = vpop.f32.mrb[0].mxu0
      %v4782 = vadd.f32 0.0, %v4781
      %v4783 = vpop.f32.mrb[0].mxu0
      %v4784 = vpop.f32.mrb[0].mxu0
      %v4785 = vadd.f32 0.0, %v4784
      %v4786 = vpop.f32.mrb[0].mxu0
      %4787 = vmatprep.mubr.bf16.mxu0 0
      %4788 = vmatmul.mubr.bf16.gmra.mrb[0].mxu0 %v4598
      %v4789 = vpop.f32.mrb[0].mxu0
      %v4790 = vadd.f32 0.0, %v4789
      %v4791 = vpop.f32.mrb[0].mxu0
      %v4792 = vpop.f32.mrb[0].mxu0
      %v4793 = vadd.f32 0.0, %v4792
      %v4794 = vpop.f32.mrb[0].mxu0
      %4795 = vmatprep.mubr.bf16.mxu0 0
      %4796 = vmatmul.mubr.bf16.gmra.mrb[0].mxu0 %v4601
      %v4797 = vpop.f32.mrb[0].mxu0
      %v4798 = vadd.f32 0.0, %v4797
      %v4799 = vpop.f32.mrb[0].mxu0
      %v4800 = vpop.f32.mrb[0].mxu0
      %v4801 = vadd.f32 0.0, %v4800
      %v4802 = vpop.f32.mrb[0].mxu0
      %4803 = vmatprep.mubr.bf16.mxu0 0
      %4804 = vmatmul.mubr.bf16.gmra.mrb[0].mxu0 %v4604
      %v4805 = vpop.f32.mrb[0].mxu0
      %v4806 = vadd.f32 0.0, %v4805
      %v4807 = vpop.f32.mrb[0].mxu0
      %v4808 = vpop.f32.mrb[0].mxu0
      %v4809 = vadd.f32 0.0, %v4808
      %v4810 = vpop.f32.mrb[0].mxu0
      %4811 = vmatprep.mubr.bf16.mxu0 0
      %4812 = vmatmul.mubr.bf16.gmra.mrb[0].mxu0 %v4607
      %v4813 = vpop.f32.mrb[0].mxu0
      %v4814 = vadd.f32 0.0, %v4813
      %v4815 = vpop.f32.mrb[0].mxu0
      %v4816 = vpop.f32.mrb[0].mxu0
      %v4817 = vadd.f32 0.0, %v4816
      %v4818 = vpop.f32.mrb[0].mxu0
      %4819 = vmatprep.mubr.bf16.mxu0 0
      %4820 = vmatmul.mubr.bf16.gmra.mrb[0].mxu0 %v4610
      %v4821 = vpop.f32.mrb[0].mxu0
      %v4822 = vadd.f32 0.0, %v4821
      %v4823 = vpop.f32.mrb[0].mxu0
      %v4824 = vpop.f32.mrb[0].mxu0
      %v4825 = vadd.f32 0.0, %v4824
      %v4826 = vpop.f32.mrb[0].mxu0
      %4827 = vmatprep.mubr.bf16.mxu0 0
      %4828 = vmatmul.mubr.bf16.gmra.mrb[0].mxu0 %v4734
      %v4829 = vpop.f32.mrb[0].mxu0
      %v4830 = vadd.f32 0.0, %v4829
      %v4831 = vpop.f32.mrb[0].mxu0
      %v4832 = vpop.f32.mrb[0].mxu0
      %v4833 = vadd.f32 0.0, %v4832
      %v4834 = vpop.f32.mrb[0].mxu0
      %4835 = vdwg.mxu0
      %v4836 = vadd.f32 %v4712, %v4774
      %v4837 = vadd.f32 %v4713, %v4777
      %v4838 = vadd.f32 %v4714, %v4782
      %v4839 = vadd.f32 %v4715, %v4785
      %v4840 = vadd.f32 %v4716, %v4790
      %v4841 = vadd.f32 %v4717, %v4793
      %v4842 = vadd.f32 %v4718, %v4798
      %v4843 = vadd.f32 %v4719, %v4801
      %v4844 = vadd.f32 %v4720, %v4806
      %v4845 = vadd.f32 %v4721, %v4809
      %v4846 = vadd.f32 %v4722, %v4814
      %v4847 = vadd.f32 %v4723, %v4817
      %v4848 = vadd.f32 %v4724, %v4822
      %v4849 = vadd.f32 %v4725, %v4825
      %v4850 = vadd.f32 %v4726, %v4830
      %v4851 = vadd.f32 %v4727, %v4833
      %s4852 = scalar_lea.vmem %s3, 16
      %v4853 = vld [vmem:[%s4852] sm:$0x3]
      %v4854 = vunpack.c.l.b16 %v4558
      %v4855 = vunpack.c.l.b16 %v4561
      %v4856 = vpack.c.b16 %v4855, %v4854
      %v4858 = vsel %vm967, %v4856, 0
      %v4861 = vsel %vm998, %v4853, 0
      %4863 = vmatprep.subr.bf16.mxu0 0
      %4864 = vmatpush1.bf16.msra.mxu0 %v4861
      %4865 = vmatprep.subr.bf16.mxu0 0
      %4866 = vmatpush1.bf16.msra.mxu0 0
      %4867 = vmatprep.subr.bf16.mxu0 0
      %4868 = vmatpush1.bf16.msra.mxu0 0
      %4869 = vmatprep.subr.bf16.mxu0 0
      %4870 = vmatpush1.bf16.msra.mxu0 0
      %4871 = vmatprep.subr.bf16.mxu0 0
      %4872 = vmatpush1.bf16.msra.mxu0 0
      %4873 = vmatprep.subr.bf16.mxu0 0
      %4874 = vmatpush1.bf16.msra.mxu0 0
      %4875 = vmatprep.subr.bf16.mxu0 0
      %4876 = vmatpush1.bf16.msra.mxu0 0
      %4877 = vmatprep.subr.bf16.mxu0 0
      %4878 = vmatpush1.bf16.msra.mxu0 0
      %4879 = vmatprep.subr.bf16.mxu0 0
      %4880 = vmatpush1.bf16.msra.mxu0 0
      %4881 = vmatprep.subr.bf16.mxu0 0
      %4882 = vmatpush1.bf16.msra.mxu0 0
      %4883 = vmatprep.subr.bf16.mxu0 0
      %4884 = vmatpush1.bf16.msra.mxu0 0
      %4885 = vmatprep.subr.bf16.mxu0 0
      %4886 = vmatpush1.bf16.msra.mxu0 0
      %4887 = vmatprep.subr.bf16.mxu0 0
      %4888 = vmatpush1.bf16.msra.mxu0 0
      %4889 = vmatprep.subr.bf16.mxu0 0
      %4890 = vmatpush1.bf16.msra.mxu0 0
      %4891 = vmatprep.subr.bf16.mxu0 0
      %4892 = vmatpush1.bf16.msra.mxu0 0
      %4893 = vmatprep.subr.bf16.mxu0 0
      %4894 = vmatpush1.bf16.msra.mxu0 0
      %4895 = vmatprep.mubr.bf16.mxu0 0
      %4896 = vmatmul.mubr.bf16.gmra.mrb[0].mxu0 %v4595
      %v4897 = vpop.f32.mrb[0].mxu0
      %v4898 = vadd.f32 0.0, %v4897
      %v4899 = vpop.f32.mrb[0].mxu0
      %v4900 = vpop.f32.mrb[0].mxu0
      %v4901 = vadd.f32 0.0, %v4900
      %v4902 = vpop.f32.mrb[0].mxu0
      %4903 = vmatprep.mubr.bf16.mxu0 0
      %4904 = vmatmul.mubr.bf16.gmra.mrb[0].mxu0 %v4598
      %v4905 = vpop.f32.mrb[0].mxu0
      %v4906 = vadd.f32 0.0, %v4905
      %v4907 = vpop.f32.mrb[0].mxu0
      %v4908 = vpop.f32.mrb[0].mxu0
      %v4909 = vadd.f32 0.0, %v4908
      %v4910 = vpop.f32.mrb[0].mxu0
      %4911 = vmatprep.mubr.bf16.mxu0 0
      %4912 = vmatmul.mubr.bf16.gmra.mrb[0].mxu0 %v4601
      %v4913 = vpop.f32.mrb[0].mxu0
      %v4914 = vadd.f32 0.0, %v4913
      %v4915 = vpop.f32.mrb[0].mxu0
      %v4916 = vpop.f32.mrb[0].mxu0
      %v4917 = vadd.f32 0.0, %v4916
      %v4918 = vpop.f32.mrb[0].mxu0
      %4919 = vmatprep.mubr.bf16.mxu0 0
      %4920 = vmatmul.mubr.bf16.gmra.mrb[0].mxu0 %v4604
      %v4921 = vpop.f32.mrb[0].mxu0
      %v4922 = vadd.f32 0.0, %v4921
      %v4923 = vpop.f32.mrb[0].mxu0
      %v4924 = vpop.f32.mrb[0].mxu0
      %v4925 = vadd.f32 0.0, %v4924
      %v4926 = vpop.f32.mrb[0].mxu0
      %4927 = vmatprep.mubr.bf16.mxu0 0
      %4928 = vmatmul.mubr.bf16.gmra.mrb[0].mxu0 %v4607
      %v4929 = vpop.f32.mrb[0].mxu0
      %v4930 = vadd.f32 0.0, %v4929
      %v4931 = vpop.f32.mrb[0].mxu0
      %v4932 = vpop.f32.mrb[0].mxu0
      %v4933 = vadd.f32 0.0, %v4932
      %v4934 = vpop.f32.mrb[0].mxu0
      %4935 = vmatprep.mubr.bf16.mxu0 0
      %4936 = vmatmul.mubr.bf16.gmra.mrb[0].mxu0 %v4610
      %v4937 = vpop.f32.mrb[0].mxu0
      %v4938 = vadd.f32 0.0, %v4937
      %v4939 = vpop.f32.mrb[0].mxu0
      %v4940 = vpop.f32.mrb[0].mxu0
      %v4941 = vadd.f32 0.0, %v4940
      %v4942 = vpop.f32.mrb[0].mxu0
      %4943 = vmatprep.mubr.bf16.mxu0 0
      %4944 = vmatmul.mubr.bf16.gmra.mrb[0].mxu0 %v4734
      %v4945 = vpop.f32.mrb[0].mxu0
      %v4946 = vadd.f32 0.0, %v4945
      %v4947 = vpop.f32.mrb[0].mxu0
      %v4948 = vpop.f32.mrb[0].mxu0
      %v4949 = vadd.f32 0.0, %v4948
      %v4950 = vpop.f32.mrb[0].mxu0
      %4951 = vmatprep.mubr.bf16.mxu0 0
      %4952 = vmatmul.mubr.bf16.gmra.mrb[0].mxu0 %v4858
      %v4953 = vpop.f32.mrb[0].mxu0
      %v4954 = vadd.f32 0.0, %v4953
      %v4955 = vpop.f32.mrb[0].mxu0
      %v4956 = vpop.f32.mrb[0].mxu0
      %v4957 = vadd.f32 0.0, %v4956
      %v4958 = vpop.f32.mrb[0].mxu0
      %4959 = vdwg.mxu0
      %v4960 = vadd.f32 %v4836, %v4898
      %v4961 = vadd.f32 %v4837, %v4901
      %v4962 = vadd.f32 %v4838, %v4906
      %v4963 = vadd.f32 %v4839, %v4909
      %v4964 = vadd.f32 %v4840, %v4914
      %v4965 = vadd.f32 %v4841, %v4917
      %v4966 = vadd.f32 %v4842, %v4922
      %v4967 = vadd.f32 %v4843, %v4925
      %v4968 = vadd.f32 %v4844, %v4930
      %v4969 = vadd.f32 %v4845, %v4933
      %v4970 = vadd.f32 %v4846, %v4938
      %v4971 = vadd.f32 %v4847, %v4941
      %v4972 = vadd.f32 %v4848, %v4946
      %v4973 = vadd.f32 %v4849, %v4949
      %v4974 = vadd.f32 %v4850, %v4954
      %v4975 = vadd.f32 %v4851, %v4957
      %s4976 = smul.u32 %s886, 16
      %s4977 = scalar_lea.vmem %s238, %s4976
      %v4978 = vld [vmem:[%s4977] sm:$0xff]
      %v4979 = vld [vmem:[%s4977 + $0x8] sm:$0xff]
      %v4980 = vld [vmem:[%s4977 + $0x10] sm:$0xff]
      %v4981 = vld [vmem:[%s4977 + $0x18] sm:$0xff]
      %v4982 = vld [vmem:[%s4977 + $0x20] sm:$0xff]
      %v4983 = vld [vmem:[%s4977 + $0x28] sm:$0xff]
      %v4984 = vld [vmem:[%s4977 + $0x30] sm:$0xff]
      %v4985 = vld [vmem:[%s4977 + $0x38] sm:$0xff]
      %v4986 = vld [vmem:[%s4977 + $0x40] sm:$0xff]
      %v4987 = vld [vmem:[%s4977 + $0x48] sm:$0xff]
      %v4988 = vld [vmem:[%s4977 + $0x50] sm:$0xff]
      %v4989 = vld [vmem:[%s4977 + $0x58] sm:$0xff]
      %v4990 = vld [vmem:[%s4977 + $0x60] sm:$0xff]
      %v4991 = vld [vmem:[%s4977 + $0x68] sm:$0xff]
      %v4992 = vld [vmem:[%s4977 + $0x70] sm:$0xff]
      %v4993 = vld [vmem:[%s4977 + $0x78] sm:$0xff]
      %v4994 = vld [vmem:[%s4] sm:$0x1]
      %v4996 = vlaneseq
      %v4997 = vshrl.u32 %v4996, 7
      %v4998 = vsub.s32 0, %v4997
      %v4999 = vrot.slane %v4994, %v4998
      %v5001 = vadd.f32 %v4960, %v4999
      %v5002 = vadd.f32 %v4961, %v4999
      %v5003 = vadd.f32 %v4962, %v4999
      %v5004 = vadd.f32 %v4963, %v4999
      %v5005 = vadd.f32 %v4964, %v4999
      %v5006 = vadd.f32 %v4965, %v4999
      %v5007 = vadd.f32 %v4966, %v4999
      %v5008 = vadd.f32 %v4967, %v4999
      %v5009 = vadd.f32 %v4968, %v4999
      %v5010 = vadd.f32 %v4969, %v4999
      %v5011 = vadd.f32 %v4970, %v4999
      %v5012 = vadd.f32 %v4971, %v4999
      %v5013 = vadd.f32 %v4972, %v4999
      %v5014 = vadd.f32 %v4973, %v4999
      %v5015 = vadd.f32 %v4974, %v4999
      %v5016 = vadd.f32 %v4975, %v4999
      %v5017 = vadd.f32 %v5001, %v4978
      %v5018 = vadd.f32 %v5002, %v4979
      %v5019 = vadd.f32 %v5003, %v4980
      %v5020 = vadd.f32 %v5004, %v4981
      %v5021 = vadd.f32 %v5005, %v4982
      %v5022 = vadd.f32 %v5006, %v4983
      %v5023 = vadd.f32 %v5007, %v4984
      %v5024 = vadd.f32 %v5008, %v4985
      %v5025 = vadd.f32 %v5009, %v4986
      %v5026 = vadd.f32 %v5010, %v4987
      %v5027 = vadd.f32 %v5011, %v4988
      %v5028 = vadd.f32 %v5012, %v4989
      %v5029 = vadd.f32 %v5013, %v4990
      %v5030 = vadd.f32 %v5014, %v4991
      %v5031 = vadd.f32 %v5015, %v4992
      %v5032 = vadd.f32 %v5016, %v4993
      %v5033 = vmax.f32 %v5017, 0.0
      %v5034 = vmax.f32 %v5018, 0.0
      %v5035 = vmax.f32 %v5019, 0.0
      %v5036 = vmax.f32 %v5020, 0.0
      %v5037 = vmax.f32 %v5021, 0.0
      %v5038 = vmax.f32 %v5022, 0.0
      %v5039 = vmax.f32 %v5023, 0.0
      %v5040 = vmax.f32 %v5024, 0.0
      %v5041 = vmax.f32 %v5025, 0.0
      %v5042 = vmax.f32 %v5026, 0.0
      %v5043 = vmax.f32 %v5027, 0.0
      %v5044 = vmax.f32 %v5028, 0.0
      %v5045 = vmax.f32 %v5029, 0.0
      %v5046 = vmax.f32 %v5030, 0.0
      %v5047 = vmax.f32 %v5031, 0.0
      %v5048 = vmax.f32 %v5032, 0.0
      %5049 = vst.msk [vmem:[%s248] sm:$0xff] %vm967, %v5033
      %5050 = vst.msk [vmem:[%s248 + $0x8] sm:$0xff] %vm967, %v5034
      %5051 = vst.msk [vmem:[%s248 + $0x10] sm:$0xff] %vm967, %v5035
      %5052 = vst.msk [vmem:[%s248 + $0x18] sm:$0xff] %vm967, %v5036
      %5053 = vst.msk [vmem:[%s248 + $0x20] sm:$0xff] %vm967, %v5037
      %5054 = vst.msk [vmem:[%s248 + $0x28] sm:$0xff] %vm967, %v5038
      %5055 = vst.msk [vmem:[%s248 + $0x30] sm:$0xff] %vm967, %v5039
      %5056 = vst.msk [vmem:[%s248 + $0x38] sm:$0xff] %vm967, %v5040
      %5057 = vst.msk [vmem:[%s248 + $0x40] sm:$0xff] %vm967, %v5041
      %5058 = vst.msk [vmem:[%s248 + $0x48] sm:$0xff] %vm967, %v5042
      %5059 = vst.msk [vmem:[%s248 + $0x50] sm:$0xff] %vm967, %v5043
      %5060 = vst.msk [vmem:[%s248 + $0x58] sm:$0xff] %vm967, %v5044
      %5061 = vst.msk [vmem:[%s248 + $0x60] sm:$0xff] %vm967, %v5045
      %5062 = vst.msk [vmem:[%s248 + $0x68] sm:$0xff] %vm967, %v5046
      %5063 = vst.msk [vmem:[%s248 + $0x70] sm:$0xff] %vm967, %v5047
      %5064 = vst.msk [vmem:[%s248 + $0x78] sm:$0xff] %vm967, %v5048
      %s5065 = smul.u32 8, %s21
      %p5066 = scmp.lt.s32.totalorder %s20, 1
      %s5067 = scalar_select %p5066, %s20, 1
      %p5068 = scmp.lt.s32.totalorder %s5065, 15
      %s5069 = scalar_select %p5068, %s5065, 15
      %s5070 = smul.addr %s5069, 2
      %s5071 = smul.addr %s5067, 32
      %s5072 = sadd.s32 %s5070, %s5071
      %s5073 = smul.addr %s5072, 8
      %s5074 = scalar_lea.vmem %s5, %s5073
      // Predicated region
      $region45: #{basic_block_forward.1} parent=39 // pred_check
        %p5075 = pneg %p158
      $region46: #{basic_block_forward.1} parent=39 // pred_check_branch
        %5077 = sbr.rel (%p5075) target = $region48
      $region47: #{basic_block_forward.1} parent=39 // pred_region
        %s5078 = smul.u32 8, %s21
      $region48: #{basic_block_forward.1} parent=39 // pred_fallthru
        _
    $region40: #{basic_block_forward.1} parent=5 // pred_fallthru
      _
    %p5079 = scmp.le.s32.totalorder 2, %s11
    // Predicated region
    $region49: #{basic_block_forward.1} parent=5 // pred_check
      %p5080 = pneg %p5079
    $region50: #{basic_block_forward.1} parent=5 // pred_check_branch
      %5082 = sbr.rel (%p5080) target = $region52
    $region51: #{basic_block_forward.1} parent=5 // pred_region
      %s5083 = ssub.s32 %s11, 2
      // Predicated region
      $region53: #{basic_block_forward.1} parent=51 // pred_check
        %p5084 = pneg %p164
      $region54: #{basic_block_forward.1} parent=51 // pred_check_branch
        %5086 = sbr.rel (%p5084) target = $region56
      $region55: #{basic_block_forward.1} parent=51 // pred_region
        %s5087 = smul.u32 8, %s23
        %p5088 = scmp.lt.s32.totalorder %s22, 1
        %s5089 = scalar_select %p5088, %s22, 1
        %p5090 = scmp.lt.s32.totalorder %s5087, 15
        %s5091 = scalar_select %p5090, %s5087, 15
        %s5092 = smul.addr %s5091, 2
        %s5093 = smul.addr %s5089, 32
        %s5094 = sadd.s32 %s5092, %s5093
        %s5095 = smul.addr %s5094, 8
        %s5096 = scalar_lea.vmem %s5, %s5095
      $region56: #{basic_block_forward.1} parent=51 // pred_fallthru
        _
    $region52: #{basic_block_forward.1} parent=5 // pred_fallthru
      _
  $region6: #{basic_block_forward.1} parent=0 // loop_footer
    %s15 = sadd.s32 1, %s11
  $region7: #{basic_block_forward.1} parent=0 // loop_footer_branch
    %10 = sbr.rel target = $region3
  $region8: #{basic_block_forward.1} parent=0 // loop_exit
    _

</llo_original>
